<compile_context>
chip_gen: v7x
topology: tpu7x:2x2x1
jax: 0.10.0
libtpu: 0.0.40
codegen_flags: <defaults>
</compile_context>

<pallas_src>
import functools
import math

import jax
import jax.numpy as jnp
from jax.experimental import pallas as pl
from jax.experimental.pallas import tpu as pltpu

ACT_DTYPE = jnp.bfloat16   # storage dtype for activations / weights


# ----------------------------------------------------------------------------
# helpers
# ----------------------------------------------------------------------------
def _round_up(x, m):
    return (x + m - 1) // m * m


def _choose_tile(dim, cap, align):
    """Return (tile, padded_dim).  Full-dim blocks are always legal; when the
    dim exceeds the cap we prefer a tile that divides the dim exactly (no MXU
    padding waste) and only fall back to padding if no aligned divisor fits."""
    if dim <= cap:
        return dim, dim
    t = (cap // align) * align
    while t >= align:
        if dim % t == 0:
            return t, dim
        t -= align
    return cap, _round_up(dim, cap)


def _pad2d(a, rp, cp):
    r, c = a.shape
    if r == rp and c == cp:
        return a
    return jnp.pad(a, ((0, rp - r), (0, cp - c)))


_VMEM_LIMIT_CACHE = [None]


def _vmem_limit_bytes():
    """Generation-aware scoped VMEM limit (v5e/v6e: 96MiB, v7x: ~48MiB)."""
    if _VMEM_LIMIT_CACHE[0] is None:
        limit = 48 * 1024 * 1024
        try:
            cap = int(pltpu.get_tpu_info().vmem_capacity_bytes)
            limit = max(32 * 1024 * 1024, min(cap * 3 // 4, 96 * 1024 * 1024))
        except Exception:
            pass
        _VMEM_LIMIT_CACHE[0] = limit
    return _VMEM_LIMIT_CACHE[0]


# ----------------------------------------------------------------------------
# tiled matmul (+bias, optional GELU, optional fused residual, optional fused
# residual+LayerNorm epilogue on the f32 accumulator)
# ----------------------------------------------------------------------------
def _matmul_kernel(*refs, activation, has_residual, has_ln, ln_eps):
    x_ref, w_ref, b_ref = refs[0], refs[1], refs[2]
    idx = 3
    r_ref = g_ref = beta_ref = None
    if has_residual:
        r_ref = refs[idx]; idx += 1
    if has_ln:
        g_ref, beta_ref = refs[idx], refs[idx + 1]; idx += 2
    o_ref, acc_ref = refs[idx], refs[idx + 1]

    @pl.when(pl.program_id(2) == 0)
    def _init():
        acc_ref[...] = jnp.zeros_like(acc_ref)

    acc_ref[...] += jnp.dot(x_ref[...], w_ref[...],
                            preferred_element_type=jnp.float32)

    @pl.when(pl.program_id(2) == pl.num_programs(2) - 1)
    def _flush():
        y = acc_ref[...] + b_ref[...].astype(jnp.float32)
        if activation == "gelu":
            # tanh-approx GELU (EUP-friendly)
            y = 0.5 * y * (1.0 + jnp.tanh(
                0.7978845608028654 * (y + 0.044715 * y * y * y)))
        if has_residual:
            y = y + r_ref[...].astype(jnp.float32)
        if has_ln:
            mean = jnp.mean(y, axis=-1, keepdims=True)
            var = jnp.mean((y - mean) * (y - mean), axis=-1, keepdims=True)
            y = (y - mean) * jax.lax.rsqrt(var + ln_eps)
            y = (y * g_ref[...].astype(jnp.float32)
                 + beta_ref[...].astype(jnp.float32))
        o_ref[...] = y.astype(o_ref.dtype)


def matmul_bias(x, w, b, activation=None, residual=None, ln=None,
                out_dtype=None, tm_cap=256, tn_cap=512, tk_cap=1024):
    """y = act(x @ w + b) [+ residual] [-> LayerNorm].
    x:(M,K) w:(K,N) b:(N,)  ->  (M,N).
    `ln` = (gamma, beta, eps) applies LayerNorm over the full output row in
    the flush epilogue (forces a single N block so row stats are complete)."""
    M, K = x.shape
    K2, N = w.shape
    assert K == K2
    out_dtype = out_dtype or x.dtype

    tm, Mp = _choose_tile(M, tm_cap, 8)
    tk, Kp = _choose_tile(K, tk_cap, 128)
    if ln is not None:
        tn, Np = N, N                       # LN needs the full row per block
    else:
        tn, Np = _choose_tile(N, tn_cap, 128)

    xp = _pad2d(x, Mp, Kp)
    wp = _pad2d(w, Kp, Np)
    bp = _pad2d(b.reshape(1, N), 1, Np)

    args = [xp, wp, bp]
    in_specs = [
        pl.BlockSpec((tm, tk), lambda i, j, k: (i, k)),
        pl.BlockSpec((tk, tn), lambda i, j, k: (k, j)),
        pl.BlockSpec((1, tn), lambda i, j, k: (0, j)),
    ]
    if residual is not None:
        args.append(_pad2d(residual, Mp, Np))
        in_specs.append(pl.BlockSpec((tm, tn), lambda i, j, k: (i, j)))
    if ln is not None:
        gamma, beta, ln_eps = ln
        args.append(gamma.reshape(1, N))
        args.append(beta.reshape(1, N))
        in_specs.append(pl.BlockSpec((1, tn), lambda i, j, k: (0, j)))
        in_specs.append(pl.BlockSpec((1, tn), lambda i, j, k: (0, j)))
    else:
        ln_eps = 0.0

    kernel = functools.partial(
        _matmul_kernel, activation=activation,
        has_residual=residual is not None,
        has_ln=ln is not None, ln_eps=float(ln_eps))

    in_bytes = (Mp * Kp + Kp * Np) * jnp.dtype(x.dtype).itemsize
    out_bytes = 2 * Mp * Np * jnp.dtype(out_dtype).itemsize
    cost = pl.CostEstimate(
        flops=2 * Mp * Np * Kp,
        transcendentals=Mp * Np if activation == "gelu" else 0,
        bytes_accessed=int(in_bytes + out_bytes))

    out = pl.pallas_call(
        kernel,
        out_shape=jax.ShapeDtypeStruct((Mp, Np), out_dtype),
        grid=(Mp // tm, Np // tn, Kp // tk),
        in_specs=in_specs,
        out_specs=pl.BlockSpec((tm, tn), lambda i, j, k: (i, j)),
        scratch_shapes=[pltpu.VMEM((tm, tn), jnp.float32)],
        compiler_params=pltpu.CompilerParams(
            dimension_semantics=("parallel", "parallel", "arbitrary"),
            vmem_limit_bytes=_vmem_limit_bytes()),
        cost_estimate=cost,
    )(*args)

    if Mp != M or Np != N:
        out = out[:M, :N]
    return out


# ----------------------------------------------------------------------------
# standalone (residual-add +) LayerNorm (ViT pre-LN ln1/ln2 only)
# ----------------------------------------------------------------------------
def _ln_kernel(*refs, eps, has_residual):
    if has_residual:
        x_ref, r_ref, g_ref, b_ref, o_ref = refs
    else:
        x_ref, g_ref, b_ref, o_ref = refs
    x = x_ref[...].astype(jnp.float32)
    if has_residual:
        x = x + r_ref[...].astype(jnp.float32)
    mean = jnp.mean(x, axis=-1, keepdims=True)
    var = jnp.mean((x - mean) * (x - mean), axis=-1, keepdims=True)
    xn = (x - mean) * jax.lax.rsqrt(var + eps)
    y = xn * g_ref[...].astype(jnp.float32) + b_ref[...].astype(jnp.float32)
    o_ref[...] = y.astype(o_ref.dtype)


def layernorm(x, gamma, beta, residual=None, eps=1e-12, row_cap=512):
    M, D = x.shape
    tr, Mp = _choose_tile(M, row_cap, 8)
    xp = _pad2d(x, Mp, D)
    args = [xp]
    in_specs = [pl.BlockSpec((tr, D), lambda i: (i, 0))]
    if residual is not None:
        args.append(_pad2d(residual, Mp, D))
        in_specs.append(pl.BlockSpec((tr, D), lambda i: (i, 0)))
    args += [gamma.reshape(1, D), beta.reshape(1, D)]
    in_specs += [pl.BlockSpec((1, D), lambda i: (0, 0)),
                 pl.BlockSpec((1, D), lambda i: (0, 0))]

    kernel = functools.partial(_ln_kernel, eps=float(eps),
                               has_residual=residual is not None)
    out = pl.pallas_call(
        kernel,
        out_shape=jax.ShapeDtypeStruct((Mp, D), x.dtype),
        grid=(Mp // tr,),
        in_specs=in_specs,
        out_specs=pl.BlockSpec((tr, D), lambda i: (i, 0)),
        compiler_params=pltpu.CompilerParams(
            dimension_semantics=("parallel",),
            vmem_limit_bytes=_vmem_limit_bytes()),
    )(*args)
    return out[:M] if Mp != M else out


# ----------------------------------------------------------------------------
# flash attention: lane-dense (B,S,D) in/out, head split inside the kernel,
# online softmax over kv tiles, batch x q-tile parallel grid axes
# ----------------------------------------------------------------------------
def _flash_attn_kernel(q_ref, k_ref, v_ref, *rest, scale, heads, has_mask):
    if has_mask:
        mask_ref = rest[0]
        rest = rest[1:]
    o_ref, m_ref, l_ref, acc_ref = rest

    kv_i = pl.program_id(2)

    @pl.when(kv_i == 0)
    def _init():
        m_ref[...] = jnp.full_like(m_ref, -1e30)
        l_ref[...] = jnp.zeros_like(l_ref)
        acc_ref[...] = jnp.zeros_like(acc_ref)

    q = q_ref[0]                       # (tq, D)  bf16, lane-dense
    k = k_ref[0]                       # (tkv, D)
    v = v_ref[0]
    if has_mask:
        madd = mask_ref[0]             # (1, tkv) additive f32, broadcasts

    d_model = q.shape[-1]
    dh = d_model // heads

    for h in range(heads):             # static unroll over heads
        sl = slice(h * dh, (h + 1) * dh)
        s = jax.lax.dot_general(q[:, sl], k[:, sl],
                                (((1,), (1,)), ((), ())),
                                preferred_element_type=jnp.float32) * scale
        if has_mask:
            s = s + madd
        m_prev = m_ref[h]                                        # (tq, 1)
        m_new = jnp.maximum(m_prev, jnp.max(s, axis=-1, keepdims=True))
        alpha = jnp.exp(m_prev - m_new)
        p = jnp.exp(s - m_new)                                   # (tq, tkv)
        l_ref[h] = alpha * l_ref[h] + jnp.sum(p, axis=-1, keepdims=True)
        pv = jax.lax.dot_general(p.astype(v.dtype), v[:, sl],
                                 (((1,), (0,)), ((), ())),
                                 preferred_element_type=jnp.float32)
        acc_ref[:, sl] = alpha * acc_ref[:, sl] + pv
        m_ref[h] = m_new

    @pl.when(kv_i == pl.num_programs(2) - 1)
    def _flush():
        for h in range(heads):
            sl = slice(h * dh, (h + 1) * dh)
            inv = pl.reciprocal(l_ref[h], approx=True)
            o_ref[0, :, sl] = (acc_ref[:, sl] * inv).astype(o_ref.dtype)


def attention(q, k, v, heads, key_add_mask=None, tq_cap=256, tkv_cap=512):
    """q:(B,Sq,D) k,v:(B,Sk,D) lane-dense; key_add_mask:(B,1,Sk) additive f32
    or None.  Returns (B,Sq,D) lane-dense (heads handled inside)."""
    B, Sq, D = q.shape
    Sk = k.shape[1]
    scale = 1.0 / math.sqrt(D // heads)

    tq, Sqp = _choose_tile(Sq, tq_cap, 8)
    tkv, Skp = _choose_tile(Sk, tkv_cap, 128)

    if Sqp != Sq:
        q = jnp.pad(q, ((0, 0), (0, Sqp - Sq), (0, 0)))
    if Skp != Sk:
        k = jnp.pad(k, ((0, 0), (0, Skp - Sk), (0, 0)))
        v = jnp.pad(v, ((0, 0), (0, Skp - Sk), (0, 0)))
        if key_add_mask is None:
            key_add_mask = jnp.zeros((B, 1, Sk), jnp.float32)
        key_add_mask = jnp.pad(key_add_mask, ((0, 0), (0, 0), (0, Skp - Sk)),
                               constant_values=-1e9)
    has_mask = key_add_mask is not None
    if has_mask:
        key_add_mask = key_add_mask.astype(jnp.float32)

    in_specs = [
        pl.BlockSpec((1, tq, D), lambda b, qi, ki: (b, qi, 0)),
        pl.BlockSpec((1, tkv, D), lambda b, qi, ki: (b, ki, 0)),
        pl.BlockSpec((1, tkv, D), lambda b, qi, ki: (b, ki, 0)),
    ]
    args = [q, k, v]
    if has_mask:
        in_specs.append(pl.BlockSpec((1, 1, tkv), lambda b, qi, ki: (b, 0, ki)))
        args.append(key_add_mask)

    kernel = functools.partial(_flash_attn_kernel, scale=scale, heads=heads,
                               has_mask=has_mask)
    itemsize = jnp.dtype(q.dtype).itemsize
    cost = pl.CostEstimate(
        flops=4 * B * Sqp * Skp * D,
        transcendentals=B * heads * Sqp * Skp,
        bytes_accessed=int((2 * B * Sqp * D + 2 * B * Skp * D) * itemsize
                           + (B * Skp * 4 if has_mask else 0)))

    out = pl.pallas_call(
        kernel,
        out_shape=jax.ShapeDtypeStruct((B, Sqp, D), q.dtype),
        grid=(B, Sqp // tq, Skp // tkv),
        in_specs=in_specs,
        out_specs=pl.BlockSpec((1, tq, D), lambda b, qi, ki: (b, qi, 0)),
        scratch_shapes=[pltpu.VMEM((heads, tq, 1), jnp.float32),   # running max
                        pltpu.VMEM((heads, tq, 1), jnp.float32),   # running sum
                        pltpu.VMEM((tq, D), jnp.float32)],         # acc
        compiler_params=pltpu.CompilerParams(
            dimension_semantics=("parallel", "parallel", "arbitrary"),
            vmem_limit_bytes=_vmem_limit_bytes()),
        cost_estimate=cost,
    )(*args)

    if Sqp != Sq:
        out = out[:, :Sq]
    return out


# ----------------------------------------------------------------------------
# fused embedding: scalar-prefetch row gather + positional add + LayerNorm
# ----------------------------------------------------------------------------
def _embed_kernel(ids_ref, word_ref, pos_ref, g_ref, b_ref, o_ref, *, eps):
    del ids_ref
    x = word_ref[0].astype(jnp.float32) + pos_ref[0].astype(jnp.float32)  # (1,D)
    mean = jnp.mean(x, axis=-1, keepdims=True)
    var = jnp.mean((x - mean) * (x - mean), axis=-1, keepdims=True)
    y = (x - mean) * jax.lax.rsqrt(var + eps)
    y = y * g_ref[...].astype(jnp.float32) + b_ref[...].astype(jnp.float32)
    o_ref[0] = y.astype(o_ref.dtype)


def embed_pos_ln(ids, word_table, pos_table, seq_len, gamma, beta, eps=1e-12):
    """ids:(N,) int32, word_table:(V,D), pos_table:(seq_len,D) ->
    LayerNorm(word[ids] + pos[i % seq_len]) : (N,D)."""
    V, D = word_table.shape
    N = ids.shape[0]
    word3 = word_table.reshape(V, 1, D)
    pos3 = pos_table.reshape(seq_len, 1, D)
    g2 = gamma.reshape(1, D)
    b2 = beta.reshape(1, D)
    out = pl.pallas_call(
        functools.partial(_embed_kernel, eps=float(eps)),
        out_shape=jax.ShapeDtypeStruct((N, 1, D), word_table.dtype),
        grid_spec=pltpu.PrefetchScalarGridSpec(
            num_scalar_prefetch=1,
            grid=(N,),
            in_specs=[
                pl.BlockSpec((1, 1, D), lambda i, ids: (ids[i], 0, 0)),
                pl.BlockSpec((1, 1, D), lambda i, ids: (i % seq_len, 0, 0)),
                pl.BlockSpec((1, D), lambda i, ids: (0, 0)),
                pl.BlockSpec((1, D), lambda i, ids: (0, 0)),
            ],
            out_specs=pl.BlockSpec((1, 1, D), lambda i, ids: (i, 0, 0))),
    )(ids, word3, pos3, g2, b2)
    return out.reshape(N, D)


# ----------------------------------------------------------------------------
# parameter init (deterministic, synthetic)
# ----------------------------------------------------------------------------
def _dense(key, din, dout, dtype):
    w = (jax.random.normal(key, (din, dout), jnp.float32) * 0.02).astype(dtype)
    b = jnp.zeros((dout,), dtype)
    return {"w": w, "b": b}


def _ln_params(d):
    return {"g": jnp.ones((d,), jnp.float32), "b": jnp.zeros((d,), jnp.float32)}


def init_params(key, *, D, heads, vocab, text_len, img_size, patch, channels,
                n_vis_layers, n_txt_layers, inter, dtype=ACT_DTYPE):
    num_patches = (img_size // patch) ** 2
    vis_seq = num_patches + 1
    keys = iter(jax.random.split(key, 512))

    def dense(din, dout):
        return _dense(next(keys), din, dout, dtype)

    def rand(shape):
        return (jax.random.normal(next(keys), shape, jnp.float32) * 0.02).astype(dtype)

    p = {}
    # vision
    p["patch_embed"] = dense(channels * patch * patch, D)
    p["cls_token"] = rand((1, 1, D))
    p["vis_pos"] = rand((vis_seq, D))
    p["vis_layers"] = []
    for _ in range(n_vis_layers):
        p["vis_layers"].append({
            "ln1": _ln_params(D),
            "qkv": dense(D, 3 * D),          # fused Q/K/V
            "o": dense(D, D),
            "ln2": _ln_params(D),
            "fc1": dense(D, inter), "fc2": dense(inter, D),
        })
    p["vis_post_ln"] = _ln_params(D)
    # text
    p["word_emb"] = rand((vocab, D))
    p["txt_pos"] = rand((text_len, D))
    p["txt_emb_ln"] = _ln_params(D)
    p["txt_layers"] = []
    for _ in range(n_txt_layers):
        p["txt_layers"].append({
            "s_qkv": dense(D, 3 * D), "so": dense(D, D), "ln_s": _ln_params(D),
            "cq": dense(D, D), "c_kv": dense(D, 2 * D), "co": dense(D, D),
            "ln_c": _ln_params(D),
            "fc1": dense(D, inter), "fc2": dense(inter, D), "ln_f": _ln_params(D),
        })
    return p


# ----------------------------------------------------------------------------
# model glue (composition of Pallas kernels; lane-dense (B,S,D) everywhere)
# ----------------------------------------------------------------------------
def _self_attn(x2, B, S, p_qkv, p_o, heads, key_mask=None, residual=None, ln=None):
    D = x2.shape[1]
    qkv = matmul_bias(x2, p_qkv["w"], p_qkv["b"])            # (B*S, 3D) fused
    qkv = qkv.reshape(B, S, 3, D)
    q, k, v = qkv[:, :, 0], qkv[:, :, 1], qkv[:, :, 2]        # lane-dense slices
    o = attention(q, k, v, heads, key_mask)                   # (B, S, D)
    return matmul_bias(o.reshape(B * S, D), p_o["w"], p_o["b"],
                       residual=residual, ln=ln)


def _cross_attn(t2, B, Sq, img2, Sk, p_q, p_kv, p_o, heads,
                key_mask=None, residual=None, ln=None):
    D = t2.shape[1]
    q = matmul_bias(t2, p_q["w"], p_q["b"]).reshape(B, Sq, D)
    kv = matmul_bias(img2, p_kv["w"], p_kv["b"]).reshape(B, Sk, 2, D)  # fused K/V
    k, v = kv[:, :, 0], kv[:, :, 1]
    o = attention(q, k, v, heads, key_mask)
    return matmul_bias(o.reshape(B * Sq, D), p_o["w"], p_o["b"],
                       residual=residual, ln=ln)


def _mlp(x2, fc1, fc2, residual=None, ln=None):
    h = matmul_bias(x2, fc1["w"], fc1["b"], activation="gelu")
    return matmul_bias(h, fc2["w"], fc2["b"], residual=residual, ln=ln)


def blip_forward(params, input_ids, attention_mask, pixel_values, *, heads, patch):
    """Returns (image_embeds, question_embeds) — the BLIP encoder outputs."""
    B, C, H, W = pixel_values.shape                    # NCHW (PyTorch layout)
    gh, gw = H // patch, W // patch
    D = params["word_emb"].shape[1]
    act = params["word_emb"].dtype

    # ---- vision encoder (pre-LN ViT) ----------------------------------------
    patches = pixel_values.reshape(B, C, gh, patch, gw, patch)
    patches = patches.transpose(0, 2, 4, 1, 3, 5).reshape(
        B * gh * gw, C * patch * patch).astype(act)
    x = matmul_bias(patches, params["patch_embed"]["w"], params["patch_embed"]["b"])
    x = x.reshape(B, gh * gw, D)
    cls = jnp.broadcast_to(params["cls_token"], (B, 1, D))
    x = jnp.concatenate([cls, x], axis=1) + params["vis_pos"][None]
    Sv = x.shape[1]

    # pad the vision sequence ONCE and carry the padded layout through all
    # layers; padded key positions get an additive -1e9 mask.
    Svp = _round_up(Sv, 128 if Sv > 128 else 8)
    if Svp != Sv:
        x = jnp.pad(x, ((0, 0), (0, Svp - Sv), (0, 0)))
        valid = (jnp.arange(Svp) < Sv)
        vis_key_mask = jnp.broadcast_to(
            jnp.where(valid, 0.0, -1e9).astype(jnp.float32).reshape(1, 1, Svp),
            (B, 1, Svp))
    else:
        vis_key_mask = None
    x2 = x.reshape(B * Svp, D).astype(act)

    n_vis = len(params["vis_layers"])
    for li, lyr in enumerate(params["vis_layers"]):
        h1 = layernorm(x2, lyr["ln1"]["g"], lyr["ln1"]["b"], eps=1e-6)
        x2 = _self_attn(h1, B, Svp, lyr["qkv"], lyr["o"], heads,
                        key_mask=vis_key_mask, residual=x2)   # residual in epilogue
        h2 = layernorm(x2, lyr["ln2"]["g"], lyr["ln2"]["b"], eps=1e-6)
        if li == n_vis - 1:
            # fuse the final post-LN into the last fc2 epilogue
            x2 = _mlp(h2, lyr["fc1"], lyr["fc2"], residual=x2,
                      ln=(params["vis_post_ln"]["g"], params["vis_post_ln"]["b"],
                          1e-6))
        else:
            x2 = _mlp(h2, lyr["fc1"], lyr["fc2"], residual=x2)
    img2 = x2                                           # (B*Svp, D), post-LN'ed
    image_embeds = img2.reshape(B, Svp, D)[:, :Sv]

    # ---- text encoder (post-LN, cross-attention to image) -------------------
    L = input_ids.shape[1]
    Lp = _round_up(L, 8)
    ids = input_ids
    amask = attention_mask
    if Lp != L:
        ids = jnp.pad(ids, ((0, 0), (0, Lp - L)))
        amask = jnp.pad(amask, ((0, 0), (0, Lp - L)))
    ids_flat = ids.reshape(-1).astype(jnp.int32)

    pos = params["txt_pos"]
    if pos.shape[0] < Lp:
        pos = jnp.pad(pos, ((0, Lp - pos.shape[0]), (0, 0)))

    # fused gather + positional add + embedding LayerNorm (one pass)
    t2 = embed_pos_ln(ids_flat, params["word_emb"], pos, Lp,
                      params["txt_emb_ln"]["g"], params["txt_emb_ln"]["b"],
                      eps=1e-12)                                   # (B*Lp, D)

    # tiny (B,1,Lp) additive key mask, f32; broadcast inside the kernel
    key_mask = ((1.0 - amask.astype(jnp.float32)) * -1e9).reshape(B, 1, Lp)

    for lyr in params["txt_layers"]:
        # self-attn; residual + LN fused into the o-proj epilogue
        t2 = _self_attn(t2, B, Lp, lyr["s_qkv"], lyr["so"], heads,
                        key_mask=key_mask, residual=t2,
                        ln=(lyr["ln_s"]["g"], lyr["ln_s"]["b"], 1e-12))
        # cross-attn to (padded) image embeds; residual + LN fused
        t2 = _cross_attn(t2, B, Lp, img2, Svp, lyr["cq"], lyr["c_kv"], lyr["co"],
                         heads, key_mask=vis_key_mask, residual=t2,
                         ln=(lyr["ln_c"]["g"], lyr["ln_c"]["b"], 1e-12))
        # FFN; residual + LN fused into the fc2 epilogue
        t2 = _mlp(t2, lyr["fc1"], lyr["fc2"], residual=t2,
                  ln=(lyr["ln_f"]["g"], lyr["ln_f"]["b"], 1e-12))
    question_embeds = t2.reshape(B, Lp, D)[:, :L]

    return image_embeds.astype(jnp.float32), question_embeds.astype(jnp.float32)


# ----------------------------------------------------------------------------
# Demo
# ----------------------------------------------------------------------------
if __name__ == "__main__":
    B, L, VOCAB = 2, 8, 64
    D, HEADS, INTER = 32, 4, 64
    IMG, PATCH, CHANNELS = 16, 8, 3
    N_VIS_LAYERS, N_TXT_LAYERS = 2, 2

    key = jax.random.PRNGKey(0)
    k_param, k_img, k_ids = jax.random.split(key, 3)

    params = init_params(k_param, D=D, heads=HEADS, vocab=VOCAB, text_len=L,
                         img_size=IMG, patch=PATCH, channels=CHANNELS,
                         n_vis_layers=N_VIS_LAYERS, n_txt_layers=N_TXT_LAYERS,
                         inter=INTER)

    pixel_values = jax.random.normal(k_img, (B, CHANNELS, IMG, IMG), jnp.float32)
    input_ids = jax.random.randint(k_ids, (B, L), 0, VOCAB, dtype=jnp.int32)
    attention_mask = jnp.ones((B, L), jnp.int32).at[1, 6:].set(0)   # pad tail of ex.1

    fwd = jax.jit(functools.partial(blip_forward, heads=HEADS, patch=PATCH))
    image_embeds, question_embeds = fwd(params, input_ids, attention_mask, pixel_values)
    jax.block_until_ready((image_embeds, question_embeds))

    assert image_embeds.shape == (B, (IMG // PATCH) ** 2 + 1, D)
    assert question_embeds.shape == (B, L, D)
    assert bool(jnp.all(jnp.isfinite(image_embeds)))
    assert bool(jnp.all(jnp.isfinite(question_embeds)))
    print("KERNEL_OK")
</pallas_src>

<mosaic_0001>
module attributes {stable_mosaic.version = 11 : i64} {
  func.func @_matmul_kernel(%arg0: i32, %arg1: i32, %arg2: i32, %arg3: memref<8x192xbf16, #tpu.memory_space<vmem>>, %arg4: memref<192x32xbf16, #tpu.memory_space<vmem>>, %arg5: memref<1x32xbf16, #tpu.memory_space<vmem>>, %arg6: memref<8x32xbf16, #tpu.memory_space<vmem>>, %arg7: memref<8x32xf32, #tpu.memory_space<vmem>>) attributes {dimension_semantics = [#tpu.dimension_semantics<parallel>, #tpu.dimension_semantics<parallel>, #tpu.dimension_semantics<arbitrary>], iteration_bounds = array<i64: 1, 1, 1>, scalar_prefetch = 0 : i64, scratch_operands = 1 : i64, tpu.core_type = #tpu.core_type<tc>, window_params = [{transform_indices = @transform_0, window_bounds = array<i64: 8, 192>}, {transform_indices = @transform_1, window_bounds = array<i64: 192, 32>}, {transform_indices = @transform_2, window_bounds = array<i64: 1, 32>}, {transform_indices = @transform_3, window_bounds = array<i64: 8, 32>}]} {
    %c0_i32 = arith.constant 0 : i32
    %0 = arith.cmpi eq, %arg2, %c0_i32 : i32
    %1 = arith.extui %0 : i1 to i32
    %c0_i32_0 = arith.constant 0 : i32
    %2 = arith.cmpi ne, %1, %c0_i32_0 : i32
    scf.if %2 {
      %cst_10 = arith.constant 0.000000e+00 : f32
      %12 = vector.broadcast %cst_10 : f32 to vector<8x32xf32>
      %c0_11 = arith.constant 0 : index
      %c0_12 = arith.constant 0 : index
      %13 = vector.load %arg7[%c0_11, %c0_12] : memref<8x32xf32, #tpu.memory_space<vmem>>, vector<8x32xf32>
      tpu.vector_store %arg7[%c0_11, %c0_12], %12 {strides = array<i32>} : memref<8x32xf32, #tpu.memory_space<vmem>>, vector<8x32xf32>,
    } else {
    }
    %c0 = arith.constant 0 : index
    %c0_1 = arith.constant 0 : index
    %3 = vector.load %arg7[%c0, %c0_1] : memref<8x32xf32, #tpu.memory_space<vmem>>, vector<8x32xf32>
    %c0_2 = arith.constant 0 : index
    %c0_3 = arith.constant 0 : index
    %4 = vector.load %arg3[%c0_2, %c0_3] : memref<8x192xbf16, #tpu.memory_space<vmem>>, vector<8x192xbf16>
    %c0_4 = arith.constant 0 : index
    %c0_5 = arith.constant 0 : index
    %5 = vector.load %arg4[%c0_4, %c0_5] : memref<192x32xbf16, #tpu.memory_space<vmem>>, vector<192x32xbf16>
    %cst = arith.constant dense<0.000000e+00> : vector<8x32xf32>
    %6 = tpu.matmul %4, %5, %cst {dimension_numbers = #tpu.dot_dimension_numbers<[1], [0], [0], [1], [0, 0, 1, 1], [], []>} : vector<8x192xbf16>, vector<192x32xbf16>, vector<8x32xf32> -> vector<8x32xf32>
    %7 = arith.addf %3, %6 : vector<8x32xf32>
    %c0_6 = arith.constant 0 : index
    %c0_7 = arith.constant 0 : index
    %8 = vector.load %arg7[%c0_6, %c0_7] : memref<8x32xf32, #tpu.memory_space<vmem>>, vector<8x32xf32>
    tpu.vector_store %arg7[%c0_6, %c0_7], %7 {strides = array<i32>} : memref<8x32xf32, #tpu.memory_space<vmem>>, vector<8x32xf32>,
    %c0_i32_8 = arith.constant 0 : i32
    %9 = arith.cmpi eq, %arg2, %c0_i32_8 : i32
    %10 = arith.extui %9 : i1 to i32
    %c0_i32_9 = arith.constant 0 : i32
    %11 = arith.cmpi ne, %10, %c0_i32_9 : i32
    scf.if %11 {
      %c0_10 = arith.constant 0 : index
      %c0_11 = arith.constant 0 : index
      %12 = vector.load %arg7[%c0_10, %c0_11] : memref<8x32xf32, #tpu.memory_space<vmem>>, vector<8x32xf32>
      %c0_12 = arith.constant 0 : index
      %c0_13 = arith.constant 0 : index
      %13 = vector.load %arg5[%c0_12, %c0_13] : memref<1x32xbf16, #tpu.memory_space<vmem>>, vector<1x32xbf16>
      %14 = arith.extf %13 : vector<1x32xbf16> to vector<1x32xf32>
      %15 = vector.broadcast %14 : vector<1x32xf32> to vector<8x32xf32>
      %16 = arith.addf %12, %15 : vector<8x32xf32>
      %17 = arith.truncf %16 : vector<8x32xf32> to vector<8x32xbf16>
      %c0_14 = arith.constant 0 : index
      %c0_15 = arith.constant 0 : index
      %18 = vector.load %arg6[%c0_14, %c0_15] : memref<8x32xbf16, #tpu.memory_space<vmem>>, vector<8x32xbf16>
      tpu.vector_store %arg6[%c0_14, %c0_15], %17 {strides = array<i32>} : memref<8x32xbf16, #tpu.memory_space<vmem>>, vector<8x32xbf16>,
    } else {
    }
    return
  }
  func.func @transform_0(%arg0: i32, %arg1: i32, %arg2: i32) -> (i32, i32) {
    %c0_i32 = arith.constant 0 : i32
    return %arg0, %arg2 : i32, i32
  }
  func.func @transform_1(%arg0: i32, %arg1: i32, %arg2: i32) -> (i32, i32) {
    %c0_i32 = arith.constant 0 : i32
    return %arg2, %arg1 : i32, i32
  }
  func.func @transform_2(%arg0: i32, %arg1: i32, %arg2: i32) -> (i32, i32) {
    %c0_i32 = arith.constant 0 : i32
    %c0_i32_0 = arith.constant 0 : i32
    return %c0_i32, %arg1 : i32, i32
  }
  func.func @transform_3(%arg0: i32, %arg1: i32, %arg2: i32) -> (i32, i32) {
    %c0_i32 = arith.constant 0 : i32
    return %arg0, %arg1 : i32, i32
  }
}

module attributes {stable_mosaic.version = 11 : i64} {
  func.func @_ln_kernel(%arg0: i32, %arg1: memref<16x32xbf16, #tpu.memory_space<vmem>>, %arg2: memref<1x32xf32, #tpu.memory_space<vmem>>, %arg3: memref<1x32xf32, #tpu.memory_space<vmem>>, %arg4: memref<16x32xbf16, #tpu.memory_space<vmem>>) attributes {dimension_semantics = [#tpu.dimension_semantics<parallel>], iteration_bounds = array<i64: 1>, scalar_prefetch = 0 : i64, scratch_operands = 0 : i64, tpu.core_type = #tpu.core_type<tc>, window_params = [{transform_indices = @transform_0, window_bounds = array<i64: 16, 32>}, {pipeline_mode = #tpu.pipeline_mode<synchronous>, transform_indices = @transform_1, window_bounds = array<i64: 1, 32>}, {pipeline_mode = #tpu.pipeline_mode<synchronous>, transform_indices = @transform_2, window_bounds = array<i64: 1, 32>}, {transform_indices = @transform_3, window_bounds = array<i64: 16, 32>}]} {
    %c0 = arith.constant 0 : index
    %c0_0 = arith.constant 0 : index
    %0 = vector.load %arg1[%c0, %c0_0] : memref<16x32xbf16, #tpu.memory_space<vmem>>, vector<16x32xbf16>
    %1 = arith.extf %0 : vector<16x32xbf16> to vector<16x32xf32>
    %cst = arith.constant dense<0.000000e+00> : vector<16xf32>
    %2 = vector.multi_reduction <add>, %1, %cst [1] : vector<16x32xf32> to vector<16xf32>
    %3 = vector.shape_cast %2 : vector<16xf32> to vector<16x1xf32>
    %cst_1 = arith.constant 3.200000e+01 : f32
    %4 = vector.broadcast %cst_1 : f32 to vector<16x1xf32>
    %5 = arith.divf %3, %4 : vector<16x1xf32>
    %6 = vector.broadcast %5 : vector<16x1xf32> to vector<16x32xf32>
    %7 = arith.subf %1, %6 : vector<16x32xf32>
    %8 = vector.broadcast %5 : vector<16x1xf32> to vector<16x32xf32>
    %9 = arith.subf %1, %8 : vector<16x32xf32>
    %10 = arith.mulf %7, %9 : vector<16x32xf32>
    %cst_2 = arith.constant dense<0.000000e+00> : vector<16xf32>
    %11 = vector.multi_reduction <add>, %10, %cst_2 [1] : vector<16x32xf32> to vector<16xf32>
    %12 = vector.shape_cast %11 : vector<16xf32> to vector<16x1xf32>
    %cst_3 = arith.constant 3.200000e+01 : f32
    %13 = vector.broadcast %cst_3 : f32 to vector<16x1xf32>
    %14 = arith.divf %12, %13 : vector<16x1xf32>
    %15 = vector.broadcast %5 : vector<16x1xf32> to vector<16x32xf32>
    %16 = arith.subf %1, %15 : vector<16x32xf32>
    %cst_4 = arith.constant 9.99999997E-7 : f32
    %17 = vector.broadcast %cst_4 : f32 to vector<16x1xf32>
    %18 = arith.addf %14, %17 : vector<16x1xf32>
    %19 = math.rsqrt %18 : vector<16x1xf32>
    %20 = vector.broadcast %19 : vector<16x1xf32> to vector<16x32xf32>
    %21 = arith.mulf %16, %20 : vector<16x32xf32>
    %c0_5 = arith.constant 0 : index
    %c0_6 = arith.constant 0 : index
    %22 = vector.load %arg2[%c0_5, %c0_6] : memref<1x32xf32, #tpu.memory_space<vmem>>, vector<1x32xf32>
    %23 = vector.broadcast %22 : vector<1x32xf32> to vector<16x32xf32>
    %24 = arith.mulf %21, %23 : vector<16x32xf32>
    %c0_7 = arith.constant 0 : index
    %c0_8 = arith.constant 0 : index
    %25 = vector.load %arg3[%c0_7, %c0_8] : memref<1x32xf32, #tpu.memory_space<vmem>>, vector<1x32xf32>
    %26 = vector.broadcast %25 : vector<1x32xf32> to vector<16x32xf32>
    %27 = arith.addf %24, %26 : vector<16x32xf32>
    %28 = arith.truncf %27 : vector<16x32xf32> to vector<16x32xbf16>
    %c0_9 = arith.constant 0 : index
    %c0_10 = arith.constant 0 : index
    %29 = vector.load %arg4[%c0_9, %c0_10] : memref<16x32xbf16, #tpu.memory_space<vmem>>, vector<16x32xbf16>
    tpu.vector_store %arg4[%c0_9, %c0_10], %28 {strides = array<i32>} : memref<16x32xbf16, #tpu.memory_space<vmem>>, vector<16x32xbf16>,
    return
  }
  func.func @transform_0(%arg0: i32) -> (i32, i32) {
    %c0_i32 = arith.constant 0 : i32
    %c0_i32_0 = arith.constant 0 : i32
    return %arg0, %c0_i32 : i32, i32
  }
  func.func @transform_1(%arg0: i32) -> (i32, i32) {
    %c0_i32 = arith.constant 0 : i32
    %c0_i32_0 = arith.constant 0 : i32
    %c0_i32_1 = arith.constant 0 : i32
    return %c0_i32, %c0_i32_0 : i32, i32
  }
  func.func @transform_2(%arg0: i32) -> (i32, i32) {
    %c0_i32 = arith.constant 0 : i32
    %c0_i32_0 = arith.constant 0 : i32
    %c0_i32_1 = arith.constant 0 : i32
    return %c0_i32, %c0_i32_0 : i32, i32
  }
  func.func @transform_3(%arg0: i32) -> (i32, i32) {
    %c0_i32 = arith.constant 0 : i32
    %c0_i32_0 = arith.constant 0 : i32
    return %arg0, %c0_i32 : i32, i32
  }
}

module attributes {stable_mosaic.version = 11 : i64} {
  func.func @_matmul_kernel(%arg0: i32, %arg1: i32, %arg2: i32, %arg3: memref<16x32xbf16, #tpu.memory_space<vmem>>, %arg4: memref<32x96xbf16, #tpu.memory_space<vmem>>, %arg5: memref<1x96xbf16, #tpu.memory_space<vmem>>, %arg6: memref<16x96xbf16, #tpu.memory_space<vmem>>, %arg7: memref<16x96xf32, #tpu.memory_space<vmem>>) attributes {dimension_semantics = [#tpu.dimension_semantics<parallel>, #tpu.dimension_semantics<parallel>, #tpu.dimension_semantics<arbitrary>], iteration_bounds = array<i64: 1, 1, 1>, scalar_prefetch = 0 : i64, scratch_operands = 1 : i64, tpu.core_type = #tpu.core_type<tc>, window_params = [{transform_indices = @transform_0, window_bounds = array<i64: 16, 32>}, {transform_indices = @transform_1, window_bounds = array<i64: 32, 96>}, {transform_indices = @transform_2, window_bounds = array<i64: 1, 96>}, {transform_indices = @transform_3, window_bounds = array<i64: 16, 96>}]} {
    %c0_i32 = arith.constant 0 : i32
    %0 = arith.cmpi eq, %arg2, %c0_i32 : i32
    %1 = arith.extui %0 : i1 to i32
    %c0_i32_0 = arith.constant 0 : i32
    %2 = arith.cmpi ne, %1, %c0_i32_0 : i32
    scf.if %2 {
      %cst_10 = arith.constant 0.000000e+00 : f32
      %12 = vector.broadcast %cst_10 : f32 to vector<16x96xf32>
      %c0_11 = arith.constant 0 : index
      %c0_12 = arith.constant 0 : index
      %13 = vector.load %arg7[%c0_11, %c0_12] : memref<16x96xf32, #tpu.memory_space<vmem>>, vector<16x96xf32>
      tpu.vector_store %arg7[%c0_11, %c0_12], %12 {strides = array<i32>} : memref<16x96xf32, #tpu.memory_space<vmem>>, vector<16x96xf32>,
    } else {
    }
    %c0 = arith.constant 0 : index
    %c0_1 = arith.constant 0 : index
    %3 = vector.load %arg7[%c0, %c0_1] : memref<16x96xf32, #tpu.memory_space<vmem>>, vector<16x96xf32>
    %c0_2 = arith.constant 0 : index
    %c0_3 = arith.constant 0 : index
    %4 = vector.load %arg3[%c0_2, %c0_3] : memref<16x32xbf16, #tpu.memory_space<vmem>>, vector<16x32xbf16>
    %c0_4 = arith.constant 0 : index
    %c0_5 = arith.constant 0 : index
    %5 = vector.load %arg4[%c0_4, %c0_5] : memref<32x96xbf16, #tpu.memory_space<vmem>>, vector<32x96xbf16>
    %cst = arith.constant dense<0.000000e+00> : vector<16x96xf32>
    %6 = tpu.matmul %4, %5, %cst {dimension_numbers = #tpu.dot_dimension_numbers<[1], [0], [0], [1], [0, 0, 1, 1], [], []>} : vector<16x32xbf16>, vector<32x96xbf16>, vector<16x96xf32> -> vector<16x96xf32>
    %7 = arith.addf %3, %6 : vector<16x96xf32>
    %c0_6 = arith.constant 0 : index
    %c0_7 = arith.constant 0 : index
    %8 = vector.load %arg7[%c0_6, %c0_7] : memref<16x96xf32, #tpu.memory_space<vmem>>, vector<16x96xf32>
    tpu.vector_store %arg7[%c0_6, %c0_7], %7 {strides = array<i32>} : memref<16x96xf32, #tpu.memory_space<vmem>>, vector<16x96xf32>,
    %c0_i32_8 = arith.constant 0 : i32
    %9 = arith.cmpi eq, %arg2, %c0_i32_8 : i32
    %10 = arith.extui %9 : i1 to i32
    %c0_i32_9 = arith.constant 0 : i32
    %11 = arith.cmpi ne, %10, %c0_i32_9 : i32
    scf.if %11 {
      %c0_10 = arith.constant 0 : index
      %c0_11 = arith.constant 0 : index
      %12 = vector.load %arg7[%c0_10, %c0_11] : memref<16x96xf32, #tpu.memory_space<vmem>>, vector<16x96xf32>
      %c0_12 = arith.constant 0 : index
      %c0_13 = arith.constant 0 : index
      %13 = vector.load %arg5[%c0_12, %c0_13] : memref<1x96xbf16, #tpu.memory_space<vmem>>, vector<1x96xbf16>
      %14 = arith.extf %13 : vector<1x96xbf16> to vector<1x96xf32>
      %15 = vector.broadcast %14 : vector<1x96xf32> to vector<16x96xf32>
      %16 = arith.addf %12, %15 : vector<16x96xf32>
      %17 = arith.truncf %16 : vector<16x96xf32> to vector<16x96xbf16>
      %c0_14 = arith.constant 0 : index
      %c0_15 = arith.constant 0 : index
      %18 = vector.load %arg6[%c0_14, %c0_15] : memref<16x96xbf16, #tpu.memory_space<vmem>>, vector<16x96xbf16>
      tpu.vector_store %arg6[%c0_14, %c0_15], %17 {strides = array<i32>} : memref<16x96xbf16, #tpu.memory_space<vmem>>, vector<16x96xbf16>,
    } else {
    }
    return
  }
  func.func @transform_0(%arg0: i32, %arg1: i32, %arg2: i32) -> (i32, i32) {
    %c0_i32 = arith.constant 0 : i32
    return %arg0, %arg2 : i32, i32
  }
  func.func @transform_1(%arg0: i32, %arg1: i32, %arg2: i32) -> (i32, i32) {
    %c0_i32 = arith.constant 0 : i32
    return %arg2, %arg1 : i32, i32
  }
  func.func @transform_2(%arg0: i32, %arg1: i32, %arg2: i32) -> (i32, i32) {
    %c0_i32 = arith.constant 0 : i32
    %c0_i32_0 = arith.constant 0 : i32
    return %c0_i32, %arg1 : i32, i32
  }
  func.func @transform_3(%arg0: i32, %arg1: i32, %arg2: i32) -> (i32, i32) {
    %c0_i32 = arith.constant 0 : i32
    return %arg0, %arg1 : i32, i32
  }
}

module attributes {stable_mosaic.version = 11 : i64} {
  func.func @_flash_attn_kernel(%arg0: i32, %arg1: i32, %arg2: i32, %arg3: memref<1x8x32xbf16, #tpu.memory_space<vmem>>, %arg4: memref<1x8x32xbf16, #tpu.memory_space<vmem>>, %arg5: memref<1x8x32xbf16, #tpu.memory_space<vmem>>, %arg6: memref<1x1x8xf32, #tpu.memory_space<vmem>>, %arg7: memref<1x8x32xbf16, #tpu.memory_space<vmem>>, %arg8: memref<4x8x1xf32, #tpu.memory_space<vmem>>, %arg9: memref<4x8x1xf32, #tpu.memory_space<vmem>>, %arg10: memref<8x32xf32, #tpu.memory_space<vmem>>) attributes {dimension_semantics = [#tpu.dimension_semantics<parallel>, #tpu.dimension_semantics<parallel>, #tpu.dimension_semantics<arbitrary>], iteration_bounds = array<i64: 2, 1, 1>, scalar_prefetch = 0 : i64, scratch_operands = 3 : i64, tpu.core_type = #tpu.core_type<tc>, window_params = [{transform_indices = @transform_0, window_bounds = array<i64: 1, 8, 32>}, {transform_indices = @transform_1, window_bounds = array<i64: 1, 8, 32>}, {transform_indices = @transform_2, window_bounds = array<i64: 1, 8, 32>}, {transform_indices = @transform_3, window_bounds = array<i64: 1, 1, 8>}, {transform_indices = @transform_4, window_bounds = array<i64: 1, 8, 32>}]} {
    %c0_i32 = arith.constant 0 : i32
    %0 = arith.cmpi eq, %arg2, %c0_i32 : i32
    %1 = arith.extui %0 : i1 to i32
    %c0_i32_0 = arith.constant 0 : i32
    %2 = arith.cmpi ne, %1, %c0_i32_0 : i32
    scf.if %2 {
      %cst_91 = arith.constant -1.000000e+30 : f32
      %162 = vector.broadcast %cst_91 : f32 to vector<4x8x1xf32>
      %c0_92 = arith.constant 0 : index
      %c0_93 = arith.constant 0 : index
      %c0_94 = arith.constant 0 : index
      %163 = vector.load %arg8[%c0_92, %c0_93, %c0_94] : memref<4x8x1xf32, #tpu.memory_space<vmem>>, vector<4x8x1xf32>
      tpu.vector_store %arg8[%c0_92, %c0_93, %c0_94], %162 {strides = array<i32>} : memref<4x8x1xf32, #tpu.memory_space<vmem>>, vector<4x8x1xf32>,
      %cst_95 = arith.constant 0.000000e+00 : f32
      %164 = vector.broadcast %cst_95 : f32 to vector<4x8x1xf32>
      %c0_96 = arith.constant 0 : index
      %c0_97 = arith.constant 0 : index
      %c0_98 = arith.constant 0 : index
      %165 = vector.load %arg9[%c0_96, %c0_97, %c0_98] : memref<4x8x1xf32, #tpu.memory_space<vmem>>, vector<4x8x1xf32>
      tpu.vector_store %arg9[%c0_96, %c0_97, %c0_98], %164 {strides = array<i32>} : memref<4x8x1xf32, #tpu.memory_space<vmem>>, vector<4x8x1xf32>,
      %cst_99 = arith.constant 0.000000e+00 : f32
      %166 = vector.broadcast %cst_99 : f32 to vector<8x32xf32>
      %c0_100 = arith.constant 0 : index
      %c0_101 = arith.constant 0 : index
      %167 = vector.load %arg10[%c0_100, %c0_101] : memref<8x32xf32, #tpu.memory_space<vmem>>, vector<8x32xf32>
      tpu.vector_store %arg10[%c0_100, %c0_101], %166 {strides = array<i32>} : memref<8x32xf32, #tpu.memory_space<vmem>>, vector<8x32xf32>,
    } else {
    }
    %c0 = arith.constant 0 : index
    %c0_1 = arith.constant 0 : index
    %c0_2 = arith.constant 0 : index
    %3 = vector.load %arg3[%c0, %c0_1, %c0_2] : memref<1x8x32xbf16, #tpu.memory_space<vmem>>, vector<1x8x32xbf16>
    %4 = vector.shape_cast %3 : vector<1x8x32xbf16> to vector<8x32xbf16>
    %c0_3 = arith.constant 0 : index
    %c0_4 = arith.constant 0 : index
    %c0_5 = arith.constant 0 : index
    %5 = vector.load %arg4[%c0_3, %c0_4, %c0_5] : memref<1x8x32xbf16, #tpu.memory_space<vmem>>, vector<1x8x32xbf16>
    %6 = vector.shape_cast %5 : vector<1x8x32xbf16> to vector<8x32xbf16>
    %c0_6 = arith.constant 0 : index
    %c0_7 = arith.constant 0 : index
    %c0_8 = arith.constant 0 : index
    %7 = vector.load %arg5[%c0_6, %c0_7, %c0_8] : memref<1x8x32xbf16, #tpu.memory_space<vmem>>, vector<1x8x32xbf16>
    %8 = vector.shape_cast %7 : vector<1x8x32xbf16> to vector<8x32xbf16>
    %c0_9 = arith.constant 0 : index
    %c0_10 = arith.constant 0 : index
    %c0_11 = arith.constant 0 : index
    %9 = vector.load %arg6[%c0_9, %c0_10, %c0_11] : memref<1x1x8xf32, #tpu.memory_space<vmem>>, vector<1x1x8xf32>
    %10 = vector.shape_cast %9 : vector<1x1x8xf32> to vector<1x8xf32>
    %11 = vector.extract_strided_slice %4 {offsets = [0, 0], sizes = [8, 8], strides = [1, 1]} : vector<8x32xbf16> to vector<8x8xbf16>
    %12 = vector.extract_strided_slice %6 {offsets = [0, 0], sizes = [8, 8], strides = [1, 1]} : vector<8x32xbf16> to vector<8x8xbf16>
    %cst = arith.constant dense<0.000000e+00> : vector<8x8xf32>
    %13 = tpu.matmul %11, %12, %cst {dimension_numbers = #tpu.dot_dimension_numbers<[1], [1], [0], [0], [0, 0, 1, 0], [], []>} : vector<8x8xbf16>, vector<8x8xbf16>, vector<8x8xf32> -> vector<8x8xf32>
    %cst_12 = arith.constant 0.353553385 : f32
    %14 = vector.broadcast %cst_12 : f32 to vector<8x8xf32>
    %15 = arith.mulf %13, %14 : vector<8x8xf32>
    %16 = vector.broadcast %10 : vector<1x8xf32> to vector<8x8xf32>
    %17 = arith.addf %15, %16 : vector<8x8xf32>
    %c0_13 = arith.constant 0 : index
    %c0_14 = arith.constant 0 : index
    %c0_15 = arith.constant 0 : index
    %18 = vector.load %arg8[%c0_13, %c0_14, %c0_15] : memref<4x8x1xf32, #tpu.memory_space<vmem>>, vector<1x8x1xf32>
    %19 = vector.shape_cast %18 : vector<1x8x1xf32> to vector<8x1xf32>
    %cst_16 = arith.constant dense<0xFF800000> : vector<8xf32>
    %20 = vector.multi_reduction <maximumf>, %17, %cst_16 [1] : vector<8x8xf32> to vector<8xf32>
    %21 = vector.shape_cast %20 : vector<8xf32> to vector<8x1xf32>
    %22 = arith.maximumf %19, %21 : vector<8x1xf32>
    %23 = arith.subf %19, %22 : vector<8x1xf32>
    %24 = math.exp %23 : vector<8x1xf32>
    %25 = vector.broadcast %22 : vector<8x1xf32> to vector<8x8xf32>
    %26 = arith.subf %17, %25 : vector<8x8xf32>
    %27 = math.exp %26 : vector<8x8xf32>
    %c0_17 = arith.constant 0 : index
    %c0_18 = arith.constant 0 : index
    %c0_19 = arith.constant 0 : index
    %28 = vector.load %arg9[%c0_17, %c0_18, %c0_19] : memref<4x8x1xf32, #tpu.memory_space<vmem>>, vector<1x8x1xf32>
    %29 = vector.shape_cast %28 : vector<1x8x1xf32> to vector<8x1xf32>
    %30 = arith.mulf %24, %29 : vector<8x1xf32>
    %cst_20 = arith.constant dense<0.000000e+00> : vector<8xf32>
    %31 = vector.multi_reduction <add>, %27, %cst_20 [1] : vector<8x8xf32> to vector<8xf32>
    %32 = vector.shape_cast %31 : vector<8xf32> to vector<8x1xf32>
    %33 = arith.addf %30, %32 : vector<8x1xf32>
    %c0_21 = arith.constant 0 : index
    %c0_22 = arith.constant 0 : index
    %c0_23 = arith.constant 0 : index
    %34 = vector.load %arg9[%c0_21, %c0_22, %c0_23] : memref<4x8x1xf32, #tpu.memory_space<vmem>>, vector<1x8x1xf32>
    %35 = vector.shape_cast %34 : vector<1x8x1xf32> to vector<8x1xf32>
    %36 = vector.shape_cast %33 : vector<8x1xf32> to vector<1x8x1xf32>
    tpu.vector_store %arg9[%c0_21, %c0_22, %c0_23], %36 {strides = array<i32>} : memref<4x8x1xf32, #tpu.memory_space<vmem>>, vector<1x8x1xf32>,
    %37 = arith.truncf %27 : vector<8x8xf32> to vector<8x8xbf16>
    %38 = vector.extract_strided_slice %8 {offsets = [0, 0], sizes = [8, 8], strides = [1, 1]} : vector<8x32xbf16> to vector<8x8xbf16>
    %cst_24 = arith.constant dense<0.000000e+00> : vector<8x8xf32>
    %39 = tpu.matmul %37, %38, %cst_24 {dimension_numbers = #tpu.dot_dimension_numbers<[1], [0], [0], [1], [0, 0, 1, 1], [], []>} : vector<8x8xbf16>, vector<8x8xbf16>, vector<8x8xf32> -> vector<8x8xf32>
    %c0_25 = arith.constant 0 : index
    %c0_26 = arith.constant 0 : index
    %40 = vector.load %arg10[%c0_25, %c0_26] : memref<8x32xf32, #tpu.memory_space<vmem>>, vector<8x8xf32>
    %41 = vector.broadcast %24 : vector<8x1xf32> to vector<8x8xf32>
    %42 = arith.mulf %41, %40 : vector<8x8xf32>
    %43 = arith.addf %42, %39 : vector<8x8xf32>
    %c0_27 = arith.constant 0 : index
    %c0_28 = arith.constant 0 : index
    %44 = vector.load %arg10[%c0_27, %c0_28] : memref<8x32xf32, #tpu.memory_space<vmem>>, vector<8x8xf32>
    tpu.vector_store %arg10[%c0_27, %c0_28], %43 {strides = array<i32>} : memref<8x32xf32, #tpu.memory_space<vmem>>, vector<8x8xf32>,
    %c0_29 = arith.constant 0 : index
    %c0_30 = arith.constant 0 : index
    %c0_31 = arith.constant 0 : index
    %45 = vector.load %arg8[%c0_29, %c0_30, %c0_31] : memref<4x8x1xf32, #tpu.memory_space<vmem>>, vector<1x8x1xf32>
    %46 = vector.shape_cast %45 : vector<1x8x1xf32> to vector<8x1xf32>
    %47 = vector.shape_cast %22 : vector<8x1xf32> to vector<1x8x1xf32>
    tpu.vector_store %arg8[%c0_29, %c0_30, %c0_31], %47 {strides = array<i32>} : memref<4x8x1xf32, #tpu.memory_space<vmem>>, vector<1x8x1xf32>,
    %48 = vector.extract_strided_slice %4 {offsets = [0, 8], sizes = [8, 8], strides = [1, 1]} : vector<8x32xbf16> to vector<8x8xbf16>
    %49 = vector.extract_strided_slice %6 {offsets = [0, 8], sizes = [8, 8], strides = [1, 1]} : vector<8x32xbf16> to vector<8x8xbf16>
    %cst_32 = arith.constant dense<0.000000e+00> : vector<8x8xf32>
    %50 = tpu.matmul %48, %49, %cst_32 {dimension_numbers = #tpu.dot_dimension_numbers<[1], [1], [0], [0], [0, 0, 1, 0], [], []>} : vector<8x8xbf16>, vector<8x8xbf16>, vector<8x8xf32> -> vector<8x8xf32>
    %cst_33 = arith.constant 0.353553385 : f32
    %51 = vector.broadcast %cst_33 : f32 to vector<8x8xf32>
    %52 = arith.mulf %50, %51 : vector<8x8xf32>
    %53 = vector.broadcast %10 : vector<1x8xf32> to vector<8x8xf32>
    %54 = arith.addf %52, %53 : vector<8x8xf32>
    %c1 = arith.constant 1 : index
    %c0_34 = arith.constant 0 : index
    %c0_35 = arith.constant 0 : index
    %55 = vector.load %arg8[%c1, %c0_34, %c0_35] : memref<4x8x1xf32, #tpu.memory_space<vmem>>, vector<1x8x1xf32>
    %56 = vector.shape_cast %55 : vector<1x8x1xf32> to vector<8x1xf32>
    %cst_36 = arith.constant dense<0xFF800000> : vector<8xf32>
    %57 = vector.multi_reduction <maximumf>, %54, %cst_36 [1] : vector<8x8xf32> to vector<8xf32>
    %58 = vector.shape_cast %57 : vector<8xf32> to vector<8x1xf32>
    %59 = arith.maximumf %56, %58 : vector<8x1xf32>
    %60 = arith.subf %56, %59 : vector<8x1xf32>
    %61 = math.exp %60 : vector<8x1xf32>
    %62 = vector.broadcast %59 : vector<8x1xf32> to vector<8x8xf32>
    %63 = arith.subf %54, %62 : vector<8x8xf32>
    %64 = math.exp %63 : vector<8x8xf32>
    %c1_37 = arith.constant 1 : index
    %c0_38 = arith.constant 0 : index
    %c0_39 = arith.constant 0 : index
    %65 = vector.load %arg9[%c1_37, %c0_38, %c0_39] : memref<4x8x1xf32, #tpu.memory_space<vmem>>, vector<1x8x1xf32>
    %66 = vector.shape_cast %65 : vector<1x8x1xf32> to vector<8x1xf32>
    %67 = arith.mulf %61, %66 : vector<8x1xf32>
    %cst_40 = arith.constant dense<0.000000e+00> : vector<8xf32>
    %68 = vector.multi_reduction <add>, %64, %cst_40 [1] : vector<8x8xf32> to vector<8xf32>
    %69 = vector.shape_cast %68 : vector<8xf32> to vector<8x1xf32>
    %70 = arith.addf %67, %69 : vector<8x1xf32>
    %c1_41 = arith.constant 1 : index
    %c0_42 = arith.constant 0 : index
    %c0_43 = arith.constant 0 : index
    %71 = vector.load %arg9[%c1_41, %c0_42, %c0_43] : memref<4x8x1xf32, #tpu.memory_space<vmem>>, vector<1x8x1xf32>
    %72 = vector.shape_cast %71 : vector<1x8x1xf32> to vector<8x1xf32>
    %73 = vector.shape_cast %70 : vector<8x1xf32> to vector<1x8x1xf32>
    tpu.vector_store %arg9[%c1_41, %c0_42, %c0_43], %73 {strides = array<i32>} : memref<4x8x1xf32, #tpu.memory_space<vmem>>, vector<1x8x1xf32>,
    %74 = arith.truncf %64 : vector<8x8xf32> to vector<8x8xbf16>
    %75 = vector.extract_strided_slice %8 {offsets = [0, 8], sizes = [8, 8], strides = [1, 1]} : vector<8x32xbf16> to vector<8x8xbf16>
    %cst_44 = arith.constant dense<0.000000e+00> : vector<8x8xf32>
    %76 = tpu.matmul %74, %75, %cst_44 {dimension_numbers = #tpu.dot_dimension_numbers<[1], [0], [0], [1], [0, 0, 1, 1], [], []>} : vector<8x8xbf16>, vector<8x8xbf16>, vector<8x8xf32> -> vector<8x8xf32>
    %c0_45 = arith.constant 0 : index
    %c8 = arith.constant 8 : index
    %77 = vector.load %arg10[%c0_45, %c8] : memref<8x32xf32, #tpu.memory_space<vmem>>, vector<8x8xf32>
    %78 = vector.broadcast %61 : vector<8x1xf32> to vector<8x8xf32>
    %79 = arith.mulf %78, %77 : vector<8x8xf32>
    %80 = arith.addf %79, %76 : vector<8x8xf32>
    %c0_46 = arith.constant 0 : index
    %c8_47 = arith.constant 8 : index
    %81 = vector.load %arg10[%c0_46, %c8_47] : memref<8x32xf32, #tpu.memory_space<vmem>>, vector<8x8xf32>
    tpu.vector_store %arg10[%c0_46, %c8_47], %80 {strides = array<i32>} : memref<8x32xf32, #tpu.memory_space<vmem>>, vector<8x8xf32>,
    %c1_48 = arith.constant 1 : index
    %c0_49 = arith.constant 0 : index
    %c0_50 = arith.constant 0 : index
    %82 = vector.load %arg8[%c1_48, %c0_49, %c0_50] : memref<4x8x1xf32, #tpu.memory_space<vmem>>, vector<1x8x1xf32>
    %83 = vector.shape_cast %82 : vector<1x8x1xf32> to vector<8x1xf32>
    %84 = vector.shape_cast %59 : vector<8x1xf32> to vector<1x8x1xf32>
    tpu.vector_store %arg8[%c1_48, %c0_49, %c0_50], %84 {strides = array<i32>} : memref<4x8x1xf32, #tpu.memory_space<vmem>>, vector<1x8x1xf32>,
    %85 = vector.extract_strided_slice %4 {offsets = [0, 16], sizes = [8, 8], strides = [1, 1]} : vector<8x32xbf16> to vector<8x8xbf16>
    %86 = vector.extract_strided_slice %6 {offsets = [0, 16], sizes = [8, 8], strides = [1, 1]} : vector<8x32xbf16> to vector<8x8xbf16>
    %cst_51 = arith.constant dense<0.000000e+00> : vector<8x8xf32>
    %87 = tpu.matmul %85, %86, %cst_51 {dimension_numbers = #tpu.dot_dimension_numbers<[1], [1], [0], [0], [0, 0, 1, 0], [], []>} : vector<8x8xbf16>, vector<8x8xbf16>, vector<8x8xf32> -> vector<8x8xf32>
    %cst_52 = arith.constant 0.353553385 : f32
    %88 = vector.broadcast %cst_52 : f32 to vector<8x8xf32>
    %89 = arith.mulf %87, %88 : vector<8x8xf32>
    %90 = vector.broadcast %10 : vector<1x8xf32> to vector<8x8xf32>
    %91 = arith.addf %89, %90 : vector<8x8xf32>
    %c2 = arith.constant 2 : index
    %c0_53 = arith.constant 0 : index
    %c0_54 = arith.constant 0 : index
    %92 = vector.load %arg8[%c2, %c0_53, %c0_54] : memref<4x8x1xf32, #tpu.memory_space<vmem>>, vector<1x8x1xf32>
    %93 = vector.shape_cast %92 : vector<1x8x1xf32> to vector<8x1xf32>
    %cst_55 = arith.constant dense<0xFF800000> : vector<8xf32>
    %94 = vector.multi_reduction <maximumf>, %91, %cst_55 [1] : vector<8x8xf32> to vector<8xf32>
    %95 = vector.shape_cast %94 : vector<8xf32> to vector<8x1xf32>
    %96 = arith.maximumf %93, %95 : vector<8x1xf32>
    %97 = arith.subf %93, %96 : vector<8x1xf32>
    %98 = math.exp %97 : vector<8x1xf32>
    %99 = vector.broadcast %96 : vector<8x1xf32> to vector<8x8xf32>
    %100 = arith.subf %91, %99 : vector<8x8xf32>
    %101 = math.exp %100 : vector<8x8xf32>
    %c2_56 = arith.constant 2 : index
    %c0_57 = arith.constant 0 : index
    %c0_58 = arith.constant 0 : index
    %102 = vector.load %arg9[%c2_56, %c0_57, %c0_58] : memref<4x8x1xf32, #tpu.memory_space<vmem>>, vector<1x8x1xf32>
    %103 = vector.shape_cast %102 : vector<1x8x1xf32> to vector<8x1xf32>
    %104 = arith.mulf %98, %103 : vector<8x1xf32>
    %cst_59 = arith.constant dense<0.000000e+00> : vector<8xf32>
    %105 = vector.multi_reduction <add>, %101, %cst_59 [1] : vector<8x8xf32> to vector<8xf32>
    %106 = vector.shape_cast %105 : vector<8xf32> to vector<8x1xf32>
    %107 = arith.addf %104, %106 : vector<8x1xf32>
    %c2_60 = arith.constant 2 : index
    %c0_61 = arith.constant 0 : index
    %c0_62 = arith.constant 0 : index
    %108 = vector.load %arg9[%c2_60, %c0_61, %c0_62] : memref<4x8x1xf32, #tpu.memory_space<vmem>>, vector<1x8x1xf32>
    %109 = vector.shape_cast %108 : vector<1x8x1xf32> to vector<8x1xf32>
    %110 = vector.shape_cast %107 : vector<8x1xf32> to vector<1x8x1xf32>
    tpu.vector_store %arg9[%c2_60, %c0_61, %c0_62], %110 {strides = array<i32>} : memref<4x8x1xf32, #tpu.memory_space<vmem>>, vector<1x8x1xf32>,
    %111 = arith.truncf %101 : vector<8x8xf32> to vector<8x8xbf16>
    %112 = vector.extract_strided_slice %8 {offsets = [0, 16], sizes = [8, 8], strides = [1, 1]} : vector<8x32xbf16> to vector<8x8xbf16>
    %cst_63 = arith.constant dense<0.000000e+00> : vector<8x8xf32>
    %113 = tpu.matmul %111, %112, %cst_63 {dimension_numbers = #tpu.dot_dimension_numbers<[1], [0], [0], [1], [0, 0, 1, 1], [], []>} : vector<8x8xbf16>, vector<8x8xbf16>, vector<8x8xf32> -> vector<8x8xf32>
    %c0_64 = arith.constant 0 : index
    %c16 = arith.constant 16 : index
    %114 = vector.load %arg10[%c0_64, %c16] : memref<8x32xf32, #tpu.memory_space<vmem>>, vector<8x8xf32>
    %115 = vector.broadcast %98 : vector<8x1xf32> to vector<8x8xf32>
    %116 = arith.mulf %115, %114 : vector<8x8xf32>
    %117 = arith.addf %116, %113 : vector<8x8xf32>
    %c0_65 = arith.constant 0 : index
    %c16_66 = arith.constant 16 : index
    %118 = vector.load %arg10[%c0_65, %c16_66] : memref<8x32xf32, #tpu.memory_space<vmem>>, vector<8x8xf32>
    tpu.vector_store %arg10[%c0_65, %c16_66], %117 {strides = array<i32>} : memref<8x32xf32, #tpu.memory_space<vmem>>, vector<8x8xf32>,
    %c2_67 = arith.constant 2 : index
    %c0_68 = arith.constant 0 : index
    %c0_69 = arith.constant 0 : index
    %119 = vector.load %arg8[%c2_67, %c0_68, %c0_69] : memref<4x8x1xf32, #tpu.memory_space<vmem>>, vector<1x8x1xf32>
    %120 = vector.shape_cast %119 : vector<1x8x1xf32> to vector<8x1xf32>
    %121 = vector.shape_cast %96 : vector<8x1xf32> to vector<1x8x1xf32>
    tpu.vector_store %arg8[%c2_67, %c0_68, %c0_69], %121 {strides = array<i32>} : memref<4x8x1xf32, #tpu.memory_space<vmem>>, vector<1x8x1xf32>,
    %122 = vector.extract_strided_slice %4 {offsets = [0, 24], sizes = [8, 8], strides = [1, 1]} : vector<8x32xbf16> to vector<8x8xbf16>
    %123 = vector.extract_strided_slice %6 {offsets = [0, 24], sizes = [8, 8], strides = [1, 1]} : vector<8x32xbf16> to vector<8x8xbf16>
    %cst_70 = arith.constant dense<0.000000e+00> : vector<8x8xf32>
    %124 = tpu.matmul %122, %123, %cst_70 {dimension_numbers = #tpu.dot_dimension_numbers<[1], [1], [0], [0], [0, 0, 1, 0], [], []>} : vector<8x8xbf16>, vector<8x8xbf16>, vector<8x8xf32> -> vector<8x8xf32>
    %cst_71 = arith.constant 0.353553385 : f32
    %125 = vector.broadcast %cst_71 : f32 to vector<8x8xf32>
    %126 = arith.mulf %124, %125 : vector<8x8xf32>
    %127 = vector.broadcast %10 : vector<1x8xf32> to vector<8x8xf32>
    %128 = arith.addf %126, %127 : vector<8x8xf32>
    %c3 = arith.constant 3 : index
    %c0_72 = arith.constant 0 : index
    %c0_73 = arith.constant 0 : index
    %129 = vector.load %arg8[%c3, %c0_72, %c0_73] : memref<4x8x1xf32, #tpu.memory_space<vmem>>, vector<1x8x1xf32>
    %130 = vector.shape_cast %129 : vector<1x8x1xf32> to vector<8x1xf32>
    %cst_74 = arith.constant dense<0xFF800000> : vector<8xf32>
    %131 = vector.multi_reduction <maximumf>, %128, %cst_74 [1] : vector<8x8xf32> to vector<8xf32>
    %132 = vector.shape_cast %131 : vector<8xf32> to vector<8x1xf32>
    %133 = arith.maximumf %130, %132 : vector<8x1xf32>
    %134 = arith.subf %130, %133 : vector<8x1xf32>
    %135 = math.exp %134 : vector<8x1xf32>
    %136 = vector.broadcast %133 : vector<8x1xf32> to vector<8x8xf32>
    %137 = arith.subf %128, %136 : vector<8x8xf32>
    %138 = math.exp %137 : vector<8x8xf32>
    %c3_75 = arith.constant 3 : index
    %c0_76 = arith.constant 0 : index
    %c0_77 = arith.constant 0 : index
    %139 = vector.load %arg9[%c3_75, %c0_76, %c0_77] : memref<4x8x1xf32, #tpu.memory_space<vmem>>, vector<1x8x1xf32>
    %140 = vector.shape_cast %139 : vector<1x8x1xf32> to vector<8x1xf32>
    %141 = arith.mulf %135, %140 : vector<8x1xf32>
    %cst_78 = arith.constant dense<0.000000e+00> : vector<8xf32>
    %142 = vector.multi_reduction <add>, %138, %cst_78 [1] : vector<8x8xf32> to vector<8xf32>
    %143 = vector.shape_cast %142 : vector<8xf32> to vector<8x1xf32>
    %144 = arith.addf %141, %143 : vector<8x1xf32>
    %c3_79 = arith.constant 3 : index
    %c0_80 = arith.constant 0 : index
    %c0_81 = arith.constant 0 : index
    %145 = vector.load %arg9[%c3_79, %c0_80, %c0_81] : memref<4x8x1xf32, #tpu.memory_space<vmem>>, vector<1x8x1xf32>
    %146 = vector.shape_cast %145 : vector<1x8x1xf32> to vector<8x1xf32>
    %147 = vector.shape_cast %144 : vector<8x1xf32> to vector<1x8x1xf32>
    tpu.vector_store %arg9[%c3_79, %c0_80, %c0_81], %147 {strides = array<i32>} : memref<4x8x1xf32, #tpu.memory_space<vmem>>, vector<1x8x1xf32>,
    %148 = arith.truncf %138 : vector<8x8xf32> to vector<8x8xbf16>
    %149 = vector.extract_strided_slice %8 {offsets = [0, 24], sizes = [8, 8], strides = [1, 1]} : vector<8x32xbf16> to vector<8x8xbf16>
    %cst_82 = arith.constant dense<0.000000e+00> : vector<8x8xf32>
    %150 = tpu.matmul %148, %149, %cst_82 {dimension_numbers = #tpu.dot_dimension_numbers<[1], [0], [0], [1], [0, 0, 1, 1], [], []>} : vector<8x8xbf16>, vector<8x8xbf16>, vector<8x8xf32> -> vector<8x8xf32>
    %c0_83 = arith.constant 0 : index
    %c24 = arith.constant 24 : index
    %151 = vector.load %arg10[%c0_83, %c24] : memref<8x32xf32, #tpu.memory_space<vmem>>, vector<8x8xf32>
    %152 = vector.broadcast %135 : vector<8x1xf32> to vector<8x8xf32>
    %153 = arith.mulf %152, %151 : vector<8x8xf32>
    %154 = arith.addf %153, %150 : vector<8x8xf32>
    %c0_84 = arith.constant 0 : index
    %c24_85 = arith.constant 24 : index
    %155 = vector.load %arg10[%c0_84, %c24_85] : memref<8x32xf32, #tpu.memory_space<vmem>>, vector<8x8xf32>
    tpu.vector_store %arg10[%c0_84, %c24_85], %154 {strides = array<i32>} : memref<8x32xf32, #tpu.memory_space<vmem>>, vector<8x8xf32>,
    %c3_86 = arith.constant 3 : index
    %c0_87 = arith.constant 0 : index
    %c0_88 = arith.constant 0 : index
    %156 = vector.load %arg8[%c3_86, %c0_87, %c0_88] : memref<4x8x1xf32, #tpu.memory_space<vmem>>, vector<1x8x1xf32>
    %157 = vector.shape_cast %156 : vector<1x8x1xf32> to vector<8x1xf32>
    %158 = vector.shape_cast %133 : vector<8x1xf32> to vector<1x8x1xf32>
    tpu.vector_store %arg8[%c3_86, %c0_87, %c0_88], %158 {strides = array<i32>} : memref<4x8x1xf32, #tpu.memory_space<vmem>>, vector<1x8x1xf32>,
    %c0_i32_89 = arith.constant 0 : i32
    %159 = arith.cmpi eq, %arg2, %c0_i32_89 : i32
    %160 = arith.extui %159 : i1 to i32
    %c0_i32_90 = arith.constant 0 : i32
    %161 = arith.cmpi ne, %160, %c0_i32_90 : i32
    scf.if %161 {
      %c0_91 = arith.constant 0 : index
      %c0_92 = arith.constant 0 : index
      %c0_93 = arith.constant 0 : index
      %162 = vector.load %arg9[%c0_91, %c0_92, %c0_93] : memref<4x8x1xf32, #tpu.memory_space<vmem>>, vector<1x8x1xf32>
      %163 = vector.shape_cast %162 : vector<1x8x1xf32> to vector<8x1xf32>
      %164 = tpu.reciprocal %163 {approx = true} : vector<8x1xf32> -> vector<8x1xf32>
      %c0_94 = arith.constant 0 : index
      %c0_95 = arith.constant 0 : index
      %165 = vector.load %arg10[%c0_94, %c0_95] : memref<8x32xf32, #tpu.memory_space<vmem>>, vector<8x8xf32>
      %166 = vector.broadcast %164 : vector<8x1xf32> to vector<8x8xf32>
      %167 = arith.mulf %165, %166 : vector<8x8xf32>
      %168 = arith.truncf %167 : vector<8x8xf32> to vector<8x8xbf16>
      %c0_96 = arith.constant 0 : index
      %c0_97 = arith.constant 0 : index
      %c0_98 = arith.constant 0 : index
      %169 = vector.load %arg7[%c0_96, %c0_97, %c0_98] : memref<1x8x32xbf16, #tpu.memory_space<vmem>>, vector<1x8x8xbf16>
      %170 = vector.shape_cast %169 : vector<1x8x8xbf16> to vector<8x8xbf16>
      %171 = vector.shape_cast %168 : vector<8x8xbf16> to vector<1x8x8xbf16>
      tpu.vector_store %arg7[%c0_96, %c0_97, %c0_98], %171 {strides = array<i32>} : memref<1x8x32xbf16, #tpu.memory_space<vmem>>, vector<1x8x8xbf16>,
      %c1_99 = arith.constant 1 : index
      %c0_100 = arith.constant 0 : index
      %c0_101 = arith.constant 0 : index
      %172 = vector.load %arg9[%c1_99, %c0_100, %c0_101] : memref<4x8x1xf32, #tpu.memory_space<vmem>>, vector<1x8x1xf32>
      %173 = vector.shape_cast %172 : vector<1x8x1xf32> to vector<8x1xf32>
      %174 = tpu.reciprocal %173 {approx = true} : vector<8x1xf32> -> vector<8x1xf32>
      %c0_102 = arith.constant 0 : index
      %c8_103 = arith.constant 8 : index
      %175 = vector.load %arg10[%c0_102, %c8_103] : memref<8x32xf32, #tpu.memory_space<vmem>>, vector<8x8xf32>
      %176 = vector.broadcast %174 : vector<8x1xf32> to vector<8x8xf32>
      %177 = arith.mulf %175, %176 : vector<8x8xf32>
      %178 = arith.truncf %177 : vector<8x8xf32> to vector<8x8xbf16>
      %c0_104 = arith.constant 0 : index
      %c0_105 = arith.constant 0 : index
      %c8_106 = arith.constant 8 : index
      %179 = vector.load %arg7[%c0_104, %c0_105, %c8_106] : memref<1x8x32xbf16, #tpu.memory_space<vmem>>, vector<1x8x8xbf16>
      %180 = vector.shape_cast %179 : vector<1x8x8xbf16> to vector<8x8xbf16>
      %181 = vector.shape_cast %178 : vector<8x8xbf16> to vector<1x8x8xbf16>
      tpu.vector_store %arg7[%c0_104, %c0_105, %c8_106], %181 {strides = array<i32>} : memref<1x8x32xbf16, #tpu.memory_space<vmem>>, vector<1x8x8xbf16>,
      %c2_107 = arith.constant 2 : index
      %c0_108 = arith.constant 0 : index
      %c0_109 = arith.constant 0 : index
      %182 = vector.load %arg9[%c2_107, %c0_108, %c0_109] : memref<4x8x1xf32, #tpu.memory_space<vmem>>, vector<1x8x1xf32>
      %183 = vector.shape_cast %182 : vector<1x8x1xf32> to vector<8x1xf32>
      %184 = tpu.reciprocal %183 {approx = true} : vector<8x1xf32> -> vector<8x1xf32>
      %c0_110 = arith.constant 0 : index
      %c16_111 = arith.constant 16 : index
      %185 = vector.load %arg10[%c0_110, %c16_111] : memref<8x32xf32, #tpu.memory_space<vmem>>, vector<8x8xf32>
      %186 = vector.broadcast %184 : vector<8x1xf32> to vector<8x8xf32>
      %187 = arith.mulf %185, %186 : vector<8x8xf32>
      %188 = arith.truncf %187 : vector<8x8xf32> to vector<8x8xbf16>
      %c0_112 = arith.constant 0 : index
      %c0_113 = arith.constant 0 : index
      %c16_114 = arith.constant 16 : index
      %189 = vector.load %arg7[%c0_112, %c0_113, %c16_114] : memref<1x8x32xbf16, #tpu.memory_space<vmem>>, vector<1x8x8xbf16>
      %190 = vector.shape_cast %189 : vector<1x8x8xbf16> to vector<8x8xbf16>
      %191 = vector.shape_cast %188 : vector<8x8xbf16> to vector<1x8x8xbf16>
      tpu.vector_store %arg7[%c0_112, %c0_113, %c16_114], %191 {strides = array<i32>} : memref<1x8x32xbf16, #tpu.memory_space<vmem>>, vector<1x8x8xbf16>,
      %c3_115 = arith.constant 3 : index
      %c0_116 = arith.constant 0 : index
      %c0_117 = arith.constant 0 : index
      %192 = vector.load %arg9[%c3_115, %c0_116, %c0_117] : memref<4x8x1xf32, #tpu.memory_space<vmem>>, vector<1x8x1xf32>
      %193 = vector.shape_cast %192 : vector<1x8x1xf32> to vector<8x1xf32>
      %194 = tpu.reciprocal %193 {approx = true} : vector<8x1xf32> -> vector<8x1xf32>
      %c0_118 = arith.constant 0 : index
      %c24_119 = arith.constant 24 : index
      %195 = vector.load %arg10[%c0_118, %c24_119] : memref<8x32xf32, #tpu.memory_space<vmem>>, vector<8x8xf32>
      %196 = vector.broadcast %194 : vector<8x1xf32> to vector<8x8xf32>
      %197 = arith.mulf %195, %196 : vector<8x8xf32>
      %198 = arith.truncf %197 : vector<8x8xf32> to vector<8x8xbf16>
      %c0_120 = arith.constant 0 : index
      %c0_121 = arith.constant 0 : index
      %c24_122 = arith.constant 24 : index
      %199 = vector.load %arg7[%c0_120, %c0_121, %c24_122] : memref<1x8x32xbf16, #tpu.memory_space<vmem>>, vector<1x8x8xbf16>
      %200 = vector.shape_cast %199 : vector<1x8x8xbf16> to vector<8x8xbf16>
      %201 = vector.shape_cast %198 : vector<8x8xbf16> to vector<1x8x8xbf16>
      tpu.vector_store %arg7[%c0_120, %c0_121, %c24_122], %201 {strides = array<i32>} : memref<1x8x32xbf16, #tpu.memory_space<vmem>>, vector<1x8x8xbf16>,
    } else {
    }
    return
  }
  func.func @transform_0(%arg0: i32, %arg1: i32, %arg2: i32) -> (i32, i32, i32) {
    %c0_i32 = arith.constant 0 : i32
    %c0_i32_0 = arith.constant 0 : i32
    return %arg0, %arg1, %c0_i32 : i32, i32, i32
  }
  func.func @transform_1(%arg0: i32, %arg1: i32, %arg2: i32) -> (i32, i32, i32) {
    %c0_i32 = arith.constant 0 : i32
    %c0_i32_0 = arith.constant 0 : i32
    return %arg0, %arg2, %c0_i32 : i32, i32, i32
  }
  func.func @transform_2(%arg0: i32, %arg1: i32, %arg2: i32) -> (i32, i32, i32) {
    %c0_i32 = arith.constant 0 : i32
    %c0_i32_0 = arith.constant 0 : i32
    return %arg0, %arg2, %c0_i32 : i32, i32, i32
  }
  func.func @transform_3(%arg0: i32, %arg1: i32, %arg2: i32) -> (i32, i32, i32) {
    %c0_i32 = arith.constant 0 : i32
    %c0_i32_0 = arith.constant 0 : i32
    return %arg0, %c0_i32, %arg2 : i32, i32, i32
  }
  func.func @transform_4(%arg0: i32, %arg1: i32, %arg2: i32) -> (i32, i32, i32) {
    %c0_i32 = arith.constant 0 : i32
    %c0_i32_0 = arith.constant 0 : i32
    return %arg0, %arg1, %c0_i32 : i32, i32, i32
  }
}

module attributes {stable_mosaic.version = 11 : i64} {
  func.func @_matmul_kernel(%arg0: i32, %arg1: i32, %arg2: i32, %arg3: memref<16x32xbf16, #tpu.memory_space<vmem>>, %arg4: memref<32x64xbf16, #tpu.memory_space<vmem>>, %arg5: memref<1x64xbf16, #tpu.memory_space<vmem>>, %arg6: memref<16x64xbf16, #tpu.memory_space<vmem>>, %arg7: memref<16x64xf32, #tpu.memory_space<vmem>>) attributes {dimension_semantics = [#tpu.dimension_semantics<parallel>, #tpu.dimension_semantics<parallel>, #tpu.dimension_semantics<arbitrary>], iteration_bounds = array<i64: 1, 1, 1>, scalar_prefetch = 0 : i64, scratch_operands = 1 : i64, tpu.core_type = #tpu.core_type<tc>, window_params = [{transform_indices = @transform_0, window_bounds = array<i64: 16, 32>}, {transform_indices = @transform_1, window_bounds = array<i64: 32, 64>}, {transform_indices = @transform_2, window_bounds = array<i64: 1, 64>}, {transform_indices = @transform_3, window_bounds = array<i64: 16, 64>}]} {
    %c0_i32 = arith.constant 0 : i32
    %0 = arith.cmpi eq, %arg2, %c0_i32 : i32
    %1 = arith.extui %0 : i1 to i32
    %c0_i32_0 = arith.constant 0 : i32
    %2 = arith.cmpi ne, %1, %c0_i32_0 : i32
    scf.if %2 {
      %cst_10 = arith.constant 0.000000e+00 : f32
      %12 = vector.broadcast %cst_10 : f32 to vector<16x64xf32>
      %c0_11 = arith.constant 0 : index
      %c0_12 = arith.constant 0 : index
      %13 = vector.load %arg7[%c0_11, %c0_12] : memref<16x64xf32, #tpu.memory_space<vmem>>, vector<16x64xf32>
      tpu.vector_store %arg7[%c0_11, %c0_12], %12 {strides = array<i32>} : memref<16x64xf32, #tpu.memory_space<vmem>>, vector<16x64xf32>,
    } else {
    }
    %c0 = arith.constant 0 : index
    %c0_1 = arith.constant 0 : index
    %3 = vector.load %arg7[%c0, %c0_1] : memref<16x64xf32, #tpu.memory_space<vmem>>, vector<16x64xf32>
    %c0_2 = arith.constant 0 : index
    %c0_3 = arith.constant 0 : index
    %4 = vector.load %arg3[%c0_2, %c0_3] : memref<16x32xbf16, #tpu.memory_space<vmem>>, vector<16x32xbf16>
    %c0_4 = arith.constant 0 : index
    %c0_5 = arith.constant 0 : index
    %5 = vector.load %arg4[%c0_4, %c0_5] : memref<32x64xbf16, #tpu.memory_space<vmem>>, vector<32x64xbf16>
    %cst = arith.constant dense<0.000000e+00> : vector<16x64xf32>
    %6 = tpu.matmul %4, %5, %cst {dimension_numbers = #tpu.dot_dimension_numbers<[1], [0], [0], [1], [0, 0, 1, 1], [], []>} : vector<16x32xbf16>, vector<32x64xbf16>, vector<16x64xf32> -> vector<16x64xf32>
    %7 = arith.addf %3, %6 : vector<16x64xf32>
    %c0_6 = arith.constant 0 : index
    %c0_7 = arith.constant 0 : index
    %8 = vector.load %arg7[%c0_6, %c0_7] : memref<16x64xf32, #tpu.memory_space<vmem>>, vector<16x64xf32>
    tpu.vector_store %arg7[%c0_6, %c0_7], %7 {strides = array<i32>} : memref<16x64xf32, #tpu.memory_space<vmem>>, vector<16x64xf32>,
    %c0_i32_8 = arith.constant 0 : i32
    %9 = arith.cmpi eq, %arg2, %c0_i32_8 : i32
    %10 = arith.extui %9 : i1 to i32
    %c0_i32_9 = arith.constant 0 : i32
    %11 = arith.cmpi ne, %10, %c0_i32_9 : i32
    scf.if %11 {
      %c0_10 = arith.constant 0 : index
      %c0_11 = arith.constant 0 : index
      %12 = vector.load %arg7[%c0_10, %c0_11] : memref<16x64xf32, #tpu.memory_space<vmem>>, vector<16x64xf32>
      %c0_12 = arith.constant 0 : index
      %c0_13 = arith.constant 0 : index
      %13 = vector.load %arg5[%c0_12, %c0_13] : memref<1x64xbf16, #tpu.memory_space<vmem>>, vector<1x64xbf16>
      %14 = arith.extf %13 : vector<1x64xbf16> to vector<1x64xf32>
      %15 = vector.broadcast %14 : vector<1x64xf32> to vector<16x64xf32>
      %16 = arith.addf %12, %15 : vector<16x64xf32>
      %cst_14 = arith.constant 5.000000e-01 : f32
      %17 = vector.broadcast %cst_14 : f32 to vector<16x64xf32>
      %18 = arith.mulf %17, %16 : vector<16x64xf32>
      %cst_15 = arith.constant 4.471500e-02 : f32
      %19 = vector.broadcast %cst_15 : f32 to vector<16x64xf32>
      %20 = arith.mulf %19, %16 : vector<16x64xf32>
      %21 = arith.mulf %20, %16 : vector<16x64xf32>
      %22 = arith.mulf %21, %16 : vector<16x64xf32>
      %23 = arith.addf %16, %22 : vector<16x64xf32>
      %cst_16 = arith.constant 0.797884583 : f32
      %24 = vector.broadcast %cst_16 : f32 to vector<16x64xf32>
      %25 = arith.mulf %24, %23 : vector<16x64xf32>
      %26 = math.tanh %25 : vector<16x64xf32>
      %cst_17 = arith.constant 1.000000e+00 : f32
      %27 = vector.broadcast %cst_17 : f32 to vector<16x64xf32>
      %28 = arith.addf %27, %26 : vector<16x64xf32>
      %29 = arith.mulf %18, %28 : vector<16x64xf32>
      %30 = arith.truncf %29 : vector<16x64xf32> to vector<16x64xbf16>
      %c0_18 = arith.constant 0 : index
      %c0_19 = arith.constant 0 : index
      %31 = vector.load %arg6[%c0_18, %c0_19] : memref<16x64xbf16, #tpu.memory_space<vmem>>, vector<16x64xbf16>
      tpu.vector_store %arg6[%c0_18, %c0_19], %30 {strides = array<i32>} : memref<16x64xbf16, #tpu.memory_space<vmem>>, vector<16x64xbf16>,
    } else {
    }
    return
  }
  func.func @transform_0(%arg0: i32, %arg1: i32, %arg2: i32) -> (i32, i32) {
    %c0_i32 = arith.constant 0 : i32
    return %arg0, %arg2 : i32, i32
  }
  func.func @transform_1(%arg0: i32, %arg1: i32, %arg2: i32) -> (i32, i32) {
    %c0_i32 = arith.constant 0 : i32
    return %arg2, %arg1 : i32, i32
  }
  func.func @transform_2(%arg0: i32, %arg1: i32, %arg2: i32) -> (i32, i32) {
    %c0_i32 = arith.constant 0 : i32
    %c0_i32_0 = arith.constant 0 : i32
    return %c0_i32, %arg1 : i32, i32
  }
  func.func @transform_3(%arg0: i32, %arg1: i32, %arg2: i32) -> (i32, i32) {
    %c0_i32 = arith.constant 0 : i32
    return %arg0, %arg1 : i32, i32
  }
}

module attributes {stable_mosaic.version = 11 : i64} {
  func.func @_matmul_kernel(%arg0: i32, %arg1: i32, %arg2: i32, %arg3: memref<16x64xbf16, #tpu.memory_space<vmem>>, %arg4: memref<64x32xbf16, #tpu.memory_space<vmem>>, %arg5: memref<1x32xbf16, #tpu.memory_space<vmem>>, %arg6: memref<16x32xbf16, #tpu.memory_space<vmem>>, %arg7: memref<16x32xbf16, #tpu.memory_space<vmem>>, %arg8: memref<16x32xf32, #tpu.memory_space<vmem>>) attributes {dimension_semantics = [#tpu.dimension_semantics<parallel>, #tpu.dimension_semantics<parallel>, #tpu.dimension_semantics<arbitrary>], iteration_bounds = array<i64: 1, 1, 1>, scalar_prefetch = 0 : i64, scratch_operands = 1 : i64, tpu.core_type = #tpu.core_type<tc>, window_params = [{transform_indices = @transform_0, window_bounds = array<i64: 16, 64>}, {transform_indices = @transform_1, window_bounds = array<i64: 64, 32>}, {transform_indices = @transform_2, window_bounds = array<i64: 1, 32>}, {transform_indices = @transform_3, window_bounds = array<i64: 16, 32>}, {transform_indices = @transform_4, window_bounds = array<i64: 16, 32>}]} {
    %c0_i32 = arith.constant 0 : i32
    %0 = arith.cmpi eq, %arg2, %c0_i32 : i32
    %1 = arith.extui %0 : i1 to i32
    %c0_i32_0 = arith.constant 0 : i32
    %2 = arith.cmpi ne, %1, %c0_i32_0 : i32
    scf.if %2 {
      %cst_10 = arith.constant 0.000000e+00 : f32
      %12 = vector.broadcast %cst_10 : f32 to vector<16x32xf32>
      %c0_11 = arith.constant 0 : index
      %c0_12 = arith.constant 0 : index
      %13 = vector.load %arg8[%c0_11, %c0_12] : memref<16x32xf32, #tpu.memory_space<vmem>>, vector<16x32xf32>
      tpu.vector_store %arg8[%c0_11, %c0_12], %12 {strides = array<i32>} : memref<16x32xf32, #tpu.memory_space<vmem>>, vector<16x32xf32>,
    } else {
    }
    %c0 = arith.constant 0 : index
    %c0_1 = arith.constant 0 : index
    %3 = vector.load %arg8[%c0, %c0_1] : memref<16x32xf32, #tpu.memory_space<vmem>>, vector<16x32xf32>
    %c0_2 = arith.constant 0 : index
    %c0_3 = arith.constant 0 : index
    %4 = vector.load %arg3[%c0_2, %c0_3] : memref<16x64xbf16, #tpu.memory_space<vmem>>, vector<16x64xbf16>
    %c0_4 = arith.constant 0 : index
    %c0_5 = arith.constant 0 : index
    %5 = vector.load %arg4[%c0_4, %c0_5] : memref<64x32xbf16, #tpu.memory_space<vmem>>, vector<64x32xbf16>
    %cst = arith.constant dense<0.000000e+00> : vector<16x32xf32>
    %6 = tpu.matmul %4, %5, %cst {dimension_numbers = #tpu.dot_dimension_numbers<[1], [0], [0], [1], [0, 0, 1, 1], [], []>} : vector<16x64xbf16>, vector<64x32xbf16>, vector<16x32xf32> -> vector<16x32xf32>
    %7 = arith.addf %3, %6 : vector<16x32xf32>
    %c0_6 = arith.constant 0 : index
    %c0_7 = arith.constant 0 : index
    %8 = vector.load %arg8[%c0_6, %c0_7] : memref<16x32xf32, #tpu.memory_space<vmem>>, vector<16x32xf32>
    tpu.vector_store %arg8[%c0_6, %c0_7], %7 {strides = array<i32>} : memref<16x32xf32, #tpu.memory_space<vmem>>, vector<16x32xf32>,
    %c0_i32_8 = arith.constant 0 : i32
    %9 = arith.cmpi eq, %arg2, %c0_i32_8 : i32
    %10 = arith.extui %9 : i1 to i32
    %c0_i32_9 = arith.constant 0 : i32
    %11 = arith.cmpi ne, %10, %c0_i32_9 : i32
    scf.if %11 {
      %c0_10 = arith.constant 0 : index
      %c0_11 = arith.constant 0 : index
      %12 = vector.load %arg8[%c0_10, %c0_11] : memref<16x32xf32, #tpu.memory_space<vmem>>, vector<16x32xf32>
      %c0_12 = arith.constant 0 : index
      %c0_13 = arith.constant 0 : index
      %13 = vector.load %arg5[%c0_12, %c0_13] : memref<1x32xbf16, #tpu.memory_space<vmem>>, vector<1x32xbf16>
      %14 = arith.extf %13 : vector<1x32xbf16> to vector<1x32xf32>
      %15 = vector.broadcast %14 : vector<1x32xf32> to vector<16x32xf32>
      %16 = arith.addf %12, %15 : vector<16x32xf32>
      %c0_14 = arith.constant 0 : index
      %c0_15 = arith.constant 0 : index
      %17 = vector.load %arg6[%c0_14, %c0_15] : memref<16x32xbf16, #tpu.memory_space<vmem>>, vector<16x32xbf16>
      %18 = arith.extf %17 : vector<16x32xbf16> to vector<16x32xf32>
      %19 = arith.addf %16, %18 : vector<16x32xf32>
      %20 = arith.truncf %19 : vector<16x32xf32> to vector<16x32xbf16>
      %c0_16 = arith.constant 0 : index
      %c0_17 = arith.constant 0 : index
      %21 = vector.load %arg7[%c0_16, %c0_17] : memref<16x32xbf16, #tpu.memory_space<vmem>>, vector<16x32xbf16>
      tpu.vector_store %arg7[%c0_16, %c0_17], %20 {strides = array<i32>} : memref<16x32xbf16, #tpu.memory_space<vmem>>, vector<16x32xbf16>,
    } else {
    }
    return
  }
  func.func @transform_0(%arg0: i32, %arg1: i32, %arg2: i32) -> (i32, i32) {
    %c0_i32 = arith.constant 0 : i32
    return %arg0, %arg2 : i32, i32
  }
  func.func @transform_1(%arg0: i32, %arg1: i32, %arg2: i32) -> (i32, i32) {
    %c0_i32 = arith.constant 0 : i32
    return %arg2, %arg1 : i32, i32
  }
  func.func @transform_2(%arg0: i32, %arg1: i32, %arg2: i32) -> (i32, i32) {
    %c0_i32 = arith.constant 0 : i32
    %c0_i32_0 = arith.constant 0 : i32
    return %c0_i32, %arg1 : i32, i32
  }
  func.func @transform_3(%arg0: i32, %arg1: i32, %arg2: i32) -> (i32, i32) {
    %c0_i32 = arith.constant 0 : i32
    return %arg0, %arg1 : i32, i32
  }
  func.func @transform_4(%arg0: i32, %arg1: i32, %arg2: i32) -> (i32, i32) {
    %c0_i32 = arith.constant 0 : i32
    return %arg0, %arg1 : i32, i32
  }
}

module attributes {stable_mosaic.version = 11 : i64} {
  func.func @_matmul_kernel(%arg0: i32, %arg1: i32, %arg2: i32, %arg3: memref<16x32xbf16, #tpu.memory_space<vmem>>, %arg4: memref<32x32xbf16, #tpu.memory_space<vmem>>, %arg5: memref<1x32xbf16, #tpu.memory_space<vmem>>, %arg6: memref<16x32xbf16, #tpu.memory_space<vmem>>, %arg7: memref<16x32xbf16, #tpu.memory_space<vmem>>, %arg8: memref<16x32xf32, #tpu.memory_space<vmem>>) attributes {dimension_semantics = [#tpu.dimension_semantics<parallel>, #tpu.dimension_semantics<parallel>, #tpu.dimension_semantics<arbitrary>], iteration_bounds = array<i64: 1, 1, 1>, scalar_prefetch = 0 : i64, scratch_operands = 1 : i64, tpu.core_type = #tpu.core_type<tc>, window_params = [{transform_indices = @transform_0, window_bounds = array<i64: 16, 32>}, {transform_indices = @transform_1, window_bounds = array<i64: 32, 32>}, {transform_indices = @transform_2, window_bounds = array<i64: 1, 32>}, {transform_indices = @transform_3, window_bounds = array<i64: 16, 32>}, {transform_indices = @transform_4, window_bounds = array<i64: 16, 32>}]} {
    %c0_i32 = arith.constant 0 : i32
    %0 = arith.cmpi eq, %arg2, %c0_i32 : i32
    %1 = arith.extui %0 : i1 to i32
    %c0_i32_0 = arith.constant 0 : i32
    %2 = arith.cmpi ne, %1, %c0_i32_0 : i32
    scf.if %2 {
      %cst_10 = arith.constant 0.000000e+00 : f32
      %12 = vector.broadcast %cst_10 : f32 to vector<16x32xf32>
      %c0_11 = arith.constant 0 : index
      %c0_12 = arith.constant 0 : index
      %13 = vector.load %arg8[%c0_11, %c0_12] : memref<16x32xf32, #tpu.memory_space<vmem>>, vector<16x32xf32>
      tpu.vector_store %arg8[%c0_11, %c0_12], %12 {strides = array<i32>} : memref<16x32xf32, #tpu.memory_space<vmem>>, vector<16x32xf32>,
    } else {
    }
    %c0 = arith.constant 0 : index
    %c0_1 = arith.constant 0 : index
    %3 = vector.load %arg8[%c0, %c0_1] : memref<16x32xf32, #tpu.memory_space<vmem>>, vector<16x32xf32>
    %c0_2 = arith.constant 0 : index
    %c0_3 = arith.constant 0 : index
    %4 = vector.load %arg3[%c0_2, %c0_3] : memref<16x32xbf16, #tpu.memory_space<vmem>>, vector<16x32xbf16>
    %c0_4 = arith.constant 0 : index
    %c0_5 = arith.constant 0 : index
    %5 = vector.load %arg4[%c0_4, %c0_5] : memref<32x32xbf16, #tpu.memory_space<vmem>>, vector<32x32xbf16>
    %cst = arith.constant dense<0.000000e+00> : vector<16x32xf32>
    %6 = tpu.matmul %4, %5, %cst {dimension_numbers = #tpu.dot_dimension_numbers<[1], [0], [0], [1], [0, 0, 1, 1], [], []>} : vector<16x32xbf16>, vector<32x32xbf16>, vector<16x32xf32> -> vector<16x32xf32>
    %7 = arith.addf %3, %6 : vector<16x32xf32>
    %c0_6 = arith.constant 0 : index
    %c0_7 = arith.constant 0 : index
    %8 = vector.load %arg8[%c0_6, %c0_7] : memref<16x32xf32, #tpu.memory_space<vmem>>, vector<16x32xf32>
    tpu.vector_store %arg8[%c0_6, %c0_7], %7 {strides = array<i32>} : memref<16x32xf32, #tpu.memory_space<vmem>>, vector<16x32xf32>,
    %c0_i32_8 = arith.constant 0 : i32
    %9 = arith.cmpi eq, %arg2, %c0_i32_8 : i32
    %10 = arith.extui %9 : i1 to i32
    %c0_i32_9 = arith.constant 0 : i32
    %11 = arith.cmpi ne, %10, %c0_i32_9 : i32
    scf.if %11 {
      %c0_10 = arith.constant 0 : index
      %c0_11 = arith.constant 0 : index
      %12 = vector.load %arg8[%c0_10, %c0_11] : memref<16x32xf32, #tpu.memory_space<vmem>>, vector<16x32xf32>
      %c0_12 = arith.constant 0 : index
      %c0_13 = arith.constant 0 : index
      %13 = vector.load %arg5[%c0_12, %c0_13] : memref<1x32xbf16, #tpu.memory_space<vmem>>, vector<1x32xbf16>
      %14 = arith.extf %13 : vector<1x32xbf16> to vector<1x32xf32>
      %15 = vector.broadcast %14 : vector<1x32xf32> to vector<16x32xf32>
      %16 = arith.addf %12, %15 : vector<16x32xf32>
      %c0_14 = arith.constant 0 : index
      %c0_15 = arith.constant 0 : index
      %17 = vector.load %arg6[%c0_14, %c0_15] : memref<16x32xbf16, #tpu.memory_space<vmem>>, vector<16x32xbf16>
      %18 = arith.extf %17 : vector<16x32xbf16> to vector<16x32xf32>
      %19 = arith.addf %16, %18 : vector<16x32xf32>
      %20 = arith.truncf %19 : vector<16x32xf32> to vector<16x32xbf16>
      %c0_16 = arith.constant 0 : index
      %c0_17 = arith.constant 0 : index
      %21 = vector.load %arg7[%c0_16, %c0_17] : memref<16x32xbf16, #tpu.memory_space<vmem>>, vector<16x32xbf16>
      tpu.vector_store %arg7[%c0_16, %c0_17], %20 {strides = array<i32>} : memref<16x32xbf16, #tpu.memory_space<vmem>>, vector<16x32xbf16>,
    } else {
    }
    return
  }
  func.func @transform_0(%arg0: i32, %arg1: i32, %arg2: i32) -> (i32, i32) {
    %c0_i32 = arith.constant 0 : i32
    return %arg0, %arg2 : i32, i32
  }
  func.func @transform_1(%arg0: i32, %arg1: i32, %arg2: i32) -> (i32, i32) {
    %c0_i32 = arith.constant 0 : i32
    return %arg2, %arg1 : i32, i32
  }
  func.func @transform_2(%arg0: i32, %arg1: i32, %arg2: i32) -> (i32, i32) {
    %c0_i32 = arith.constant 0 : i32
    %c0_i32_0 = arith.constant 0 : i32
    return %c0_i32, %arg1 : i32, i32
  }
  func.func @transform_3(%arg0: i32, %arg1: i32, %arg2: i32) -> (i32, i32) {
    %c0_i32 = arith.constant 0 : i32
    return %arg0, %arg1 : i32, i32
  }
  func.func @transform_4(%arg0: i32, %arg1: i32, %arg2: i32) -> (i32, i32) {
    %c0_i32 = arith.constant 0 : i32
    return %arg0, %arg1 : i32, i32
  }
}

module attributes {stable_mosaic.version = 11 : i64} {
  func.func @_matmul_kernel(%arg0: i32, %arg1: i32, %arg2: i32, %arg3: memref<16x64xbf16, #tpu.memory_space<vmem>>, %arg4: memref<64x32xbf16, #tpu.memory_space<vmem>>, %arg5: memref<1x32xbf16, #tpu.memory_space<vmem>>, %arg6: memref<16x32xbf16, #tpu.memory_space<vmem>>, %arg7: memref<1x32xf32, #tpu.memory_space<vmem>>, %arg8: memref<1x32xf32, #tpu.memory_space<vmem>>, %arg9: memref<16x32xbf16, #tpu.memory_space<vmem>>, %arg10: memref<16x32xf32, #tpu.memory_space<vmem>>) attributes {dimension_semantics = [#tpu.dimension_semantics<parallel>, #tpu.dimension_semantics<parallel>, #tpu.dimension_semantics<arbitrary>], iteration_bounds = array<i64: 1, 1, 1>, scalar_prefetch = 0 : i64, scratch_operands = 1 : i64, tpu.core_type = #tpu.core_type<tc>, window_params = [{transform_indices = @transform_0, window_bounds = array<i64: 16, 64>}, {transform_indices = @transform_1, window_bounds = array<i64: 64, 32>}, {transform_indices = @transform_2, window_bounds = array<i64: 1, 32>}, {transform_indices = @transform_3, window_bounds = array<i64: 16, 32>}, {transform_indices = @transform_4, window_bounds = array<i64: 1, 32>}, {transform_indices = @transform_5, window_bounds = array<i64: 1, 32>}, {transform_indices = @transform_6, window_bounds = array<i64: 16, 32>}]} {
    %c0_i32 = arith.constant 0 : i32
    %0 = arith.cmpi eq, %arg2, %c0_i32 : i32
    %1 = arith.extui %0 : i1 to i32
    %c0_i32_0 = arith.constant 0 : i32
    %2 = arith.cmpi ne, %1, %c0_i32_0 : i32
    scf.if %2 {
      %cst_10 = arith.constant 0.000000e+00 : f32
      %12 = vector.broadcast %cst_10 : f32 to vector<16x32xf32>
      %c0_11 = arith.constant 0 : index
      %c0_12 = arith.constant 0 : index
      %13 = vector.load %arg10[%c0_11, %c0_12] : memref<16x32xf32, #tpu.memory_space<vmem>>, vector<16x32xf32>
      tpu.vector_store %arg10[%c0_11, %c0_12], %12 {strides = array<i32>} : memref<16x32xf32, #tpu.memory_space<vmem>>, vector<16x32xf32>,
    } else {
    }
    %c0 = arith.constant 0 : index
    %c0_1 = arith.constant 0 : index
    %3 = vector.load %arg10[%c0, %c0_1] : memref<16x32xf32, #tpu.memory_space<vmem>>, vector<16x32xf32>
    %c0_2 = arith.constant 0 : index
    %c0_3 = arith.constant 0 : index
    %4 = vector.load %arg3[%c0_2, %c0_3] : memref<16x64xbf16, #tpu.memory_space<vmem>>, vector<16x64xbf16>
    %c0_4 = arith.constant 0 : index
    %c0_5 = arith.constant 0 : index
    %5 = vector.load %arg4[%c0_4, %c0_5] : memref<64x32xbf16, #tpu.memory_space<vmem>>, vector<64x32xbf16>
    %cst = arith.constant dense<0.000000e+00> : vector<16x32xf32>
    %6 = tpu.matmul %4, %5, %cst {dimension_numbers = #tpu.dot_dimension_numbers<[1], [0], [0], [1], [0, 0, 1, 1], [], []>} : vector<16x64xbf16>, vector<64x32xbf16>, vector<16x32xf32> -> vector<16x32xf32>
    %7 = arith.addf %3, %6 : vector<16x32xf32>
    %c0_6 = arith.constant 0 : index
    %c0_7 = arith.constant 0 : index
    %8 = vector.load %arg10[%c0_6, %c0_7] : memref<16x32xf32, #tpu.memory_space<vmem>>, vector<16x32xf32>
    tpu.vector_store %arg10[%c0_6, %c0_7], %7 {strides = array<i32>} : memref<16x32xf32, #tpu.memory_space<vmem>>, vector<16x32xf32>,
    %c0_i32_8 = arith.constant 0 : i32
    %9 = arith.cmpi eq, %arg2, %c0_i32_8 : i32
    %10 = arith.extui %9 : i1 to i32
    %c0_i32_9 = arith.constant 0 : i32
    %11 = arith.cmpi ne, %10, %c0_i32_9 : i32
    scf.if %11 {
      %c0_10 = arith.constant 0 : index
      %c0_11 = arith.constant 0 : index
      %12 = vector.load %arg10[%c0_10, %c0_11] : memref<16x32xf32, #tpu.memory_space<vmem>>, vector<16x32xf32>
      %c0_12 = arith.constant 0 : index
      %c0_13 = arith.constant 0 : index
      %13 = vector.load %arg5[%c0_12, %c0_13] : memref<1x32xbf16, #tpu.memory_space<vmem>>, vector<1x32xbf16>
      %14 = arith.extf %13 : vector<1x32xbf16> to vector<1x32xf32>
      %15 = vector.broadcast %14 : vector<1x32xf32> to vector<16x32xf32>
      %16 = arith.addf %12, %15 : vector<16x32xf32>
      %c0_14 = arith.constant 0 : index
      %c0_15 = arith.constant 0 : index
      %17 = vector.load %arg6[%c0_14, %c0_15] : memref<16x32xbf16, #tpu.memory_space<vmem>>, vector<16x32xbf16>
      %18 = arith.extf %17 : vector<16x32xbf16> to vector<16x32xf32>
      %19 = arith.addf %16, %18 : vector<16x32xf32>
      %cst_16 = arith.constant dense<0.000000e+00> : vector<16xf32>
      %20 = vector.multi_reduction <add>, %19, %cst_16 [1] : vector<16x32xf32> to vector<16xf32>
      %21 = vector.shape_cast %20 : vector<16xf32> to vector<16x1xf32>
      %cst_17 = arith.constant 3.200000e+01 : f32
      %22 = vector.broadcast %cst_17 : f32 to vector<16x1xf32>
      %23 = arith.divf %21, %22 : vector<16x1xf32>
      %24 = vector.broadcast %23 : vector<16x1xf32> to vector<16x32xf32>
      %25 = arith.subf %19, %24 : vector<16x32xf32>
      %26 = vector.broadcast %23 : vector<16x1xf32> to vector<16x32xf32>
      %27 = arith.subf %19, %26 : vector<16x32xf32>
      %28 = arith.mulf %25, %27 : vector<16x32xf32>
      %cst_18 = arith.constant dense<0.000000e+00> : vector<16xf32>
      %29 = vector.multi_reduction <add>, %28, %cst_18 [1] : vector<16x32xf32> to vector<16xf32>
      %30 = vector.shape_cast %29 : vector<16xf32> to vector<16x1xf32>
      %cst_19 = arith.constant 3.200000e+01 : f32
      %31 = vector.broadcast %cst_19 : f32 to vector<16x1xf32>
      %32 = arith.divf %30, %31 : vector<16x1xf32>
      %33 = vector.broadcast %23 : vector<16x1xf32> to vector<16x32xf32>
      %34 = arith.subf %19, %33 : vector<16x32xf32>
      %cst_20 = arith.constant 9.99999997E-7 : f32
      %35 = vector.broadcast %cst_20 : f32 to vector<16x1xf32>
      %36 = arith.addf %32, %35 : vector<16x1xf32>
      %37 = math.rsqrt %36 : vector<16x1xf32>
      %38 = vector.broadcast %37 : vector<16x1xf32> to vector<16x32xf32>
      %39 = arith.mulf %34, %38 : vector<16x32xf32>
      %c0_21 = arith.constant 0 : index
      %c0_22 = arith.constant 0 : index
      %40 = vector.load %arg7[%c0_21, %c0_22] : memref<1x32xf32, #tpu.memory_space<vmem>>, vector<1x32xf32>
      %41 = vector.broadcast %40 : vector<1x32xf32> to vector<16x32xf32>
      %42 = arith.mulf %39, %41 : vector<16x32xf32>
      %c0_23 = arith.constant 0 : index
      %c0_24 = arith.constant 0 : index
      %43 = vector.load %arg8[%c0_23, %c0_24] : memref<1x32xf32, #tpu.memory_space<vmem>>, vector<1x32xf32>
      %44 = vector.broadcast %43 : vector<1x32xf32> to vector<16x32xf32>
      %45 = arith.addf %42, %44 : vector<16x32xf32>
      %46 = arith.truncf %45 : vector<16x32xf32> to vector<16x32xbf16>
      %c0_25 = arith.constant 0 : index
      %c0_26 = arith.constant 0 : index
      %47 = vector.load %arg9[%c0_25, %c0_26] : memref<16x32xbf16, #tpu.memory_space<vmem>>, vector<16x32xbf16>
      tpu.vector_store %arg9[%c0_25, %c0_26], %46 {strides = array<i32>} : memref<16x32xbf16, #tpu.memory_space<vmem>>, vector<16x32xbf16>,
    } else {
    }
    return
  }
  func.func @transform_0(%arg0: i32, %arg1: i32, %arg2: i32) -> (i32, i32) {
    %c0_i32 = arith.constant 0 : i32
    return %arg0, %arg2 : i32, i32
  }
  func.func @transform_1(%arg0: i32, %arg1: i32, %arg2: i32) -> (i32, i32) {
    %c0_i32 = arith.constant 0 : i32
    return %arg2, %arg1 : i32, i32
  }
  func.func @transform_2(%arg0: i32, %arg1: i32, %arg2: i32) -> (i32, i32) {
    %c0_i32 = arith.constant 0 : i32
    %c0_i32_0 = arith.constant 0 : i32
    return %c0_i32, %arg1 : i32, i32
  }
  func.func @transform_3(%arg0: i32, %arg1: i32, %arg2: i32) -> (i32, i32) {
    %c0_i32 = arith.constant 0 : i32
    return %arg0, %arg1 : i32, i32
  }
  func.func @transform_4(%arg0: i32, %arg1: i32, %arg2: i32) -> (i32, i32) {
    %c0_i32 = arith.constant 0 : i32
    %c0_i32_0 = arith.constant 0 : i32
    return %c0_i32, %arg1 : i32, i32
  }
  func.func @transform_5(%arg0: i32, %arg1: i32, %arg2: i32) -> (i32, i32) {
    %c0_i32 = arith.constant 0 : i32
    %c0_i32_0 = arith.constant 0 : i32
    return %c0_i32, %arg1 : i32, i32
  }
  func.func @transform_6(%arg0: i32, %arg1: i32, %arg2: i32) -> (i32, i32) {
    %c0_i32 = arith.constant 0 : i32
    return %arg0, %arg1 : i32, i32
  }
}

module attributes {stable_mosaic.version = 11 : i64} {
  func.func @_matmul_kernel(%arg0: i32, %arg1: i32, %arg2: i32, %arg3: memref<16x32xbf16, #tpu.memory_space<vmem>>, %arg4: memref<32x64xbf16, #tpu.memory_space<vmem>>, %arg5: memref<1x64xbf16, #tpu.memory_space<vmem>>, %arg6: memref<16x64xbf16, #tpu.memory_space<vmem>>, %arg7: memref<16x64xf32, #tpu.memory_space<vmem>>) attributes {dimension_semantics = [#tpu.dimension_semantics<parallel>, #tpu.dimension_semantics<parallel>, #tpu.dimension_semantics<arbitrary>], iteration_bounds = array<i64: 1, 1, 1>, scalar_prefetch = 0 : i64, scratch_operands = 1 : i64, tpu.core_type = #tpu.core_type<tc>, window_params = [{transform_indices = @transform_0, window_bounds = array<i64: 16, 32>}, {transform_indices = @transform_1, window_bounds = array<i64: 32, 64>}, {transform_indices = @transform_2, window_bounds = array<i64: 1, 64>}, {transform_indices = @transform_3, window_bounds = array<i64: 16, 64>}]} {
    %c0_i32 = arith.constant 0 : i32
    %0 = arith.cmpi eq, %arg2, %c0_i32 : i32
    %1 = arith.extui %0 : i1 to i32
    %c0_i32_0 = arith.constant 0 : i32
    %2 = arith.cmpi ne, %1, %c0_i32_0 : i32
    scf.if %2 {
      %cst_10 = arith.constant 0.000000e+00 : f32
      %12 = vector.broadcast %cst_10 : f32 to vector<16x64xf32>
      %c0_11 = arith.constant 0 : index
      %c0_12 = arith.constant 0 : index
      %13 = vector.load %arg7[%c0_11, %c0_12] : memref<16x64xf32, #tpu.memory_space<vmem>>, vector<16x64xf32>
      tpu.vector_store %arg7[%c0_11, %c0_12], %12 {strides = array<i32>} : memref<16x64xf32, #tpu.memory_space<vmem>>, vector<16x64xf32>,
    } else {
    }
    %c0 = arith.constant 0 : index
    %c0_1 = arith.constant 0 : index
    %3 = vector.load %arg7[%c0, %c0_1] : memref<16x64xf32, #tpu.memory_space<vmem>>, vector<16x64xf32>
    %c0_2 = arith.constant 0 : index
    %c0_3 = arith.constant 0 : index
    %4 = vector.load %arg3[%c0_2, %c0_3] : memref<16x32xbf16, #tpu.memory_space<vmem>>, vector<16x32xbf16>
    %c0_4 = arith.constant 0 : index
    %c0_5 = arith.constant 0 : index
    %5 = vector.load %arg4[%c0_4, %c0_5] : memref<32x64xbf16, #tpu.memory_space<vmem>>, vector<32x64xbf16>
    %cst = arith.constant dense<0.000000e+00> : vector<16x64xf32>
    %6 = tpu.matmul %4, %5, %cst {dimension_numbers = #tpu.dot_dimension_numbers<[1], [0], [0], [1], [0, 0, 1, 1], [], []>} : vector<16x32xbf16>, vector<32x64xbf16>, vector<16x64xf32> -> vector<16x64xf32>
    %7 = arith.addf %3, %6 : vector<16x64xf32>
    %c0_6 = arith.constant 0 : index
    %c0_7 = arith.constant 0 : index
    %8 = vector.load %arg7[%c0_6, %c0_7] : memref<16x64xf32, #tpu.memory_space<vmem>>, vector<16x64xf32>
    tpu.vector_store %arg7[%c0_6, %c0_7], %7 {strides = array<i32>} : memref<16x64xf32, #tpu.memory_space<vmem>>, vector<16x64xf32>,
    %c0_i32_8 = arith.constant 0 : i32
    %9 = arith.cmpi eq, %arg2, %c0_i32_8 : i32
    %10 = arith.extui %9 : i1 to i32
    %c0_i32_9 = arith.constant 0 : i32
    %11 = arith.cmpi ne, %10, %c0_i32_9 : i32
    scf.if %11 {
      %c0_10 = arith.constant 0 : index
      %c0_11 = arith.constant 0 : index
      %12 = vector.load %arg7[%c0_10, %c0_11] : memref<16x64xf32, #tpu.memory_space<vmem>>, vector<16x64xf32>
      %c0_12 = arith.constant 0 : index
      %c0_13 = arith.constant 0 : index
      %13 = vector.load %arg5[%c0_12, %c0_13] : memref<1x64xbf16, #tpu.memory_space<vmem>>, vector<1x64xbf16>
      %14 = arith.extf %13 : vector<1x64xbf16> to vector<1x64xf32>
      %15 = vector.broadcast %14 : vector<1x64xf32> to vector<16x64xf32>
      %16 = arith.addf %12, %15 : vector<16x64xf32>
      %17 = arith.truncf %16 : vector<16x64xf32> to vector<16x64xbf16>
      %c0_14 = arith.constant 0 : index
      %c0_15 = arith.constant 0 : index
      %18 = vector.load %arg6[%c0_14, %c0_15] : memref<16x64xbf16, #tpu.memory_space<vmem>>, vector<16x64xbf16>
      tpu.vector_store %arg6[%c0_14, %c0_15], %17 {strides = array<i32>} : memref<16x64xbf16, #tpu.memory_space<vmem>>, vector<16x64xbf16>,
    } else {
    }
    return
  }
  func.func @transform_0(%arg0: i32, %arg1: i32, %arg2: i32) -> (i32, i32) {
    %c0_i32 = arith.constant 0 : i32
    return %arg0, %arg2 : i32, i32
  }
  func.func @transform_1(%arg0: i32, %arg1: i32, %arg2: i32) -> (i32, i32) {
    %c0_i32 = arith.constant 0 : i32
    return %arg2, %arg1 : i32, i32
  }
  func.func @transform_2(%arg0: i32, %arg1: i32, %arg2: i32) -> (i32, i32) {
    %c0_i32 = arith.constant 0 : i32
    %c0_i32_0 = arith.constant 0 : i32
    return %c0_i32, %arg1 : i32, i32
  }
  func.func @transform_3(%arg0: i32, %arg1: i32, %arg2: i32) -> (i32, i32) {
    %c0_i32 = arith.constant 0 : i32
    return %arg0, %arg1 : i32, i32
  }
}

module attributes {stable_mosaic.version = 11 : i64} {
  func.func @_embed_kernel(%arg0: i32, %arg1: memref<16xi32, #tpu.memory_space<smem>>, %arg2: memref<1x1x32xbf16, #tpu.memory_space<vmem>>, %arg3: memref<1x1x32xbf16, #tpu.memory_space<vmem>>, %arg4: memref<1x32xf32, #tpu.memory_space<vmem>>, %arg5: memref<1x32xf32, #tpu.memory_space<vmem>>, %arg6: memref<1x1x32xbf16, #tpu.memory_space<vmem>>) attributes {dimension_semantics = [#tpu.dimension_semantics<arbitrary>], iteration_bounds = array<i64: 16>, scalar_prefetch = 1 : i64, scratch_operands = 0 : i64, tpu.core_type = #tpu.core_type<tc>, window_params = [{transform_indices = @transform_0, window_bounds = array<i64: 1, 1, 32>}, {transform_indices = @transform_1, window_bounds = array<i64: 1, 1, 32>}, {pipeline_mode = #tpu.pipeline_mode<synchronous>, transform_indices = @transform_2, window_bounds = array<i64: 1, 32>}, {pipeline_mode = #tpu.pipeline_mode<synchronous>, transform_indices = @transform_3, window_bounds = array<i64: 1, 32>}, {transform_indices = @transform_4, window_bounds = array<i64: 1, 1, 32>}]} {
    %c0 = arith.constant 0 : index
    %c0_0 = arith.constant 0 : index
    %c0_1 = arith.constant 0 : index
    %0 = vector.load %arg2[%c0, %c0_0, %c0_1] : memref<1x1x32xbf16, #tpu.memory_space<vmem>>, vector<1x1x32xbf16>
    %1 = vector.shape_cast %0 : vector<1x1x32xbf16> to vector<1x32xbf16>
    %2 = arith.extf %1 : vector<1x32xbf16> to vector<1x32xf32>
    %c0_2 = arith.constant 0 : index
    %c0_3 = arith.constant 0 : index
    %c0_4 = arith.constant 0 : index
    %3 = vector.load %arg3[%c0_2, %c0_3, %c0_4] : memref<1x1x32xbf16, #tpu.memory_space<vmem>>, vector<1x1x32xbf16>
    %4 = vector.shape_cast %3 : vector<1x1x32xbf16> to vector<1x32xbf16>
    %5 = arith.extf %4 : vector<1x32xbf16> to vector<1x32xf32>
    %6 = arith.addf %2, %5 : vector<1x32xf32>
    %cst = arith.constant dense<0.000000e+00> : vector<1xf32>
    %7 = vector.multi_reduction <add>, %6, %cst [1] : vector<1x32xf32> to vector<1xf32>
    %8 = vector.shape_cast %7 : vector<1xf32> to vector<1x1xf32>
    %cst_5 = arith.constant 3.200000e+01 : f32
    %9 = vector.broadcast %cst_5 : f32 to vector<1x1xf32>
    %10 = arith.divf %8, %9 : vector<1x1xf32>
    %11 = vector.broadcast %10 : vector<1x1xf32> to vector<1x32xf32>
    %12 = arith.subf %6, %11 : vector<1x32xf32>
    %13 = vector.broadcast %10 : vector<1x1xf32> to vector<1x32xf32>
    %14 = arith.subf %6, %13 : vector<1x32xf32>
    %15 = arith.mulf %12, %14 : vector<1x32xf32>
    %cst_6 = arith.constant dense<0.000000e+00> : vector<1xf32>
    %16 = vector.multi_reduction <add>, %15, %cst_6 [1] : vector<1x32xf32> to vector<1xf32>
    %17 = vector.shape_cast %16 : vector<1xf32> to vector<1x1xf32>
    %cst_7 = arith.constant 3.200000e+01 : f32
    %18 = vector.broadcast %cst_7 : f32 to vector<1x1xf32>
    %19 = arith.divf %17, %18 : vector<1x1xf32>
    %20 = vector.broadcast %10 : vector<1x1xf32> to vector<1x32xf32>
    %21 = arith.subf %6, %20 : vector<1x32xf32>
    %cst_8 = arith.constant 9.99999996E-13 : f32
    %22 = vector.broadcast %cst_8 : f32 to vector<1x1xf32>
    %23 = arith.addf %19, %22 : vector<1x1xf32>
    %24 = math.rsqrt %23 : vector<1x1xf32>
    %25 = vector.broadcast %24 : vector<1x1xf32> to vector<1x32xf32>
    %26 = arith.mulf %21, %25 : vector<1x32xf32>
    %c0_9 = arith.constant 0 : index
    %c0_10 = arith.constant 0 : index
    %27 = vector.load %arg4[%c0_9, %c0_10] : memref<1x32xf32, #tpu.memory_space<vmem>>, vector<1x32xf32>
    %28 = arith.mulf %26, %27 : vector<1x32xf32>
    %c0_11 = arith.constant 0 : index
    %c0_12 = arith.constant 0 : index
    %29 = vector.load %arg5[%c0_11, %c0_12] : memref<1x32xf32, #tpu.memory_space<vmem>>, vector<1x32xf32>
    %30 = arith.addf %28, %29 : vector<1x32xf32>
    %31 = arith.truncf %30 : vector<1x32xf32> to vector<1x32xbf16>
    %c0_13 = arith.constant 0 : index
    %c0_14 = arith.constant 0 : index
    %c0_15 = arith.constant 0 : index
    %32 = vector.load %arg6[%c0_13, %c0_14, %c0_15] : memref<1x1x32xbf16, #tpu.memory_space<vmem>>, vector<1x1x32xbf16>
    %33 = vector.shape_cast %32 : vector<1x1x32xbf16> to vector<1x32xbf16>
    %34 = vector.shape_cast %31 : vector<1x32xbf16> to vector<1x1x32xbf16>
    tpu.vector_store %arg6[%c0_13, %c0_14, %c0_15], %34 {strides = array<i32>} : memref<1x1x32xbf16, #tpu.memory_space<vmem>>, vector<1x1x32xbf16>,
    return
  }
  func.func @transform_0(%arg0: i32, %arg1: memref<16xi32, #tpu.memory_space<smem>>) -> (i32, i32, i32) {
    %0 = arith.index_cast %arg0 : i32 to index
    %1 = memref.load %arg1[%0] : memref<16xi32, #tpu.memory_space<smem>>
    %c0_i32 = arith.constant 0 : i32
    %c0_i32_0 = arith.constant 0 : i32
    %c0_i32_1 = arith.constant 0 : i32
    return %1, %c0_i32, %c0_i32_0 : i32, i32, i32
  }
  func.func @transform_1(%arg0: i32, %arg1: memref<16xi32, #tpu.memory_space<smem>>) -> (i32, i32, i32) {
    %c8_i32 = arith.constant 8 : i32
    %c0_i32 = arith.constant 0 : i32
    %0 = arith.cmpi eq, %c8_i32, %c0_i32 : i32
    %c1_i32 = arith.constant 1 : i32
    %1 = arith.select %0, %c1_i32, %c8_i32 : i32
    %2 = arith.remsi %arg0, %1 : i32
    %c0_i32_0 = arith.constant 0 : i32
    %3 = arith.cmpi ne, %2, %c0_i32_0 : i32
    %c0_i32_1 = arith.constant 0 : i32
    %4 = arith.cmpi slt, %2, %c0_i32_1 : i32
    %c0_i32_2 = arith.constant 0 : i32
    %5 = arith.cmpi slt, %1, %c0_i32_2 : i32
    %6 = arith.xori %4, %5 : i1
    %7 = arith.andi %6, %3 : i1
    %8 = arith.addi %2, %1 : i32
    %9 = arith.select %7, %8, %2 : i32
    %c0_i32_3 = arith.constant 0 : i32
    %c0_i32_4 = arith.constant 0 : i32
    %c0_i32_5 = arith.constant 0 : i32
    return %9, %c0_i32_3, %c0_i32_4 : i32, i32, i32
  }
  func.func @transform_2(%arg0: i32, %arg1: memref<16xi32, #tpu.memory_space<smem>>) -> (i32, i32) {
    %c0_i32 = arith.constant 0 : i32
    %c0_i32_0 = arith.constant 0 : i32
    %c0_i32_1 = arith.constant 0 : i32
    return %c0_i32, %c0_i32_0 : i32, i32
  }
  func.func @transform_3(%arg0: i32, %arg1: memref<16xi32, #tpu.memory_space<smem>>) -> (i32, i32) {
    %c0_i32 = arith.constant 0 : i32
    %c0_i32_0 = arith.constant 0 : i32
    %c0_i32_1 = arith.constant 0 : i32
    return %c0_i32, %c0_i32_0 : i32, i32
  }
  func.func @transform_4(%arg0: i32, %arg1: memref<16xi32, #tpu.memory_space<smem>>) -> (i32, i32, i32) {
    %c0_i32 = arith.constant 0 : i32
    %c0_i32_0 = arith.constant 0 : i32
    %c0_i32_1 = arith.constant 0 : i32
    return %arg0, %c0_i32, %c0_i32_0 : i32, i32, i32
  }
}

module attributes {stable_mosaic.version = 11 : i64} {
  func.func @_matmul_kernel(%arg0: i32, %arg1: i32, %arg2: i32, %arg3: memref<16x32xbf16, #tpu.memory_space<vmem>>, %arg4: memref<32x32xbf16, #tpu.memory_space<vmem>>, %arg5: memref<1x32xbf16, #tpu.memory_space<vmem>>, %arg6: memref<16x32xbf16, #tpu.memory_space<vmem>>, %arg7: memref<1x32xf32, #tpu.memory_space<vmem>>, %arg8: memref<1x32xf32, #tpu.memory_space<vmem>>, %arg9: memref<16x32xbf16, #tpu.memory_space<vmem>>, %arg10: memref<16x32xf32, #tpu.memory_space<vmem>>) attributes {dimension_semantics = [#tpu.dimension_semantics<parallel>, #tpu.dimension_semantics<parallel>, #tpu.dimension_semantics<arbitrary>], iteration_bounds = array<i64: 1, 1, 1>, scalar_prefetch = 0 : i64, scratch_operands = 1 : i64, tpu.core_type = #tpu.core_type<tc>, window_params = [{transform_indices = @transform_0, window_bounds = array<i64: 16, 32>}, {transform_indices = @transform_1, window_bounds = array<i64: 32, 32>}, {transform_indices = @transform_2, window_bounds = array<i64: 1, 32>}, {transform_indices = @transform_3, window_bounds = array<i64: 16, 32>}, {transform_indices = @transform_4, window_bounds = array<i64: 1, 32>}, {transform_indices = @transform_5, window_bounds = array<i64: 1, 32>}, {transform_indices = @transform_6, window_bounds = array<i64: 16, 32>}]} {
    %c0_i32 = arith.constant 0 : i32
    %0 = arith.cmpi eq, %arg2, %c0_i32 : i32
    %1 = arith.extui %0 : i1 to i32
    %c0_i32_0 = arith.constant 0 : i32
    %2 = arith.cmpi ne, %1, %c0_i32_0 : i32
    scf.if %2 {
      %cst_10 = arith.constant 0.000000e+00 : f32
      %12 = vector.broadcast %cst_10 : f32 to vector<16x32xf32>
      %c0_11 = arith.constant 0 : index
      %c0_12 = arith.constant 0 : index
      %13 = vector.load %arg10[%c0_11, %c0_12] : memref<16x32xf32, #tpu.memory_space<vmem>>, vector<16x32xf32>
      tpu.vector_store %arg10[%c0_11, %c0_12], %12 {strides = array<i32>} : memref<16x32xf32, #tpu.memory_space<vmem>>, vector<16x32xf32>,
    } else {
    }
    %c0 = arith.constant 0 : index
    %c0_1 = arith.constant 0 : index
    %3 = vector.load %arg10[%c0, %c0_1] : memref<16x32xf32, #tpu.memory_space<vmem>>, vector<16x32xf32>
    %c0_2 = arith.constant 0 : index
    %c0_3 = arith.constant 0 : index
    %4 = vector.load %arg3[%c0_2, %c0_3] : memref<16x32xbf16, #tpu.memory_space<vmem>>, vector<16x32xbf16>
    %c0_4 = arith.constant 0 : index
    %c0_5 = arith.constant 0 : index
    %5 = vector.load %arg4[%c0_4, %c0_5] : memref<32x32xbf16, #tpu.memory_space<vmem>>, vector<32x32xbf16>
    %cst = arith.constant dense<0.000000e+00> : vector<16x32xf32>
    %6 = tpu.matmul %4, %5, %cst {dimension_numbers = #tpu.dot_dimension_numbers<[1], [0], [0], [1], [0, 0, 1, 1], [], []>} : vector<16x32xbf16>, vector<32x32xbf16>, vector<16x32xf32> -> vector<16x32xf32>
    %7 = arith.addf %3, %6 : vector<16x32xf32>
    %c0_6 = arith.constant 0 : index
    %c0_7 = arith.constant 0 : index
    %8 = vector.load %arg10[%c0_6, %c0_7] : memref<16x32xf32, #tpu.memory_space<vmem>>, vector<16x32xf32>
    tpu.vector_store %arg10[%c0_6, %c0_7], %7 {strides = array<i32>} : memref<16x32xf32, #tpu.memory_space<vmem>>, vector<16x32xf32>,
    %c0_i32_8 = arith.constant 0 : i32
    %9 = arith.cmpi eq, %arg2, %c0_i32_8 : i32
    %10 = arith.extui %9 : i1 to i32
    %c0_i32_9 = arith.constant 0 : i32
    %11 = arith.cmpi ne, %10, %c0_i32_9 : i32
    scf.if %11 {
      %c0_10 = arith.constant 0 : index
      %c0_11 = arith.constant 0 : index
      %12 = vector.load %arg10[%c0_10, %c0_11] : memref<16x32xf32, #tpu.memory_space<vmem>>, vector<16x32xf32>
      %c0_12 = arith.constant 0 : index
      %c0_13 = arith.constant 0 : index
      %13 = vector.load %arg5[%c0_12, %c0_13] : memref<1x32xbf16, #tpu.memory_space<vmem>>, vector<1x32xbf16>
      %14 = arith.extf %13 : vector<1x32xbf16> to vector<1x32xf32>
      %15 = vector.broadcast %14 : vector<1x32xf32> to vector<16x32xf32>
      %16 = arith.addf %12, %15 : vector<16x32xf32>
      %c0_14 = arith.constant 0 : index
      %c0_15 = arith.constant 0 : index
      %17 = vector.load %arg6[%c0_14, %c0_15] : memref<16x32xbf16, #tpu.memory_space<vmem>>, vector<16x32xbf16>
      %18 = arith.extf %17 : vector<16x32xbf16> to vector<16x32xf32>
      %19 = arith.addf %16, %18 : vector<16x32xf32>
      %cst_16 = arith.constant dense<0.000000e+00> : vector<16xf32>
      %20 = vector.multi_reduction <add>, %19, %cst_16 [1] : vector<16x32xf32> to vector<16xf32>
      %21 = vector.shape_cast %20 : vector<16xf32> to vector<16x1xf32>
      %cst_17 = arith.constant 3.200000e+01 : f32
      %22 = vector.broadcast %cst_17 : f32 to vector<16x1xf32>
      %23 = arith.divf %21, %22 : vector<16x1xf32>
      %24 = vector.broadcast %23 : vector<16x1xf32> to vector<16x32xf32>
      %25 = arith.subf %19, %24 : vector<16x32xf32>
      %26 = vector.broadcast %23 : vector<16x1xf32> to vector<16x32xf32>
      %27 = arith.subf %19, %26 : vector<16x32xf32>
      %28 = arith.mulf %25, %27 : vector<16x32xf32>
      %cst_18 = arith.constant dense<0.000000e+00> : vector<16xf32>
      %29 = vector.multi_reduction <add>, %28, %cst_18 [1] : vector<16x32xf32> to vector<16xf32>
      %30 = vector.shape_cast %29 : vector<16xf32> to vector<16x1xf32>
      %cst_19 = arith.constant 3.200000e+01 : f32
      %31 = vector.broadcast %cst_19 : f32 to vector<16x1xf32>
      %32 = arith.divf %30, %31 : vector<16x1xf32>
      %33 = vector.broadcast %23 : vector<16x1xf32> to vector<16x32xf32>
      %34 = arith.subf %19, %33 : vector<16x32xf32>
      %cst_20 = arith.constant 9.99999996E-13 : f32
      %35 = vector.broadcast %cst_20 : f32 to vector<16x1xf32>
      %36 = arith.addf %32, %35 : vector<16x1xf32>
      %37 = math.rsqrt %36 : vector<16x1xf32>
      %38 = vector.broadcast %37 : vector<16x1xf32> to vector<16x32xf32>
      %39 = arith.mulf %34, %38 : vector<16x32xf32>
      %c0_21 = arith.constant 0 : index
      %c0_22 = arith.constant 0 : index
      %40 = vector.load %arg7[%c0_21, %c0_22] : memref<1x32xf32, #tpu.memory_space<vmem>>, vector<1x32xf32>
      %41 = vector.broadcast %40 : vector<1x32xf32> to vector<16x32xf32>
      %42 = arith.mulf %39, %41 : vector<16x32xf32>
      %c0_23 = arith.constant 0 : index
      %c0_24 = arith.constant 0 : index
      %43 = vector.load %arg8[%c0_23, %c0_24] : memref<1x32xf32, #tpu.memory_space<vmem>>, vector<1x32xf32>
      %44 = vector.broadcast %43 : vector<1x32xf32> to vector<16x32xf32>
      %45 = arith.addf %42, %44 : vector<16x32xf32>
      %46 = arith.truncf %45 : vector<16x32xf32> to vector<16x32xbf16>
      %c0_25 = arith.constant 0 : index
      %c0_26 = arith.constant 0 : index
      %47 = vector.load %arg9[%c0_25, %c0_26] : memref<16x32xbf16, #tpu.memory_space<vmem>>, vector<16x32xbf16>
      tpu.vector_store %arg9[%c0_25, %c0_26], %46 {strides = array<i32>} : memref<16x32xbf16, #tpu.memory_space<vmem>>, vector<16x32xbf16>,
    } else {
    }
    return
  }
  func.func @transform_0(%arg0: i32, %arg1: i32, %arg2: i32) -> (i32, i32) {
    %c0_i32 = arith.constant 0 : i32
    return %arg0, %arg2 : i32, i32
  }
  func.func @transform_1(%arg0: i32, %arg1: i32, %arg2: i32) -> (i32, i32) {
    %c0_i32 = arith.constant 0 : i32
    return %arg2, %arg1 : i32, i32
  }
  func.func @transform_2(%arg0: i32, %arg1: i32, %arg2: i32) -> (i32, i32) {
    %c0_i32 = arith.constant 0 : i32
    %c0_i32_0 = arith.constant 0 : i32
    return %c0_i32, %arg1 : i32, i32
  }
  func.func @transform_3(%arg0: i32, %arg1: i32, %arg2: i32) -> (i32, i32) {
    %c0_i32 = arith.constant 0 : i32
    return %arg0, %arg1 : i32, i32
  }
  func.func @transform_4(%arg0: i32, %arg1: i32, %arg2: i32) -> (i32, i32) {
    %c0_i32 = arith.constant 0 : i32
    %c0_i32_0 = arith.constant 0 : i32
    return %c0_i32, %arg1 : i32, i32
  }
  func.func @transform_5(%arg0: i32, %arg1: i32, %arg2: i32) -> (i32, i32) {
    %c0_i32 = arith.constant 0 : i32
    %c0_i32_0 = arith.constant 0 : i32
    return %c0_i32, %arg1 : i32, i32
  }
  func.func @transform_6(%arg0: i32, %arg1: i32, %arg2: i32) -> (i32, i32) {
    %c0_i32 = arith.constant 0 : i32
    return %arg0, %arg1 : i32, i32
  }
}

module attributes {stable_mosaic.version = 11 : i64} {
  func.func @_matmul_kernel(%arg0: i32, %arg1: i32, %arg2: i32, %arg3: memref<16x32xbf16, #tpu.memory_space<vmem>>, %arg4: memref<32x32xbf16, #tpu.memory_space<vmem>>, %arg5: memref<1x32xbf16, #tpu.memory_space<vmem>>, %arg6: memref<16x32xbf16, #tpu.memory_space<vmem>>, %arg7: memref<16x32xf32, #tpu.memory_space<vmem>>) attributes {dimension_semantics = [#tpu.dimension_semantics<parallel>, #tpu.dimension_semantics<parallel>, #tpu.dimension_semantics<arbitrary>], iteration_bounds = array<i64: 1, 1, 1>, scalar_prefetch = 0 : i64, scratch_operands = 1 : i64, tpu.core_type = #tpu.core_type<tc>, window_params = [{transform_indices = @transform_0, window_bounds = array<i64: 16, 32>}, {transform_indices = @transform_1, window_bounds = array<i64: 32, 32>}, {transform_indices = @transform_2, window_bounds = array<i64: 1, 32>}, {transform_indices = @transform_3, window_bounds = array<i64: 16, 32>}]} {
    %c0_i32 = arith.constant 0 : i32
    %0 = arith.cmpi eq, %arg2, %c0_i32 : i32
    %1 = arith.extui %0 : i1 to i32
    %c0_i32_0 = arith.constant 0 : i32
    %2 = arith.cmpi ne, %1, %c0_i32_0 : i32
    scf.if %2 {
      %cst_10 = arith.constant 0.000000e+00 : f32
      %12 = vector.broadcast %cst_10 : f32 to vector<16x32xf32>
      %c0_11 = arith.constant 0 : index
      %c0_12 = arith.constant 0 : index
      %13 = vector.load %arg7[%c0_11, %c0_12] : memref<16x32xf32, #tpu.memory_space<vmem>>, vector<16x32xf32>
      tpu.vector_store %arg7[%c0_11, %c0_12], %12 {strides = array<i32>} : memref<16x32xf32, #tpu.memory_space<vmem>>, vector<16x32xf32>,
    } else {
    }
    %c0 = arith.constant 0 : index
    %c0_1 = arith.constant 0 : index
    %3 = vector.load %arg7[%c0, %c0_1] : memref<16x32xf32, #tpu.memory_space<vmem>>, vector<16x32xf32>
    %c0_2 = arith.constant 0 : index
    %c0_3 = arith.constant 0 : index
    %4 = vector.load %arg3[%c0_2, %c0_3] : memref<16x32xbf16, #tpu.memory_space<vmem>>, vector<16x32xbf16>
    %c0_4 = arith.constant 0 : index
    %c0_5 = arith.constant 0 : index
    %5 = vector.load %arg4[%c0_4, %c0_5] : memref<32x32xbf16, #tpu.memory_space<vmem>>, vector<32x32xbf16>
    %cst = arith.constant dense<0.000000e+00> : vector<16x32xf32>
    %6 = tpu.matmul %4, %5, %cst {dimension_numbers = #tpu.dot_dimension_numbers<[1], [0], [0], [1], [0, 0, 1, 1], [], []>} : vector<16x32xbf16>, vector<32x32xbf16>, vector<16x32xf32> -> vector<16x32xf32>
    %7 = arith.addf %3, %6 : vector<16x32xf32>
    %c0_6 = arith.constant 0 : index
    %c0_7 = arith.constant 0 : index
    %8 = vector.load %arg7[%c0_6, %c0_7] : memref<16x32xf32, #tpu.memory_space<vmem>>, vector<16x32xf32>
    tpu.vector_store %arg7[%c0_6, %c0_7], %7 {strides = array<i32>} : memref<16x32xf32, #tpu.memory_space<vmem>>, vector<16x32xf32>,
    %c0_i32_8 = arith.constant 0 : i32
    %9 = arith.cmpi eq, %arg2, %c0_i32_8 : i32
    %10 = arith.extui %9 : i1 to i32
    %c0_i32_9 = arith.constant 0 : i32
    %11 = arith.cmpi ne, %10, %c0_i32_9 : i32
    scf.if %11 {
      %c0_10 = arith.constant 0 : index
      %c0_11 = arith.constant 0 : index
      %12 = vector.load %arg7[%c0_10, %c0_11] : memref<16x32xf32, #tpu.memory_space<vmem>>, vector<16x32xf32>
      %c0_12 = arith.constant 0 : index
      %c0_13 = arith.constant 0 : index
      %13 = vector.load %arg5[%c0_12, %c0_13] : memref<1x32xbf16, #tpu.memory_space<vmem>>, vector<1x32xbf16>
      %14 = arith.extf %13 : vector<1x32xbf16> to vector<1x32xf32>
      %15 = vector.broadcast %14 : vector<1x32xf32> to vector<16x32xf32>
      %16 = arith.addf %12, %15 : vector<16x32xf32>
      %17 = arith.truncf %16 : vector<16x32xf32> to vector<16x32xbf16>
      %c0_14 = arith.constant 0 : index
      %c0_15 = arith.constant 0 : index
      %18 = vector.load %arg6[%c0_14, %c0_15] : memref<16x32xbf16, #tpu.memory_space<vmem>>, vector<16x32xbf16>
      tpu.vector_store %arg6[%c0_14, %c0_15], %17 {strides = array<i32>} : memref<16x32xbf16, #tpu.memory_space<vmem>>, vector<16x32xbf16>,
    } else {
    }
    return
  }
  func.func @transform_0(%arg0: i32, %arg1: i32, %arg2: i32) -> (i32, i32) {
    %c0_i32 = arith.constant 0 : i32
    return %arg0, %arg2 : i32, i32
  }
  func.func @transform_1(%arg0: i32, %arg1: i32, %arg2: i32) -> (i32, i32) {
    %c0_i32 = arith.constant 0 : i32
    return %arg2, %arg1 : i32, i32
  }
  func.func @transform_2(%arg0: i32, %arg1: i32, %arg2: i32) -> (i32, i32) {
    %c0_i32 = arith.constant 0 : i32
    %c0_i32_0 = arith.constant 0 : i32
    return %c0_i32, %arg1 : i32, i32
  }
  func.func @transform_3(%arg0: i32, %arg1: i32, %arg2: i32) -> (i32, i32) {
    %c0_i32 = arith.constant 0 : i32
    return %arg0, %arg1 : i32, i32
  }
}

module attributes {stable_mosaic.version = 11 : i64} {
  func.func @_matmul_kernel(%arg0: i32, %arg1: i32, %arg2: i32, %arg3: memref<16x64xbf16, #tpu.memory_space<vmem>>, %arg4: memref<64x32xbf16, #tpu.memory_space<vmem>>, %arg5: memref<1x32xbf16, #tpu.memory_space<vmem>>, %arg6: memref<16x32xbf16, #tpu.memory_space<vmem>>, %arg7: memref<1x32xf32, #tpu.memory_space<vmem>>, %arg8: memref<1x32xf32, #tpu.memory_space<vmem>>, %arg9: memref<16x32xbf16, #tpu.memory_space<vmem>>, %arg10: memref<16x32xf32, #tpu.memory_space<vmem>>) attributes {dimension_semantics = [#tpu.dimension_semantics<parallel>, #tpu.dimension_semantics<parallel>, #tpu.dimension_semantics<arbitrary>], iteration_bounds = array<i64: 1, 1, 1>, scalar_prefetch = 0 : i64, scratch_operands = 1 : i64, tpu.core_type = #tpu.core_type<tc>, window_params = [{transform_indices = @transform_0, window_bounds = array<i64: 16, 64>}, {transform_indices = @transform_1, window_bounds = array<i64: 64, 32>}, {transform_indices = @transform_2, window_bounds = array<i64: 1, 32>}, {transform_indices = @transform_3, window_bounds = array<i64: 16, 32>}, {transform_indices = @transform_4, window_bounds = array<i64: 1, 32>}, {transform_indices = @transform_5, window_bounds = array<i64: 1, 32>}, {transform_indices = @transform_6, window_bounds = array<i64: 16, 32>}]} {
    %c0_i32 = arith.constant 0 : i32
    %0 = arith.cmpi eq, %arg2, %c0_i32 : i32
    %1 = arith.extui %0 : i1 to i32
    %c0_i32_0 = arith.constant 0 : i32
    %2 = arith.cmpi ne, %1, %c0_i32_0 : i32
    scf.if %2 {
      %cst_10 = arith.constant 0.000000e+00 : f32
      %12 = vector.broadcast %cst_10 : f32 to vector<16x32xf32>
      %c0_11 = arith.constant 0 : index
      %c0_12 = arith.constant 0 : index
      %13 = vector.load %arg10[%c0_11, %c0_12] : memref<16x32xf32, #tpu.memory_space<vmem>>, vector<16x32xf32>
      tpu.vector_store %arg10[%c0_11, %c0_12], %12 {strides = array<i32>} : memref<16x32xf32, #tpu.memory_space<vmem>>, vector<16x32xf32>,
    } else {
    }
    %c0 = arith.constant 0 : index
    %c0_1 = arith.constant 0 : index
    %3 = vector.load %arg10[%c0, %c0_1] : memref<16x32xf32, #tpu.memory_space<vmem>>, vector<16x32xf32>
    %c0_2 = arith.constant 0 : index
    %c0_3 = arith.constant 0 : index
    %4 = vector.load %arg3[%c0_2, %c0_3] : memref<16x64xbf16, #tpu.memory_space<vmem>>, vector<16x64xbf16>
    %c0_4 = arith.constant 0 : index
    %c0_5 = arith.constant 0 : index
    %5 = vector.load %arg4[%c0_4, %c0_5] : memref<64x32xbf16, #tpu.memory_space<vmem>>, vector<64x32xbf16>
    %cst = arith.constant dense<0.000000e+00> : vector<16x32xf32>
    %6 = tpu.matmul %4, %5, %cst {dimension_numbers = #tpu.dot_dimension_numbers<[1], [0], [0], [1], [0, 0, 1, 1], [], []>} : vector<16x64xbf16>, vector<64x32xbf16>, vector<16x32xf32> -> vector<16x32xf32>
    %7 = arith.addf %3, %6 : vector<16x32xf32>
    %c0_6 = arith.constant 0 : index
    %c0_7 = arith.constant 0 : index
    %8 = vector.load %arg10[%c0_6, %c0_7] : memref<16x32xf32, #tpu.memory_space<vmem>>, vector<16x32xf32>
    tpu.vector_store %arg10[%c0_6, %c0_7], %7 {strides = array<i32>} : memref<16x32xf32, #tpu.memory_space<vmem>>, vector<16x32xf32>,
    %c0_i32_8 = arith.constant 0 : i32
    %9 = arith.cmpi eq, %arg2, %c0_i32_8 : i32
    %10 = arith.extui %9 : i1 to i32
    %c0_i32_9 = arith.constant 0 : i32
    %11 = arith.cmpi ne, %10, %c0_i32_9 : i32
    scf.if %11 {
      %c0_10 = arith.constant 0 : index
      %c0_11 = arith.constant 0 : index
      %12 = vector.load %arg10[%c0_10, %c0_11] : memref<16x32xf32, #tpu.memory_space<vmem>>, vector<16x32xf32>
      %c0_12 = arith.constant 0 : index
      %c0_13 = arith.constant 0 : index
      %13 = vector.load %arg5[%c0_12, %c0_13] : memref<1x32xbf16, #tpu.memory_space<vmem>>, vector<1x32xbf16>
      %14 = arith.extf %13 : vector<1x32xbf16> to vector<1x32xf32>
      %15 = vector.broadcast %14 : vector<1x32xf32> to vector<16x32xf32>
      %16 = arith.addf %12, %15 : vector<16x32xf32>
      %c0_14 = arith.constant 0 : index
      %c0_15 = arith.constant 0 : index
      %17 = vector.load %arg6[%c0_14, %c0_15] : memref<16x32xbf16, #tpu.memory_space<vmem>>, vector<16x32xbf16>
      %18 = arith.extf %17 : vector<16x32xbf16> to vector<16x32xf32>
      %19 = arith.addf %16, %18 : vector<16x32xf32>
      %cst_16 = arith.constant dense<0.000000e+00> : vector<16xf32>
      %20 = vector.multi_reduction <add>, %19, %cst_16 [1] : vector<16x32xf32> to vector<16xf32>
      %21 = vector.shape_cast %20 : vector<16xf32> to vector<16x1xf32>
      %cst_17 = arith.constant 3.200000e+01 : f32
      %22 = vector.broadcast %cst_17 : f32 to vector<16x1xf32>
      %23 = arith.divf %21, %22 : vector<16x1xf32>
      %24 = vector.broadcast %23 : vector<16x1xf32> to vector<16x32xf32>
      %25 = arith.subf %19, %24 : vector<16x32xf32>
      %26 = vector.broadcast %23 : vector<16x1xf32> to vector<16x32xf32>
      %27 = arith.subf %19, %26 : vector<16x32xf32>
      %28 = arith.mulf %25, %27 : vector<16x32xf32>
      %cst_18 = arith.constant dense<0.000000e+00> : vector<16xf32>
      %29 = vector.multi_reduction <add>, %28, %cst_18 [1] : vector<16x32xf32> to vector<16xf32>
      %30 = vector.shape_cast %29 : vector<16xf32> to vector<16x1xf32>
      %cst_19 = arith.constant 3.200000e+01 : f32
      %31 = vector.broadcast %cst_19 : f32 to vector<16x1xf32>
      %32 = arith.divf %30, %31 : vector<16x1xf32>
      %33 = vector.broadcast %23 : vector<16x1xf32> to vector<16x32xf32>
      %34 = arith.subf %19, %33 : vector<16x32xf32>
      %cst_20 = arith.constant 9.99999996E-13 : f32
      %35 = vector.broadcast %cst_20 : f32 to vector<16x1xf32>
      %36 = arith.addf %32, %35 : vector<16x1xf32>
      %37 = math.rsqrt %36 : vector<16x1xf32>
      %38 = vector.broadcast %37 : vector<16x1xf32> to vector<16x32xf32>
      %39 = arith.mulf %34, %38 : vector<16x32xf32>
      %c0_21 = arith.constant 0 : index
      %c0_22 = arith.constant 0 : index
      %40 = vector.load %arg7[%c0_21, %c0_22] : memref<1x32xf32, #tpu.memory_space<vmem>>, vector<1x32xf32>
      %41 = vector.broadcast %40 : vector<1x32xf32> to vector<16x32xf32>
      %42 = arith.mulf %39, %41 : vector<16x32xf32>
      %c0_23 = arith.constant 0 : index
      %c0_24 = arith.constant 0 : index
      %43 = vector.load %arg8[%c0_23, %c0_24] : memref<1x32xf32, #tpu.memory_space<vmem>>, vector<1x32xf32>
      %44 = vector.broadcast %43 : vector<1x32xf32> to vector<16x32xf32>
      %45 = arith.addf %42, %44 : vector<16x32xf32>
      %46 = arith.truncf %45 : vector<16x32xf32> to vector<16x32xbf16>
      %c0_25 = arith.constant 0 : index
      %c0_26 = arith.constant 0 : index
      %47 = vector.load %arg9[%c0_25, %c0_26] : memref<16x32xbf16, #tpu.memory_space<vmem>>, vector<16x32xbf16>
      tpu.vector_store %arg9[%c0_25, %c0_26], %46 {strides = array<i32>} : memref<16x32xbf16, #tpu.memory_space<vmem>>, vector<16x32xbf16>,
    } else {
    }
    return
  }
  func.func @transform_0(%arg0: i32, %arg1: i32, %arg2: i32) -> (i32, i32) {
    %c0_i32 = arith.constant 0 : i32
    return %arg0, %arg2 : i32, i32
  }
  func.func @transform_1(%arg0: i32, %arg1: i32, %arg2: i32) -> (i32, i32) {
    %c0_i32 = arith.constant 0 : i32
    return %arg2, %arg1 : i32, i32
  }
  func.func @transform_2(%arg0: i32, %arg1: i32, %arg2: i32) -> (i32, i32) {
    %c0_i32 = arith.constant 0 : i32
    %c0_i32_0 = arith.constant 0 : i32
    return %c0_i32, %arg1 : i32, i32
  }
  func.func @transform_3(%arg0: i32, %arg1: i32, %arg2: i32) -> (i32, i32) {
    %c0_i32 = arith.constant 0 : i32
    return %arg0, %arg1 : i32, i32
  }
  func.func @transform_4(%arg0: i32, %arg1: i32, %arg2: i32) -> (i32, i32) {
    %c0_i32 = arith.constant 0 : i32
    %c0_i32_0 = arith.constant 0 : i32
    return %c0_i32, %arg1 : i32, i32
  }
  func.func @transform_5(%arg0: i32, %arg1: i32, %arg2: i32) -> (i32, i32) {
    %c0_i32 = arith.constant 0 : i32
    %c0_i32_0 = arith.constant 0 : i32
    return %c0_i32, %arg1 : i32, i32
  }
  func.func @transform_6(%arg0: i32, %arg1: i32, %arg2: i32) -> (i32, i32) {
    %c0_i32 = arith.constant 0 : i32
    return %arg0, %arg1 : i32, i32
  }
}

</mosaic_0001>

<llo_original>
// kernel: blip_forward.35
$region0: #{blip_forward.35}
  #allocation0 [shape = 'u32[]', space=smem, size = 0x4, offset = 0x4, fixed_abs, tag = 'smem constant byte address 0x4 - core index']
  #allocation1 [shape = 'u32[144,128]{1,0:T(1,128)}', space=vmem, size = 0x12000, scoped, tag = 'internal scratch']
  %s0 = inlined_call_operand.vmem [shape: bf16[16,32], index: 0, kind: input, shape index: {}]
  %s1 = inlined_call_operand.vmem [shape: f32[1,32], index: 1, kind: input, shape index: {}]
  %s2 = inlined_call_operand.vmem [shape: f32[1,32], index: 2, kind: input, shape index: {}]
  %s3 = inlined_call_operand.vmem [shape: bf16[16,32], index: 3, kind: output, shape index: {}]
  %s4 = sld [smem:[#allocation0]]
  $region22: #{blip_forward.35} parent=0
    _
  %s6 = ssub.s32 1, %s4
  %s7 = scalar_select 0, %s6, %s4
  // Predicated region
  $region2: #{blip_forward.35} parent=0 // pred_check
    _
  $region3: #{blip_forward.35} parent=0 // pred_check_branch
    %9 = sbr.rel (0) target = $region5
  $region4: #{blip_forward.35} parent=0 // pred_region
    _
  $region5: #{blip_forward.35} parent=0 // pred_fallthru
    _
  // Predicated region
  $region6: #{blip_forward.35} parent=0 // pred_check
    _
  $region7: #{blip_forward.35} parent=0 // pred_check_branch
    %11 = sbr.rel (0) target = $region9
  $region8: #{blip_forward.35} parent=0 // pred_region
    _
  $region9: #{blip_forward.35} parent=0 // pred_fallthru
    _
  // Predicated region
  $region10: #{blip_forward.35} parent=0 // pred_check
    _
  $region11: #{blip_forward.35} parent=0 // pred_check_branch
    %13 = sbr.rel (0) target = $region13
  $region12: #{blip_forward.35} parent=0 // pred_region
    _
  $region13: #{blip_forward.35} parent=0 // pred_fallthru
    _
  %v14 = vld [vmem:[%s0] sm:$0xf]
  %v15 = vld [vmem:[%s0 + $0x4] sm:$0xf]
  %v16 = vunpack.c.l.bf16 %v14
  %v17 = vunpack.c.l.bf16 %v15
  %vm18 = vcmask 261120
  %v19 = vsel %vm18, %v16, 0.0
  %20 = vadd.xlane.f32.xlu0 %v19
  %v21 = vpop.xlane.xlu0 %20
  %v22 = vsel %vm18, %v17, 0.0
  %23 = vadd.xlane.f32.xlu0 %v22
  %v24 = vpop.xlane.xlu0 %23
  %v25 = vrcp.pop 32.0
  %v26 = vmul.f32 %v21, %v25
  %v27 = vmul.f32 %v24, %v25
  %v28 = vsub.f32 %v16, %v26
  %v29 = vsub.f32 %v17, %v27
  %v30 = vmul.f32 %v28, %v28
  %v31 = vmul.f32 %v29, %v29
  %v32 = vsel %vm18, %v30, 0.0
  %33 = vadd.xlane.f32.xlu0 %v32
  %v34 = vpop.xlane.xlu0 %33
  %v35 = vsel %vm18, %v31, 0.0
  %36 = vadd.xlane.f32.xlu0 %v35
  %v37 = vpop.xlane.xlu0 %36
  %v38 = vmul.f32 %v34, %v25
  %v39 = vmul.f32 %v37, %v25
  %v40 = vadd.f32 %v38, 1e-06
  %v41 = vadd.f32 %v39, 1e-06
  %v42 = vrsqrt.pop %v40
  %v43 = vrsqrt.pop %v41
  %v44 = vmul.f32 %v28, %v42
  %v45 = vmul.f32 %v29, %v43
  %v46 = vld [vmem:[%s1] sm:$0x1]
  %v48 = vlaneseq
  %v49 = vshrl.u32 %v48, 7
  %v50 = vsub.s32 0, %v49
  %v51 = vrot.slane %v46, %v50
  %v53 = vmul.f32 %v44, %v51
  %v54 = vmul.f32 %v45, %v51
  %v55 = vld [vmem:[%s2] sm:$0x1]
  %v57 = vlaneseq
  %v58 = vshrl.u32 %v57, 7
  %v59 = vsub.s32 0, %v58
  %v60 = vrot.slane %v55, %v59
  %v62 = vadd.f32 %v53, %v60
  %v63 = vadd.f32 %v54, %v60
  %v64 = vpack.c.bf16 %v63, %v62
  %v66 = vunpack.c.l.b16 %v64
  %v67 = vunpack.c.h.b16 %v64
  %v68 = vpack.c.b16 %v66, %v66
  %v69 = vpack.c.b16 %v67, %v67
  %vm72 = vcmask 257024
  %73 = vst.msk [vmem:[%s3] sm:$0xf] %vm72, %v68
  %74 = vst.msk [vmem:[%s3 + $0x4] sm:$0xf] %vm72, %v69
  // Predicated region
  $region14: #{blip_forward.35} parent=0 // pred_check
    _
  $region15: #{blip_forward.35} parent=0 // pred_check_branch
    %76 = sbr.rel (0) target = $region17
  $region16: #{blip_forward.35} parent=0 // pred_region
    _
  $region17: #{blip_forward.35} parent=0 // pred_fallthru
    _
  // Predicated region
  $region18: #{blip_forward.35} parent=0 // pred_check
    _
  $region19: #{blip_forward.35} parent=0 // pred_check_branch
    %78 = sbr.rel (0) target = $region21
  $region20: #{blip_forward.35} parent=0 // pred_region
    _
  $region21: #{blip_forward.35} parent=0 // pred_fallthru
    _

// kernel: blip_forward.34
$region0: #{blip_forward.34}
  #allocation0 [shape = 'u32[]', space=smem, size = 0x4, offset = 0x4, fixed_abs, tag = 'smem constant byte address 0x4 - core index']
  #allocation1 [shape = 'u32[144,128]{1,0:T(1,128)}', space=vmem, size = 0x12000, scoped, tag = 'internal scratch']
  #allocation2 [shape = 'f32[8,32]{1,0:T(8,128)}', space=vmem, size = 0x1000, scoped, tag = 'scratch operand']
  %s0 = inlined_call_operand.vmem [shape: bf16[8,192], index: 0, kind: input, shape index: {}]
  %s1 = inlined_call_operand.vmem [shape: bf16[192,32], index: 1, kind: input, shape index: {}]
  %s2 = inlined_call_operand.vmem [shape: bf16[1,32], index: 2, kind: input, shape index: {}]
  %s3 = inlined_call_operand.vmem [shape: bf16[8,32], index: 3, kind: output, shape index: {}]
  %s4 = sld [smem:[#allocation0]]
  $region30: #{blip_forward.34} parent=0
    _
  %s6 = ssub.s32 1, %s4
  %s7 = scalar_select 0, %s6, %s4
  // Predicated region
  $region2: #{blip_forward.34} parent=0 // pred_check
    _
  $region3: #{blip_forward.34} parent=0 // pred_check_branch
    %9 = sbr.rel (0) target = $region5
  $region4: #{blip_forward.34} parent=0 // pred_region
    _
  $region5: #{blip_forward.34} parent=0 // pred_fallthru
    _
  // Predicated region
  $region6: #{blip_forward.34} parent=0 // pred_check
    _
  $region7: #{blip_forward.34} parent=0 // pred_check_branch
    %11 = sbr.rel (0) target = $region9
  $region8: #{blip_forward.34} parent=0 // pred_region
    _
  $region9: #{blip_forward.34} parent=0 // pred_fallthru
    _
  // Predicated region
  $region10: #{blip_forward.34} parent=0 // pred_check
    _
  $region11: #{blip_forward.34} parent=0 // pred_check_branch
    %13 = sbr.rel (0) target = $region13
  $region12: #{blip_forward.34} parent=0 // pred_region
    _
  $region13: #{blip_forward.34} parent=0 // pred_fallthru
    _
  %p15 = scmp.eq.s32.totalorder 0, 0
  // Predicated region
  $region14: #{blip_forward.34} parent=0 // pred_check
    %p16 = pneg %p15
  $region15: #{blip_forward.34} parent=0 // pred_check_branch
    %18 = sbr.rel (%p16) target = $region17
  $region16: #{blip_forward.34} parent=0 // pred_region
    %vm19 = vcmask 261120
    %20 = vst.msk [vmem:[#allocation2] sm:$0xff] %vm19, 0.0
  $region17: #{blip_forward.34} parent=0 // pred_fallthru
    _
  %v21 = vld [vmem:[#allocation2] sm:$0xff]
  %v22 = vld [vmem:[%s0] sm:$0xff]
  %v23 = vld [vmem:[%s1] sm:$0xf]
  %v24 = vld [vmem:[%s1 + $0x4] sm:$0xf]
  %v25 = vld [vmem:[%s1 + $0x8] sm:$0xf]
  %v26 = vld [vmem:[%s1 + $0xc] sm:$0xf]
  %v27 = vld [vmem:[%s1 + $0x10] sm:$0xf]
  %v28 = vld [vmem:[%s1 + $0x14] sm:$0xf]
  %v29 = vld [vmem:[%s1 + $0x18] sm:$0xf]
  %v30 = vld [vmem:[%s1 + $0x1c] sm:$0xf]
  %v31 = vld [vmem:[%s1 + $0x20] sm:$0xf]
  %v32 = vld [vmem:[%s1 + $0x24] sm:$0xf]
  %v33 = vld [vmem:[%s1 + $0x28] sm:$0xf]
  %v34 = vld [vmem:[%s1 + $0x2c] sm:$0xf]
  %v35 = vld [vmem:[%s1 + $0x30] sm:$0xf]
  %v36 = vld [vmem:[%s1 + $0x34] sm:$0xf]
  %v37 = vld [vmem:[%s1 + $0x38] sm:$0xf]
  %v38 = vld [vmem:[%s1 + $0x3c] sm:$0xf]
  %v39 = vld [vmem:[%s1 + $0x40] sm:$0xf]
  %v40 = vld [vmem:[%s1 + $0x44] sm:$0xf]
  %v41 = vld [vmem:[%s1 + $0x48] sm:$0xf]
  %v42 = vld [vmem:[%s1 + $0x4c] sm:$0xf]
  %v43 = vld [vmem:[%s1 + $0x50] sm:$0xf]
  %v44 = vld [vmem:[%s1 + $0x54] sm:$0xf]
  %v45 = vld [vmem:[%s1 + $0x58] sm:$0xf]
  %v46 = vld [vmem:[%s1 + $0x5c] sm:$0xf]
  %v48 = vunpack.c.l.b16 %v22
  %v49 = vunpack.c.h.b16 %v22
  %v50 = vpack.c.b16 %v48, %v48
  %v51 = vpack.c.b16 %v49, %v49
  %v77 = vunpack.c.l.b16 %v23
  %v78 = vunpack.c.l.b16 %v24
  %v79 = vunpack.c.l.b16 %v25
  %v80 = vunpack.c.l.b16 %v26
  %v81 = vunpack.c.l.b16 %v27
  %v82 = vunpack.c.l.b16 %v28
  %v83 = vunpack.c.l.b16 %v29
  %v84 = vunpack.c.l.b16 %v30
  %v85 = vunpack.c.l.b16 %v31
  %v86 = vunpack.c.l.b16 %v32
  %v87 = vunpack.c.l.b16 %v33
  %v88 = vunpack.c.l.b16 %v34
  %v89 = vunpack.c.l.b16 %v35
  %v90 = vunpack.c.l.b16 %v36
  %v91 = vunpack.c.l.b16 %v37
  %v92 = vunpack.c.l.b16 %v38
  %v93 = vunpack.c.l.b16 %v39
  %v94 = vunpack.c.l.b16 %v40
  %v95 = vunpack.c.l.b16 %v41
  %v96 = vunpack.c.l.b16 %v42
  %v97 = vunpack.c.l.b16 %v43
  %v98 = vunpack.c.l.b16 %v44
  %v99 = vunpack.c.l.b16 %v45
  %v100 = vunpack.c.l.b16 %v46
  %v101 = vpack.c.b16 %v78, %v77
  %v102 = vpack.c.b16 %v80, %v79
  %v103 = vpack.c.b16 %v82, %v81
  %v104 = vpack.c.b16 %v84, %v83
  %v105 = vpack.c.b16 %v86, %v85
  %v106 = vpack.c.b16 %v88, %v87
  %v107 = vpack.c.b16 %v90, %v89
  %v108 = vpack.c.b16 %v92, %v91
  %v109 = vpack.c.b16 %v94, %v93
  %v110 = vpack.c.b16 %v96, %v95
  %v111 = vpack.c.b16 %v98, %v97
  %v112 = vpack.c.b16 %v100, %v99
  %vm125 = vcmask 523264
  %v127 = vsel %vm125, %v51, 0
  %129 = vmatprep.subr.bf16.mxu0 0
  %130 = vmatpush1.bf16.msra.mxu0 %v101
  %131 = vmatprep.subr.bf16.mxu0 0
  %132 = vmatpush1.bf16.msra.mxu0 %v102
  %133 = vmatprep.subr.bf16.mxu0 0
  %134 = vmatpush1.bf16.msra.mxu0 %v103
  %135 = vmatprep.subr.bf16.mxu0 0
  %136 = vmatpush1.bf16.msra.mxu0 %v104
  %137 = vmatprep.subr.bf16.mxu0 0
  %138 = vmatpush1.bf16.msra.mxu0 %v105
  %139 = vmatprep.subr.bf16.mxu0 0
  %140 = vmatpush1.bf16.msra.mxu0 %v106
  %141 = vmatprep.subr.bf16.mxu0 0
  %142 = vmatpush1.bf16.msra.mxu0 %v107
  %143 = vmatprep.subr.bf16.mxu0 0
  %144 = vmatpush1.bf16.msra.mxu0 %v108
  %145 = vmatprep.subr.bf16.mxu0 0
  %146 = vmatpush1.bf16.msra.mxu0 %v109
  %147 = vmatprep.subr.bf16.mxu0 0
  %148 = vmatpush1.bf16.msra.mxu0 %v110
  %149 = vmatprep.subr.bf16.mxu0 0
  %150 = vmatpush1.bf16.msra.mxu0 %v111
  %151 = vmatprep.subr.bf16.mxu0 0
  %152 = vmatpush1.bf16.msra.mxu0 %v112
  %153 = vmatprep.subr.bf16.mxu0 0
  %154 = vmatpush1.bf16.msra.mxu0 0
  %155 = vmatprep.subr.bf16.mxu0 0
  %156 = vmatpush1.bf16.msra.mxu0 0
  %157 = vmatprep.subr.bf16.mxu0 0
  %158 = vmatpush1.bf16.msra.mxu0 0
  %159 = vmatprep.subr.bf16.mxu0 0
  %160 = vmatpush1.bf16.msra.mxu0 0
  %161 = vmatprep.mubr.bf16.mxu0 %v127
  %162 = vmatmul.mubr.bf16.gmra.mrb[0].mxu0 %v50
  %v163 = vpop.f32.mrb[0].mxu0
  %v164 = vadd.f32 0.0, %v163
  %v165 = vpop.f32.mrb[0].mxu0
  %v166 = vpop.f32.mrb[0].mxu0
  %v167 = vpop.f32.mrb[0].mxu0
  %168 = vdwg.mxu0
  %v169 = vadd.f32 %v21, %v164
  %vm170 = vcmask 261120
  %171 = vst.msk [vmem:[#allocation2] sm:$0xff] %vm170, %v169
  // Predicated region
  $region18: #{blip_forward.34} parent=0 // pred_check
    %p172 = pneg %p15
  $region19: #{blip_forward.34} parent=0 // pred_check_branch
    %174 = sbr.rel (%p172) target = $region21
  $region20: #{blip_forward.34} parent=0 // pred_region
    %v175 = vld [vmem:[#allocation2] sm:$0xff]
    %v176 = vld [vmem:[%s2] sm:$0x1]
    %v177 = vunpack.c.l.bf16 %v176
    %v178 = vlaneseq
    %v179 = vshrl.u32 %v178, 7
    %v180 = vsub.s32 0, %v179
    %v181 = vrot.slane %v177, %v180
    %v182 = vadd.f32 %v175, %v181
    %v183 = vpack.c.bf16 %v182, %v182
    %vm184 = vcmask 257024
    %185 = vst.msk [vmem:[%s3] sm:$0xf] %vm184, %v183
  $region21: #{blip_forward.34} parent=0 // pred_fallthru
    _
  // Predicated region
  $region22: #{blip_forward.34} parent=0 // pred_check
    _
  $region23: #{blip_forward.34} parent=0 // pred_check_branch
    %187 = sbr.rel (0) target = $region25
  $region24: #{blip_forward.34} parent=0 // pred_region
    _
  $region25: #{blip_forward.34} parent=0 // pred_fallthru
    _
  // Predicated region
  $region26: #{blip_forward.34} parent=0 // pred_check
    _
  $region27: #{blip_forward.34} parent=0 // pred_check_branch
    %189 = sbr.rel (0) target = $region29
  $region28: #{blip_forward.34} parent=0 // pred_region
    _
  $region29: #{blip_forward.34} parent=0 // pred_fallthru
    _

// kernel: blip_forward.36
$region0: #{blip_forward.36}
  #allocation0 [shape = 'u32[]', space=smem, size = 0x4, offset = 0x4, fixed_abs, tag = 'smem constant byte address 0x4 - core index']
  #allocation1 [shape = 'u32[144,128]{1,0:T(1,128)}', space=vmem, size = 0x12000, scoped, tag = 'internal scratch']
  #allocation2 [shape = 'f32[16,96]{1,0:T(8,128)}', space=vmem, size = 0x2000, scoped, tag = 'scratch operand']
  %s0 = inlined_call_operand.vmem [shape: bf16[16,32], index: 0, kind: input, shape index: {}]
  %s1 = inlined_call_operand.vmem [shape: bf16[32,96], index: 1, kind: input, shape index: {}]
  %s2 = inlined_call_operand.vmem [shape: bf16[1,96], index: 2, kind: input, shape index: {}]
  %s3 = inlined_call_operand.vmem [shape: bf16[16,96], index: 3, kind: output, shape index: {}]
  %s4 = sld [smem:[#allocation0]]
  $region30: #{blip_forward.36} parent=0
    _
  %s6 = ssub.s32 1, %s4
  %s7 = scalar_select 0, %s6, %s4
  // Predicated region
  $region2: #{blip_forward.36} parent=0 // pred_check
    _
  $region3: #{blip_forward.36} parent=0 // pred_check_branch
    %9 = sbr.rel (0) target = $region5
  $region4: #{blip_forward.36} parent=0 // pred_region
    _
  $region5: #{blip_forward.36} parent=0 // pred_fallthru
    _
  // Predicated region
  $region6: #{blip_forward.36} parent=0 // pred_check
    _
  $region7: #{blip_forward.36} parent=0 // pred_check_branch
    %11 = sbr.rel (0) target = $region9
  $region8: #{blip_forward.36} parent=0 // pred_region
    _
  $region9: #{blip_forward.36} parent=0 // pred_fallthru
    _
  // Predicated region
  $region10: #{blip_forward.36} parent=0 // pred_check
    _
  $region11: #{blip_forward.36} parent=0 // pred_check_branch
    %13 = sbr.rel (0) target = $region13
  $region12: #{blip_forward.36} parent=0 // pred_region
    _
  $region13: #{blip_forward.36} parent=0 // pred_fallthru
    _
  %p15 = scmp.eq.s32.totalorder 0, 0
  // Predicated region
  $region14: #{blip_forward.36} parent=0 // pred_check
    %p16 = pneg %p15
  $region15: #{blip_forward.36} parent=0 // pred_check_branch
    %18 = sbr.rel (%p16) target = $region17
  $region16: #{blip_forward.36} parent=0 // pred_region
    %vm19 = vcmask 785408
    %20 = vst.msk [vmem:[#allocation2] sm:$0xff] %vm19, 0.0
    %21 = vst.msk [vmem:[#allocation2 + $0x8] sm:$0xff] %vm19, 0.0
  $region17: #{blip_forward.36} parent=0 // pred_fallthru
    _
  %v22 = vld [vmem:[#allocation2] sm:$0xff]
  %v23 = vld [vmem:[#allocation2 + $0x8] sm:$0xff]
  %v24 = vld [vmem:[%s0] sm:$0xf]
  %v25 = vld [vmem:[%s0 + $0x4] sm:$0xf]
  %v26 = vld [vmem:[%s1] sm:$0xf]
  %v27 = vld [vmem:[%s1 + $0x4] sm:$0xf]
  %v28 = vld [vmem:[%s1 + $0x8] sm:$0xf]
  %v29 = vld [vmem:[%s1 + $0xc] sm:$0xf]
  %v32 = vunpack.c.l.b16 %v24
  %v33 = vunpack.c.l.b16 %v25
  %v34 = vpack.c.b16 %v33, %v32
  %v39 = vunpack.c.l.b16 %v26
  %v40 = vunpack.c.l.b16 %v27
  %v41 = vunpack.c.l.b16 %v28
  %v42 = vunpack.c.l.b16 %v29
  %v43 = vpack.c.b16 %v40, %v39
  %v44 = vpack.c.b16 %v42, %v41
  %vm47 = vcmask 261120
  %v49 = vsel %vm47, %v34, 0
  %51 = vmatprep.subr.bf16.mxu0 0
  %52 = vmatpush1.bf16.msra.mxu0 %v43
  %53 = vmatprep.subr.bf16.mxu0 0
  %54 = vmatpush1.bf16.msra.mxu0 %v44
  %55 = vmatprep.subr.bf16.mxu0 0
  %56 = vmatpush1.bf16.msra.mxu0 0
  %57 = vmatprep.subr.bf16.mxu0 0
  %58 = vmatpush1.bf16.msra.mxu0 0
  %59 = vmatprep.subr.bf16.mxu0 0
  %60 = vmatpush1.bf16.msra.mxu0 0
  %61 = vmatprep.subr.bf16.mxu0 0
  %62 = vmatpush1.bf16.msra.mxu0 0
  %63 = vmatprep.subr.bf16.mxu0 0
  %64 = vmatpush1.bf16.msra.mxu0 0
  %65 = vmatprep.subr.bf16.mxu0 0
  %66 = vmatpush1.bf16.msra.mxu0 0
  %67 = vmatprep.subr.bf16.mxu0 0
  %68 = vmatpush1.bf16.msra.mxu0 0
  %69 = vmatprep.subr.bf16.mxu0 0
  %70 = vmatpush1.bf16.msra.mxu0 0
  %71 = vmatprep.subr.bf16.mxu0 0
  %72 = vmatpush1.bf16.msra.mxu0 0
  %73 = vmatprep.subr.bf16.mxu0 0
  %74 = vmatpush1.bf16.msra.mxu0 0
  %75 = vmatprep.subr.bf16.mxu0 0
  %76 = vmatpush1.bf16.msra.mxu0 0
  %77 = vmatprep.subr.bf16.mxu0 0
  %78 = vmatpush1.bf16.msra.mxu0 0
  %79 = vmatprep.subr.bf16.mxu0 0
  %80 = vmatpush1.bf16.msra.mxu0 0
  %81 = vmatprep.subr.bf16.mxu0 0
  %82 = vmatpush1.bf16.msra.mxu0 0
  %83 = vmatprep.mubr.bf16.mxu0 0
  %84 = vmatmul.mubr.bf16.gmra.mrb[0].mxu0 %v49
  %v85 = vpop.f32.mrb[0].mxu0
  %v86 = vadd.f32 0.0, %v85
  %v87 = vpop.f32.mrb[0].mxu0
  %v88 = vpop.f32.mrb[0].mxu0
  %v89 = vadd.f32 0.0, %v88
  %v90 = vpop.f32.mrb[0].mxu0
  %91 = vdwg.mxu0
  %v92 = vadd.f32 %v22, %v86
  %v93 = vadd.f32 %v23, %v89
  %vm94 = vcmask 785408
  %95 = vst.msk [vmem:[#allocation2] sm:$0xff] %vm94, %v92
  %96 = vst.msk [vmem:[#allocation2 + $0x8] sm:$0xff] %vm94, %v93
  // Predicated region
  $region18: #{blip_forward.36} parent=0 // pred_check
    %p97 = pneg %p15
  $region19: #{blip_forward.36} parent=0 // pred_check_branch
    %99 = sbr.rel (%p97) target = $region21
  $region20: #{blip_forward.36} parent=0 // pred_region
    %v100 = vld [vmem:[#allocation2] sm:$0xff]
    %v101 = vld [vmem:[#allocation2 + $0x8] sm:$0xff]
    %v102 = vld [vmem:[%s2] sm:$0x1]
    %v103 = vunpack.c.l.bf16 %v102
    %v104 = vlaneseq
    %v105 = vshrl.u32 %v104, 7
    %v106 = vsub.s32 0, %v105
    %v107 = vrot.slane %v103, %v106
    %v108 = vadd.f32 %v100, %v107
    %v109 = vadd.f32 %v101, %v107
    %v110 = vpack.c.bf16 %v109, %v108
    %v112 = vunpack.c.l.b16 %v110
    %v113 = vunpack.c.h.b16 %v110
    %v114 = vpack.c.b16 %v112, %v112
    %v115 = vpack.c.b16 %v113, %v113
    %vm118 = vcmask 781312
    %119 = vst.msk [vmem:[%s3] sm:$0xf] %vm118, %v114
    %120 = vst.msk [vmem:[%s3 + $0x4] sm:$0xf] %vm118, %v115
  $region21: #{blip_forward.36} parent=0 // pred_fallthru
    _
  // Predicated region
  $region22: #{blip_forward.36} parent=0 // pred_check
    _
  $region23: #{blip_forward.36} parent=0 // pred_check_branch
    %122 = sbr.rel (0) target = $region25
  $region24: #{blip_forward.36} parent=0 // pred_region
    _
  $region25: #{blip_forward.36} parent=0 // pred_fallthru
    _
  // Predicated region
  $region26: #{blip_forward.36} parent=0 // pred_check
    _
  $region27: #{blip_forward.36} parent=0 // pred_check_branch
    %124 = sbr.rel (0) target = $region29
  $region28: #{blip_forward.36} parent=0 // pred_region
    _
  $region29: #{blip_forward.36} parent=0 // pred_fallthru
    _

// kernel: blip_forward.40
$region0: #{blip_forward.40}
  #allocation0 [shape = 'u32[]', space=smem, size = 0x4, offset = 0x4, fixed_abs, tag = 'smem constant byte address 0x4 - core index']
  #allocation1 [shape = 'u32[144,128]{1,0:T(1,128)}', space=vmem, size = 0x12000, scoped, tag = 'internal scratch']
  #allocation2 [shape = 'f32[16,64]{1,0:T(8,128)}', space=vmem, size = 0x2000, scoped, tag = 'scratch operand']
  %s0 = inlined_call_operand.vmem [shape: bf16[16,32], index: 0, kind: input, shape index: {}]
  %s1 = inlined_call_operand.vmem [shape: bf16[32,64], index: 1, kind: input, shape index: {}]
  %s2 = inlined_call_operand.vmem [shape: bf16[1,64], index: 2, kind: input, shape index: {}]
  %s3 = inlined_call_operand.vmem [shape: bf16[16,64], index: 3, kind: output, shape index: {}]
  %s4 = sld [smem:[#allocation0]]
  $region30: #{blip_forward.40} parent=0
    _
  %s6 = ssub.s32 1, %s4
  %s7 = scalar_select 0, %s6, %s4
  // Predicated region
  $region2: #{blip_forward.40} parent=0 // pred_check
    _
  $region3: #{blip_forward.40} parent=0 // pred_check_branch
    %9 = sbr.rel (0) target = $region5
  $region4: #{blip_forward.40} parent=0 // pred_region
    _
  $region5: #{blip_forward.40} parent=0 // pred_fallthru
    _
  // Predicated region
  $region6: #{blip_forward.40} parent=0 // pred_check
    _
  $region7: #{blip_forward.40} parent=0 // pred_check_branch
    %11 = sbr.rel (0) target = $region9
  $region8: #{blip_forward.40} parent=0 // pred_region
    _
  $region9: #{blip_forward.40} parent=0 // pred_fallthru
    _
  // Predicated region
  $region10: #{blip_forward.40} parent=0 // pred_check
    _
  $region11: #{blip_forward.40} parent=0 // pred_check_branch
    %13 = sbr.rel (0) target = $region13
  $region12: #{blip_forward.40} parent=0 // pred_region
    _
  $region13: #{blip_forward.40} parent=0 // pred_fallthru
    _
  %p15 = scmp.eq.s32.totalorder 0, 0
  // Predicated region
  $region14: #{blip_forward.40} parent=0 // pred_check
    %p16 = pneg %p15
  $region15: #{blip_forward.40} parent=0 // pred_check_branch
    %18 = sbr.rel (%p16) target = $region17
  $region16: #{blip_forward.40} parent=0 // pred_region
    %vm19 = vcmask 523264
    %20 = vst.msk [vmem:[#allocation2] sm:$0xff] %vm19, 0.0
    %21 = vst.msk [vmem:[#allocation2 + $0x8] sm:$0xff] %vm19, 0.0
  $region17: #{blip_forward.40} parent=0 // pred_fallthru
    _
  %v22 = vld [vmem:[#allocation2] sm:$0xff]
  %v23 = vld [vmem:[#allocation2 + $0x8] sm:$0xff]
  %v24 = vld [vmem:[%s0] sm:$0xf]
  %v25 = vld [vmem:[%s0 + $0x4] sm:$0xf]
  %v26 = vld [vmem:[%s1] sm:$0xf]
  %v27 = vld [vmem:[%s1 + $0x4] sm:$0xf]
  %v28 = vld [vmem:[%s1 + $0x8] sm:$0xf]
  %v29 = vld [vmem:[%s1 + $0xc] sm:$0xf]
  %v32 = vunpack.c.l.b16 %v24
  %v33 = vunpack.c.l.b16 %v25
  %v34 = vpack.c.b16 %v33, %v32
  %v39 = vunpack.c.l.b16 %v26
  %v40 = vunpack.c.l.b16 %v27
  %v41 = vunpack.c.l.b16 %v28
  %v42 = vunpack.c.l.b16 %v29
  %v43 = vpack.c.b16 %v40, %v39
  %v44 = vpack.c.b16 %v42, %v41
  %vm47 = vcmask 261120
  %v49 = vsel %vm47, %v34, 0
  %51 = vmatprep.subr.bf16.mxu0 0
  %52 = vmatpush1.bf16.msra.mxu0 %v43
  %53 = vmatprep.subr.bf16.mxu0 0
  %54 = vmatpush1.bf16.msra.mxu0 %v44
  %55 = vmatprep.subr.bf16.mxu0 0
  %56 = vmatpush1.bf16.msra.mxu0 0
  %57 = vmatprep.subr.bf16.mxu0 0
  %58 = vmatpush1.bf16.msra.mxu0 0
  %59 = vmatprep.subr.bf16.mxu0 0
  %60 = vmatpush1.bf16.msra.mxu0 0
  %61 = vmatprep.subr.bf16.mxu0 0
  %62 = vmatpush1.bf16.msra.mxu0 0
  %63 = vmatprep.subr.bf16.mxu0 0
  %64 = vmatpush1.bf16.msra.mxu0 0
  %65 = vmatprep.subr.bf16.mxu0 0
  %66 = vmatpush1.bf16.msra.mxu0 0
  %67 = vmatprep.subr.bf16.mxu0 0
  %68 = vmatpush1.bf16.msra.mxu0 0
  %69 = vmatprep.subr.bf16.mxu0 0
  %70 = vmatpush1.bf16.msra.mxu0 0
  %71 = vmatprep.subr.bf16.mxu0 0
  %72 = vmatpush1.bf16.msra.mxu0 0
  %73 = vmatprep.subr.bf16.mxu0 0
  %74 = vmatpush1.bf16.msra.mxu0 0
  %75 = vmatprep.subr.bf16.mxu0 0
  %76 = vmatpush1.bf16.msra.mxu0 0
  %77 = vmatprep.subr.bf16.mxu0 0
  %78 = vmatpush1.bf16.msra.mxu0 0
  %79 = vmatprep.subr.bf16.mxu0 0
  %80 = vmatpush1.bf16.msra.mxu0 0
  %81 = vmatprep.subr.bf16.mxu0 0
  %82 = vmatpush1.bf16.msra.mxu0 0
  %83 = vmatprep.mubr.bf16.mxu0 0
  %84 = vmatmul.mubr.bf16.gmra.mrb[0].mxu0 %v49
  %v85 = vpop.f32.mrb[0].mxu0
  %v86 = vadd.f32 0.0, %v85
  %v87 = vpop.f32.mrb[0].mxu0
  %v88 = vpop.f32.mrb[0].mxu0
  %v89 = vadd.f32 0.0, %v88
  %v90 = vpop.f32.mrb[0].mxu0
  %91 = vdwg.mxu0
  %v92 = vadd.f32 %v22, %v86
  %v93 = vadd.f32 %v23, %v89
  %vm94 = vcmask 523264
  %95 = vst.msk [vmem:[#allocation2] sm:$0xff] %vm94, %v92
  %96 = vst.msk [vmem:[#allocation2 + $0x8] sm:$0xff] %vm94, %v93
  // Predicated region
  $region18: #{blip_forward.40} parent=0 // pred_check
    %p97 = pneg %p15
  $region19: #{blip_forward.40} parent=0 // pred_check_branch
    %99 = sbr.rel (%p97) target = $region21
  $region20: #{blip_forward.40} parent=0 // pred_region
    %v100 = vld [vmem:[#allocation2] sm:$0xff]
    %v101 = vld [vmem:[#allocation2 + $0x8] sm:$0xff]
    %v102 = vld [vmem:[%s2] sm:$0x1]
    %v103 = vunpack.c.l.bf16 %v102
    %v104 = vlaneseq
    %v105 = vshrl.u32 %v104, 7
    %v106 = vsub.s32 0, %v105
    %v107 = vrot.slane %v103, %v106
    %v108 = vadd.f32 %v100, %v107
    %v109 = vadd.f32 %v101, %v107
    %v110 = vmul.f32 %v108, 0.5
    %v111 = vmul.f32 %v109, 0.5
    %v112 = vmul.f32 %v108, 0.044715
    %v113 = vmul.f32 %v109, 0.044715
    %v114 = vmul.f32 %v112, %v108
    %v115 = vmul.f32 %v113, %v109
    %v116 = vmul.f32 %v114, %v108
    %v117 = vmul.f32 %v115, %v109
    %v118 = vadd.f32 %v108, %v116
    %v119 = vadd.f32 %v109, %v117
    %v120 = vmul.f32 %v118, 0.7978846
    %v121 = vmul.f32 %v119, 0.7978846
    %v122 = vtanh.pop %v120
    %v123 = vtanh.pop %v121
    %v124 = vadd.f32 %v122, 1.0
    %v125 = vadd.f32 %v123, 1.0
    %v126 = vmul.f32 %v110, %v124
    %v127 = vmul.f32 %v111, %v125
    %v128 = vpack.c.bf16 %v127, %v126
    %v130 = vunpack.c.l.b16 %v128
    %v131 = vunpack.c.h.b16 %v128
    %v132 = vpack.c.b16 %v130, %v130
    %v133 = vpack.c.b16 %v131, %v131
    %vm136 = vcmask 519168
    %137 = vst.msk [vmem:[%s3] sm:$0xf] %vm136, %v132
    %138 = vst.msk [vmem:[%s3 + $0x4] sm:$0xf] %vm136, %v133
  $region21: #{blip_forward.40} parent=0 // pred_fallthru
    _
  // Predicated region
  $region22: #{blip_forward.40} parent=0 // pred_check
    _
  $region23: #{blip_forward.40} parent=0 // pred_check_branch
    %140 = sbr.rel (0) target = $region25
  $region24: #{blip_forward.40} parent=0 // pred_region
    _
  $region25: #{blip_forward.40} parent=0 // pred_fallthru
    _
  // Predicated region
  $region26: #{blip_forward.40} parent=0 // pred_check
    _
  $region27: #{blip_forward.40} parent=0 // pred_check_branch
    %142 = sbr.rel (0) target = $region29
  $region28: #{blip_forward.40} parent=0 // pred_region
    _
  $region29: #{blip_forward.40} parent=0 // pred_fallthru
    _

// kernel: blip_forward.41
$region0: #{blip_forward.41}
  #allocation0 [shape = 'u32[]', space=smem, size = 0x4, offset = 0x4, fixed_abs, tag = 'smem constant byte address 0x4 - core index']
  #allocation1 [shape = 'u32[144,128]{1,0:T(1,128)}', space=vmem, size = 0x12000, scoped, tag = 'internal scratch']
  #allocation2 [shape = 'f32[16,32]{1,0:T(8,128)}', space=vmem, size = 0x2000, scoped, tag = 'scratch operand']
  %s0 = inlined_call_operand.vmem [shape: bf16[16,64], index: 0, kind: input, shape index: {}]
  %s1 = inlined_call_operand.vmem [shape: bf16[64,32], index: 1, kind: input, shape index: {}]
  %s2 = inlined_call_operand.vmem [shape: bf16[1,32], index: 2, kind: input, shape index: {}]
  %s3 = inlined_call_operand.vmem [shape: bf16[16,32], index: 3, kind: input, shape index: {}]
  %s4 = inlined_call_operand.vmem [shape: bf16[16,32], index: 4, kind: output, shape index: {}]
  %s5 = sld [smem:[#allocation0]]
  $region34: #{blip_forward.41} parent=0
    _
  %s7 = ssub.s32 1, %s5
  %s8 = scalar_select 0, %s7, %s5
  // Predicated region
  $region2: #{blip_forward.41} parent=0 // pred_check
    _
  $region3: #{blip_forward.41} parent=0 // pred_check_branch
    %10 = sbr.rel (0) target = $region5
  $region4: #{blip_forward.41} parent=0 // pred_region
    _
  $region5: #{blip_forward.41} parent=0 // pred_fallthru
    _
  // Predicated region
  $region6: #{blip_forward.41} parent=0 // pred_check
    _
  $region7: #{blip_forward.41} parent=0 // pred_check_branch
    %12 = sbr.rel (0) target = $region9
  $region8: #{blip_forward.41} parent=0 // pred_region
    _
  $region9: #{blip_forward.41} parent=0 // pred_fallthru
    _
  // Predicated region
  $region10: #{blip_forward.41} parent=0 // pred_check
    _
  $region11: #{blip_forward.41} parent=0 // pred_check_branch
    %14 = sbr.rel (0) target = $region13
  $region12: #{blip_forward.41} parent=0 // pred_region
    _
  $region13: #{blip_forward.41} parent=0 // pred_fallthru
    _
  // Predicated region
  $region14: #{blip_forward.41} parent=0 // pred_check
    _
  $region15: #{blip_forward.41} parent=0 // pred_check_branch
    %16 = sbr.rel (0) target = $region17
  $region16: #{blip_forward.41} parent=0 // pred_region
    _
  $region17: #{blip_forward.41} parent=0 // pred_fallthru
    _
  %p18 = scmp.eq.s32.totalorder 0, 0
  // Predicated region
  $region18: #{blip_forward.41} parent=0 // pred_check
    %p19 = pneg %p18
  $region19: #{blip_forward.41} parent=0 // pred_check_branch
    %21 = sbr.rel (%p19) target = $region21
  $region20: #{blip_forward.41} parent=0 // pred_region
    %vm22 = vcmask 261120
    %23 = vst.msk [vmem:[#allocation2] sm:$0xff] %vm22, 0.0
    %24 = vst.msk [vmem:[#allocation2 + $0x8] sm:$0xff] %vm22, 0.0
  $region21: #{blip_forward.41} parent=0 // pred_fallthru
    _
  %v25 = vld [vmem:[#allocation2] sm:$0xff]
  %v26 = vld [vmem:[#allocation2 + $0x8] sm:$0xff]
  %v27 = vld [vmem:[%s0] sm:$0xf]
  %v28 = vld [vmem:[%s0 + $0x4] sm:$0xf]
  %v29 = vld [vmem:[%s1] sm:$0xf]
  %v30 = vld [vmem:[%s1 + $0x4] sm:$0xf]
  %v31 = vld [vmem:[%s1 + $0x8] sm:$0xf]
  %v32 = vld [vmem:[%s1 + $0xc] sm:$0xf]
  %v33 = vld [vmem:[%s1 + $0x10] sm:$0xf]
  %v34 = vld [vmem:[%s1 + $0x14] sm:$0xf]
  %v35 = vld [vmem:[%s1 + $0x18] sm:$0xf]
  %v36 = vld [vmem:[%s1 + $0x1c] sm:$0xf]
  %v39 = vunpack.c.l.b16 %v27
  %v40 = vunpack.c.l.b16 %v28
  %v41 = vpack.c.b16 %v40, %v39
  %v50 = vunpack.c.l.b16 %v29
  %v51 = vunpack.c.l.b16 %v30
  %v52 = vunpack.c.l.b16 %v31
  %v53 = vunpack.c.l.b16 %v32
  %v54 = vunpack.c.l.b16 %v33
  %v55 = vunpack.c.l.b16 %v34
  %v56 = vunpack.c.l.b16 %v35
  %v57 = vunpack.c.l.b16 %v36
  %v58 = vpack.c.b16 %v51, %v50
  %v59 = vpack.c.b16 %v53, %v52
  %v60 = vpack.c.b16 %v55, %v54
  %v61 = vpack.c.b16 %v57, %v56
  %vm66 = vcmask 523264
  %v68 = vsel %vm66, %v41, 0
  %70 = vmatprep.subr.bf16.mxu0 0
  %71 = vmatpush1.bf16.msra.mxu0 %v58
  %72 = vmatprep.subr.bf16.mxu0 0
  %73 = vmatpush1.bf16.msra.mxu0 %v59
  %74 = vmatprep.subr.bf16.mxu0 0
  %75 = vmatpush1.bf16.msra.mxu0 %v60
  %76 = vmatprep.subr.bf16.mxu0 0
  %77 = vmatpush1.bf16.msra.mxu0 %v61
  %78 = vmatprep.subr.bf16.mxu0 0
  %79 = vmatpush1.bf16.msra.mxu0 0
  %80 = vmatprep.subr.bf16.mxu0 0
  %81 = vmatpush1.bf16.msra.mxu0 0
  %82 = vmatprep.subr.bf16.mxu0 0
  %83 = vmatpush1.bf16.msra.mxu0 0
  %84 = vmatprep.subr.bf16.mxu0 0
  %85 = vmatpush1.bf16.msra.mxu0 0
  %86 = vmatprep.subr.bf16.mxu0 0
  %87 = vmatpush1.bf16.msra.mxu0 0
  %88 = vmatprep.subr.bf16.mxu0 0
  %89 = vmatpush1.bf16.msra.mxu0 0
  %90 = vmatprep.subr.bf16.mxu0 0
  %91 = vmatpush1.bf16.msra.mxu0 0
  %92 = vmatprep.subr.bf16.mxu0 0
  %93 = vmatpush1.bf16.msra.mxu0 0
  %94 = vmatprep.subr.bf16.mxu0 0
  %95 = vmatpush1.bf16.msra.mxu0 0
  %96 = vmatprep.subr.bf16.mxu0 0
  %97 = vmatpush1.bf16.msra.mxu0 0
  %98 = vmatprep.subr.bf16.mxu0 0
  %99 = vmatpush1.bf16.msra.mxu0 0
  %100 = vmatprep.subr.bf16.mxu0 0
  %101 = vmatpush1.bf16.msra.mxu0 0
  %102 = vmatprep.mubr.bf16.mxu0 0
  %103 = vmatmul.mubr.bf16.gmra.mrb[0].mxu0 %v68
  %v104 = vpop.f32.mrb[0].mxu0
  %v105 = vadd.f32 0.0, %v104
  %v106 = vpop.f32.mrb[0].mxu0
  %v107 = vpop.f32.mrb[0].mxu0
  %v108 = vadd.f32 0.0, %v107
  %v109 = vpop.f32.mrb[0].mxu0
  %110 = vdwg.mxu0
  %v111 = vadd.f32 %v25, %v105
  %v112 = vadd.f32 %v26, %v108
  %vm113 = vcmask 261120
  %114 = vst.msk [vmem:[#allocation2] sm:$0xff] %vm113, %v111
  %115 = vst.msk [vmem:[#allocation2 + $0x8] sm:$0xff] %vm113, %v112
  // Predicated region
  $region22: #{blip_forward.41} parent=0 // pred_check
    %p116 = pneg %p18
  $region23: #{blip_forward.41} parent=0 // pred_check_branch
    %118 = sbr.rel (%p116) target = $region25
  $region24: #{blip_forward.41} parent=0 // pred_region
    %v119 = vld [vmem:[#allocation2] sm:$0xff]
    %v120 = vld [vmem:[#allocation2 + $0x8] sm:$0xff]
    %v121 = vld [vmem:[%s2] sm:$0x1]
    %v122 = vunpack.c.l.bf16 %v121
    %v123 = vlaneseq
    %v124 = vshrl.u32 %v123, 7
    %v125 = vsub.s32 0, %v124
    %v126 = vrot.slane %v122, %v125
    %v127 = vadd.f32 %v119, %v126
    %v128 = vadd.f32 %v120, %v126
    %v129 = vld [vmem:[%s3] sm:$0xf]
    %v130 = vld [vmem:[%s3 + $0x4] sm:$0xf]
    %v131 = vunpack.c.l.bf16 %v129
    %v132 = vunpack.c.l.bf16 %v130
    %v133 = vadd.f32 %v127, %v131
    %v134 = vadd.f32 %v128, %v132
    %v135 = vpack.c.bf16 %v134, %v133
    %v137 = vunpack.c.l.b16 %v135
    %v138 = vunpack.c.h.b16 %v135
    %v139 = vpack.c.b16 %v137, %v137
    %v140 = vpack.c.b16 %v138, %v138
    %vm143 = vcmask 257024
    %144 = vst.msk [vmem:[%s4] sm:$0xf] %vm143, %v139
    %145 = vst.msk [vmem:[%s4 + $0x4] sm:$0xf] %vm143, %v140
  $region25: #{blip_forward.41} parent=0 // pred_fallthru
    _
  // Predicated region
  $region26: #{blip_forward.41} parent=0 // pred_check
    _
  $region27: #{blip_forward.41} parent=0 // pred_check_branch
    %147 = sbr.rel (0) target = $region29
  $region28: #{blip_forward.41} parent=0 // pred_region
    _
  $region29: #{blip_forward.41} parent=0 // pred_fallthru
    _
  // Predicated region
  $region30: #{blip_forward.41} parent=0 // pred_check
    _
  $region31: #{blip_forward.41} parent=0 // pred_check_branch
    %149 = sbr.rel (0) target = $region33
  $region32: #{blip_forward.41} parent=0 // pred_region
    _
  $region33: #{blip_forward.41} parent=0 // pred_fallthru
    _

// kernel: blip_forward.38
$region0: #{blip_forward.38}
  #allocation0 [shape = 'u32[]', space=smem, size = 0x4, offset = 0x4, fixed_abs, tag = 'smem constant byte address 0x4 - core index']
  #allocation1 [shape = 'u32[144,128]{1,0:T(1,128)}', space=vmem, size = 0x12000, scoped, tag = 'internal scratch']
  #allocation2 [shape = 'f32[16,32]{1,0:T(8,128)}', space=vmem, size = 0x2000, scoped, tag = 'scratch operand']
  %s0 = inlined_call_operand.vmem [shape: bf16[16,32], index: 0, kind: input, shape index: {}]
  %s1 = inlined_call_operand.vmem [shape: bf16[32,32], index: 1, kind: input, shape index: {}]
  %s2 = inlined_call_operand.vmem [shape: bf16[1,32], index: 2, kind: input, shape index: {}]
  %s3 = inlined_call_operand.vmem [shape: bf16[16,32], index: 3, kind: input, shape index: {}]
  %s4 = inlined_call_operand.vmem [shape: bf16[16,32], index: 4, kind: output, shape index: {}]
  %s5 = sld [smem:[#allocation0]]
  $region34: #{blip_forward.38} parent=0
    _
  %s7 = ssub.s32 1, %s5
  %s8 = scalar_select 0, %s7, %s5
  // Predicated region
  $region2: #{blip_forward.38} parent=0 // pred_check
    _
  $region3: #{blip_forward.38} parent=0 // pred_check_branch
    %10 = sbr.rel (0) target = $region5
  $region4: #{blip_forward.38} parent=0 // pred_region
    _
  $region5: #{blip_forward.38} parent=0 // pred_fallthru
    _
  // Predicated region
  $region6: #{blip_forward.38} parent=0 // pred_check
    _
  $region7: #{blip_forward.38} parent=0 // pred_check_branch
    %12 = sbr.rel (0) target = $region9
  $region8: #{blip_forward.38} parent=0 // pred_region
    _
  $region9: #{blip_forward.38} parent=0 // pred_fallthru
    _
  // Predicated region
  $region10: #{blip_forward.38} parent=0 // pred_check
    _
  $region11: #{blip_forward.38} parent=0 // pred_check_branch
    %14 = sbr.rel (0) target = $region13
  $region12: #{blip_forward.38} parent=0 // pred_region
    _
  $region13: #{blip_forward.38} parent=0 // pred_fallthru
    _
  // Predicated region
  $region14: #{blip_forward.38} parent=0 // pred_check
    _
  $region15: #{blip_forward.38} parent=0 // pred_check_branch
    %16 = sbr.rel (0) target = $region17
  $region16: #{blip_forward.38} parent=0 // pred_region
    _
  $region17: #{blip_forward.38} parent=0 // pred_fallthru
    _
  %p18 = scmp.eq.s32.totalorder 0, 0
  // Predicated region
  $region18: #{blip_forward.38} parent=0 // pred_check
    %p19 = pneg %p18
  $region19: #{blip_forward.38} parent=0 // pred_check_branch
    %21 = sbr.rel (%p19) target = $region21
  $region20: #{blip_forward.38} parent=0 // pred_region
    %vm22 = vcmask 261120
    %23 = vst.msk [vmem:[#allocation2] sm:$0xff] %vm22, 0.0
    %24 = vst.msk [vmem:[#allocation2 + $0x8] sm:$0xff] %vm22, 0.0
  $region21: #{blip_forward.38} parent=0 // pred_fallthru
    _
  %v25 = vld [vmem:[#allocation2] sm:$0xff]
  %v26 = vld [vmem:[#allocation2 + $0x8] sm:$0xff]
  %v27 = vld [vmem:[%s0] sm:$0xf]
  %v28 = vld [vmem:[%s0 + $0x4] sm:$0xf]
  %v29 = vld [vmem:[%s1] sm:$0xf]
  %v30 = vld [vmem:[%s1 + $0x4] sm:$0xf]
  %v31 = vld [vmem:[%s1 + $0x8] sm:$0xf]
  %v32 = vld [vmem:[%s1 + $0xc] sm:$0xf]
  %v35 = vunpack.c.l.b16 %v27
  %v36 = vunpack.c.l.b16 %v28
  %v37 = vpack.c.b16 %v36, %v35
  %v42 = vunpack.c.l.b16 %v29
  %v43 = vunpack.c.l.b16 %v30
  %v44 = vunpack.c.l.b16 %v31
  %v45 = vunpack.c.l.b16 %v32
  %v46 = vpack.c.b16 %v43, %v42
  %v47 = vpack.c.b16 %v45, %v44
  %vm50 = vcmask 261120
  %v52 = vsel %vm50, %v37, 0
  %54 = vmatprep.subr.bf16.mxu0 0
  %55 = vmatpush1.bf16.msra.mxu0 %v46
  %56 = vmatprep.subr.bf16.mxu0 0
  %57 = vmatpush1.bf16.msra.mxu0 %v47
  %58 = vmatprep.subr.bf16.mxu0 0
  %59 = vmatpush1.bf16.msra.mxu0 0
  %60 = vmatprep.subr.bf16.mxu0 0
  %61 = vmatpush1.bf16.msra.mxu0 0
  %62 = vmatprep.subr.bf16.mxu0 0
  %63 = vmatpush1.bf16.msra.mxu0 0
  %64 = vmatprep.subr.bf16.mxu0 0
  %65 = vmatpush1.bf16.msra.mxu0 0
  %66 = vmatprep.subr.bf16.mxu0 0
  %67 = vmatpush1.bf16.msra.mxu0 0
  %68 = vmatprep.subr.bf16.mxu0 0
  %69 = vmatpush1.bf16.msra.mxu0 0
  %70 = vmatprep.subr.bf16.mxu0 0
  %71 = vmatpush1.bf16.msra.mxu0 0
  %72 = vmatprep.subr.bf16.mxu0 0
  %73 = vmatpush1.bf16.msra.mxu0 0
  %74 = vmatprep.subr.bf16.mxu0 0
  %75 = vmatpush1.bf16.msra.mxu0 0
  %76 = vmatprep.subr.bf16.mxu0 0
  %77 = vmatpush1.bf16.msra.mxu0 0
  %78 = vmatprep.subr.bf16.mxu0 0
  %79 = vmatpush1.bf16.msra.mxu0 0
  %80 = vmatprep.subr.bf16.mxu0 0
  %81 = vmatpush1.bf16.msra.mxu0 0
  %82 = vmatprep.subr.bf16.mxu0 0
  %83 = vmatpush1.bf16.msra.mxu0 0
  %84 = vmatprep.subr.bf16.mxu0 0
  %85 = vmatpush1.bf16.msra.mxu0 0
  %86 = vmatprep.mubr.bf16.mxu0 0
  %87 = vmatmul.mubr.bf16.gmra.mrb[0].mxu0 %v52
  %v88 = vpop.f32.mrb[0].mxu0
  %v89 = vadd.f32 0.0, %v88
  %v90 = vpop.f32.mrb[0].mxu0
  %v91 = vpop.f32.mrb[0].mxu0
  %v92 = vadd.f32 0.0, %v91
  %v93 = vpop.f32.mrb[0].mxu0
  %94 = vdwg.mxu0
  %v95 = vadd.f32 %v25, %v89
  %v96 = vadd.f32 %v26, %v92
  %97 = vst.msk [vmem:[#allocation2] sm:$0xff] %vm50, %v95
  %98 = vst.msk [vmem:[#allocation2 + $0x8] sm:$0xff] %vm50, %v96
  // Predicated region
  $region22: #{blip_forward.38} parent=0 // pred_check
    %p99 = pneg %p18
  $region23: #{blip_forward.38} parent=0 // pred_check_branch
    %101 = sbr.rel (%p99) target = $region25
  $region24: #{blip_forward.38} parent=0 // pred_region
    %v102 = vld [vmem:[#allocation2] sm:$0xff]
    %v103 = vld [vmem:[#allocation2 + $0x8] sm:$0xff]
    %v104 = vld [vmem:[%s2] sm:$0x1]
    %v105 = vunpack.c.l.bf16 %v104
    %v106 = vlaneseq
    %v107 = vshrl.u32 %v106, 7
    %v108 = vsub.s32 0, %v107
    %v109 = vrot.slane %v105, %v108
    %v110 = vadd.f32 %v102, %v109
    %v111 = vadd.f32 %v103, %v109
    %v112 = vld [vmem:[%s3] sm:$0xf]
    %v113 = vld [vmem:[%s3 + $0x4] sm:$0xf]
    %v114 = vunpack.c.l.bf16 %v112
    %v115 = vunpack.c.l.bf16 %v113
    %v116 = vadd.f32 %v110, %v114
    %v117 = vadd.f32 %v111, %v115
    %v118 = vpack.c.bf16 %v117, %v116
    %v120 = vunpack.c.l.b16 %v118
    %v121 = vunpack.c.h.b16 %v118
    %v122 = vpack.c.b16 %v120, %v120
    %v123 = vpack.c.b16 %v121, %v121
    %vm126 = vcmask 257024
    %127 = vst.msk [vmem:[%s4] sm:$0xf] %vm126, %v122
    %128 = vst.msk [vmem:[%s4 + $0x4] sm:$0xf] %vm126, %v123
  $region25: #{blip_forward.38} parent=0 // pred_fallthru
    _
  // Predicated region
  $region26: #{blip_forward.38} parent=0 // pred_check
    _
  $region27: #{blip_forward.38} parent=0 // pred_check_branch
    %130 = sbr.rel (0) target = $region29
  $region28: #{blip_forward.38} parent=0 // pred_region
    _
  $region29: #{blip_forward.38} parent=0 // pred_fallthru
    _
  // Predicated region
  $region30: #{blip_forward.38} parent=0 // pred_check
    _
  $region31: #{blip_forward.38} parent=0 // pred_check_branch
    %132 = sbr.rel (0) target = $region33
  $region32: #{blip_forward.38} parent=0 // pred_region
    _
  $region33: #{blip_forward.38} parent=0 // pred_fallthru
    _

// kernel: blip_forward.37
$region0: #{blip_forward.37}
  #allocation0 [shape = 'u32[]', space=smem, size = 0x4, offset = 0x4, fixed_abs, tag = 'smem constant byte address 0x4 - core index']
  #allocation1 [shape = 'u32[144,128]{1,0:T(1,128)}', space=vmem, size = 0x12000, scoped, tag = 'internal scratch']
  #allocation2 [shape = 'f32[4,8,1]{2,1,0:T(8,128)}', space=vmem, size = 0x4000, scoped, tag = 'scratch operand']
  #allocation3 [shape = 'f32[4,8,1]{2,1,0:T(8,128)}', space=vmem, size = 0x4000, scoped, tag = 'scratch operand']
  #allocation4 [shape = 'f32[8,32]{1,0:T(8,128)}', space=vmem, size = 0x1000, scoped, tag = 'scratch operand']
  %s0 = inlined_call_operand.vmem [shape: bf16[2,8,32], index: 0, kind: input, shape index: {}]
  %s1 = inlined_call_operand.vmem [shape: bf16[2,8,32], index: 1, kind: input, shape index: {}]
  %s2 = inlined_call_operand.vmem [shape: bf16[2,8,32], index: 2, kind: input, shape index: {}]
  %s3 = inlined_call_operand.vmem [shape: f32[2,1,8], index: 3, kind: input, shape index: {}]
  %s4 = inlined_call_operand.vmem [shape: bf16[2,8,32], index: 4, kind: output, shape index: {}]
  %s5 = sld [smem:[#allocation0]]
  $region57: #{blip_forward.37} parent=0
    _
  %s7 = ssub.s32 1, %s5
  %s8 = scalar_select 0, %s7, %s5
  loop: start=0, step=1, limit=4
  $region2: #{blip_forward.37} parent=0 // loop_pre_header
    _
  $region3: #{blip_forward.37} parent=0 // loop_header
    %s10 = sphi 0, %s14
    %p11 = scmp.ge.s32.totalorder %s10, 4
    %s17 = sphi 0, %s36
    %s18 = sphi 0, %s32
    %s19 = sphi 0, %s28
    %s20 = sphi 0, %s17
    %s21 = sphi 0, %s18
    %s22 = sphi 0, %s19
    %s23 = sphi 0, %s20
    %s24 = sphi 0, %s21
    %s25 = sphi 0, %s22
    %s41 = sphi 0, %s43
    %s44 = sphi 0, %s41
    %s45 = sphi 0, %s44
    %s61 = sphi 0, %s45
    %s69 = sphi 0, %s71
    %s72 = sphi 0, %s69
    %s73 = sphi 0, %s72
    %s89 = sphi 0, %s73
    %s97 = sphi 0, %s99
    %s100 = sphi 0, %s97
    %s101 = sphi 0, %s100
    %s117 = sphi 0, %s101
    %s125 = sphi 0, %s127
    %s128 = sphi 0, %s125
    %s129 = sphi 0, %s128
    %s145 = sphi 0, %s129
    %s153 = sphi 0, %s155
    %s156 = sphi 0, %s153
    %s157 = sphi 0, %s156
    %s173 = sphi 0, %s157
  $region4: #{blip_forward.37} parent=0 // loop_header_branch
    %13 = sbr.rel (%p11) target = $region8
  $region5: #{blip_forward.37} parent=0 // loop_body
    %s15 = ssub.s32 %s10, 1
    %s16 = ssub.s32 %s10, 2
    %s26 = sadd.s32 1, %s19
    %p27 = scmp.ge.s32.totalorder %s26, 1
    %s28 = scalar_select %p27, 0, %s26
    %s29 = sadd.s32 1, %s18
    %s30 = scalar_select %p27, %s29, %s18
    %p31 = scmp.ge.s32.totalorder %s30, 1
    %s32 = scalar_select %p31, 0, %s30
    %s33 = sadd.s32 1, %s17
    %s34 = scalar_select %p31, %s33, %s17
    %p35 = scmp.ge.s32.totalorder %s34, 2
    %s36 = scalar_select %p35, 0, %s34
    %s37 = ssub.s32 %s17, %s36
    %s38 = ssub.s32 %s18, %s32
    %s39 = sor.u32 %s37, %s38
    %p40 = scmp.eq.s32.totalorder %s39, 0
    %s42 = sadd.s32 %s41, 1
    %s43 = scalar_select %p40, %s41, %s42
    %p46 = pneg %p40
    %p47 = scmp.eq.s32.totalorder %s10, 1
    %p48 = por %p46, %p47
    %p49 = scmp.ne.s32.totalorder %s41, %s44
    %p50 = scmp.eq.s32.totalorder %s10, 0
    %p51 = por %p49, %p50
    %p52 = scmp.ne.s32.totalorder %s41, %s44
    %p53 = scmp.eq.s32.totalorder %s15, 1
    %p54 = por %p52, %p53
    %p55 = scmp.ne.s32.totalorder %s44, %s45
    %p56 = scmp.eq.s32.totalorder %s15, 0
    %p57 = por %p55, %p56
    %p58 = scmp.ne.s32.totalorder %s44, %s45
    %p59 = scmp.eq.s32.totalorder %s16, 1
    %p60 = por %p58, %p59
    %p62 = scmp.ne.s32.totalorder %s45, %s61
    %p63 = scmp.eq.s32.totalorder %s16, 0
    %p64 = por %p62, %p63
    %s65 = ssub.s32 %s17, %s36
    %s66 = ssub.s32 %s19, %s28
    %s67 = sor.u32 %s65, %s66
    %p68 = scmp.eq.s32.totalorder %s67, 0
    %s70 = sadd.s32 %s69, 1
    %s71 = scalar_select %p68, %s69, %s70
    %p74 = pneg %p68
    %p75 = scmp.eq.s32.totalorder %s10, 1
    %p76 = por %p74, %p75
    %p77 = scmp.ne.s32.totalorder %s69, %s72
    %p78 = scmp.eq.s32.totalorder %s10, 0
    %p79 = por %p77, %p78
    %p80 = scmp.ne.s32.totalorder %s69, %s72
    %p81 = scmp.eq.s32.totalorder %s15, 1
    %p82 = por %p80, %p81
    %p83 = scmp.ne.s32.totalorder %s72, %s73
    %p84 = scmp.eq.s32.totalorder %s15, 0
    %p85 = por %p83, %p84
    %p86 = scmp.ne.s32.totalorder %s72, %s73
    %p87 = scmp.eq.s32.totalorder %s16, 1
    %p88 = por %p86, %p87
    %p90 = scmp.ne.s32.totalorder %s73, %s89
    %p91 = scmp.eq.s32.totalorder %s16, 0
    %p92 = por %p90, %p91
    %s93 = ssub.s32 %s17, %s36
    %s94 = ssub.s32 %s19, %s28
    %s95 = sor.u32 %s93, %s94
    %p96 = scmp.eq.s32.totalorder %s95, 0
    %s98 = sadd.s32 %s97, 1
    %s99 = scalar_select %p96, %s97, %s98
    %p102 = pneg %p96
    %p103 = scmp.eq.s32.totalorder %s10, 1
    %p104 = por %p102, %p103
    %p105 = scmp.ne.s32.totalorder %s97, %s100
    %p106 = scmp.eq.s32.totalorder %s10, 0
    %p107 = por %p105, %p106
    %p108 = scmp.ne.s32.totalorder %s97, %s100
    %p109 = scmp.eq.s32.totalorder %s15, 1
    %p110 = por %p108, %p109
    %p111 = scmp.ne.s32.totalorder %s100, %s101
    %p112 = scmp.eq.s32.totalorder %s15, 0
    %p113 = por %p111, %p112
    %p114 = scmp.ne.s32.totalorder %s100, %s101
    %p115 = scmp.eq.s32.totalorder %s16, 1
    %p116 = por %p114, %p115
    %p118 = scmp.ne.s32.totalorder %s101, %s117
    %p119 = scmp.eq.s32.totalorder %s16, 0
    %p120 = por %p118, %p119
    %s121 = ssub.s32 %s17, %s36
    %s122 = ssub.s32 %s19, %s28
    %s123 = sor.u32 %s121, %s122
    %p124 = scmp.eq.s32.totalorder %s123, 0
    %s126 = sadd.s32 %s125, 1
    %s127 = scalar_select %p124, %s125, %s126
    %p130 = pneg %p124
    %p131 = scmp.eq.s32.totalorder %s10, 1
    %p132 = por %p130, %p131
    %p133 = scmp.ne.s32.totalorder %s125, %s128
    %p134 = scmp.eq.s32.totalorder %s10, 0
    %p135 = por %p133, %p134
    %p136 = scmp.ne.s32.totalorder %s125, %s128
    %p137 = scmp.eq.s32.totalorder %s15, 1
    %p138 = por %p136, %p137
    %p139 = scmp.ne.s32.totalorder %s128, %s129
    %p140 = scmp.eq.s32.totalorder %s15, 0
    %p141 = por %p139, %p140
    %p142 = scmp.ne.s32.totalorder %s128, %s129
    %p143 = scmp.eq.s32.totalorder %s16, 1
    %p144 = por %p142, %p143
    %p146 = scmp.ne.s32.totalorder %s129, %s145
    %p147 = scmp.eq.s32.totalorder %s16, 0
    %p148 = por %p146, %p147
    %s149 = ssub.s32 %s17, %s36
    %s150 = ssub.s32 %s18, %s32
    %s151 = sor.u32 %s149, %s150
    %p152 = scmp.eq.s32.totalorder %s151, 0
    %s154 = sadd.s32 %s153, 1
    %s155 = scalar_select %p152, %s153, %s154
    %p158 = pneg %p152
    %p159 = scmp.eq.s32.totalorder %s10, 1
    %p160 = por %p158, %p159
    %p161 = scmp.ne.s32.totalorder %s153, %s156
    %p162 = scmp.eq.s32.totalorder %s10, 0
    %p163 = por %p161, %p162
    %p164 = scmp.ne.s32.totalorder %s153, %s156
    %p165 = scmp.eq.s32.totalorder %s15, 1
    %p166 = por %p164, %p165
    %p167 = scmp.ne.s32.totalorder %s156, %s157
    %p168 = scmp.eq.s32.totalorder %s15, 0
    %p169 = por %p167, %p168
    %p170 = scmp.ne.s32.totalorder %s156, %s157
    %p171 = scmp.eq.s32.totalorder %s16, 1
    %p172 = por %p170, %p171
    %p174 = scmp.ne.s32.totalorder %s157, %s173
    %p175 = scmp.eq.s32.totalorder %s16, 0
    %p176 = por %p174, %p175
    %p177 = scmp.le.s32.totalorder 1, %s10
    %p178 = scmp.lt.s32.totalorder %s10, 3
    %p179 = pnand %p177, %p178
    %p180 = pneg %p179
    // Predicated region
    $region9: #{blip_forward.37} parent=5 // pred_check
      _
    $region10: #{blip_forward.37} parent=5 // pred_check_branch
      %182 = sbr.rel (%p179) target = $region12
    $region11: #{blip_forward.37} parent=5 // pred_region
      %s183 = ssub.s32 %s10, 1
    $region12: #{blip_forward.37} parent=5 // pred_fallthru
      _
    %p184 = scmp.lt.s32.totalorder %s10, 2
    // Predicated region
    $region13: #{blip_forward.37} parent=5 // pred_check
      %p185 = pneg %p184
    $region14: #{blip_forward.37} parent=5 // pred_check_branch
      %187 = sbr.rel (%p185) target = $region16
    $region15: #{blip_forward.37} parent=5 // pred_region
      // Predicated region
      $region17: #{blip_forward.37} parent=15 // pred_check
        %p188 = pneg %p51
      $region18: #{blip_forward.37} parent=15 // pred_check_branch
        %190 = sbr.rel (%p188) target = $region20
      $region19: #{blip_forward.37} parent=15 // pred_region
        %p191 = scmp.lt.s32.totalorder %s17, 1
        %s192 = scalar_select %p191, %s17, 1
        %p193 = scmp.lt.s32.totalorder %s18, 0
        %s194 = scalar_select %p193, %s18, 0
        %s195 = sadd.s32 %s194, %s192
        %s196 = smul.addr %s195, 4
        %s197 = scalar_lea.vmem %s0, %s196
      $region20: #{blip_forward.37} parent=15 // pred_fallthru
        _
      // Predicated region
      $region21: #{blip_forward.37} parent=15 // pred_check
        %p198 = pneg %p79
      $region22: #{blip_forward.37} parent=15 // pred_check_branch
        %200 = sbr.rel (%p198) target = $region24
      $region23: #{blip_forward.37} parent=15 // pred_region
        %p201 = scmp.lt.s32.totalorder %s17, 1
        %s202 = scalar_select %p201, %s17, 1
        %p203 = scmp.lt.s32.totalorder %s19, 0
        %s204 = scalar_select %p203, %s19, 0
        %s205 = sadd.s32 %s204, %s202
        %s206 = smul.addr %s205, 4
        %s207 = scalar_lea.vmem %s1, %s206
      $region24: #{blip_forward.37} parent=15 // pred_fallthru
        _
      // Predicated region
      $region25: #{blip_forward.37} parent=15 // pred_check
        %p208 = pneg %p107
      $region26: #{blip_forward.37} parent=15 // pred_check_branch
        %210 = sbr.rel (%p208) target = $region28
      $region27: #{blip_forward.37} parent=15 // pred_region
        %p211 = scmp.lt.s32.totalorder %s17, 1
        %s212 = scalar_select %p211, %s17, 1
        %p213 = scmp.lt.s32.totalorder %s19, 0
        %s214 = scalar_select %p213, %s19, 0
        %s215 = sadd.s32 %s214, %s212
        %s216 = smul.addr %s215, 4
        %s217 = scalar_lea.vmem %s2, %s216
      $region28: #{blip_forward.37} parent=15 // pred_fallthru
        _
      // Predicated region
      $region29: #{blip_forward.37} parent=15 // pred_check
        %p218 = pneg %p135
      $region30: #{blip_forward.37} parent=15 // pred_check_branch
        %220 = sbr.rel (%p218) target = $region32
      $region31: #{blip_forward.37} parent=15 // pred_region
        %p221 = scmp.lt.s32.totalorder %s17, 1
        %s222 = scalar_select %p221, %s17, 1
        %p223 = scmp.lt.s32.totalorder %s19, 0
        %s224 = scalar_select %p223, %s19, 0
        %s225 = sadd.s32 %s224, %s222
        %s226 = scalar_lea.vmem %s3, %s225
      $region32: #{blip_forward.37} parent=15 // pred_fallthru
        _
    $region16: #{blip_forward.37} parent=5 // pred_fallthru
      _
    %p227 = scmp.le.s32.totalorder 1, %s10
    %p228 = scmp.lt.s32.totalorder %s10, 3
    %p229 = pnand %p227, %p228
    %p230 = pneg %p229
    // Predicated region
    $region33: #{blip_forward.37} parent=5 // pred_check
      _
    $region34: #{blip_forward.37} parent=5 // pred_check_branch
      %232 = sbr.rel (%p229) target = $region36
    $region35: #{blip_forward.37} parent=5 // pred_region
      %s233 = ssub.s32 %s10, 1
      %p234 = scmp.lt.s32.totalorder %s20, 1
      %s235 = scalar_select %p234, %s20, 1
      %p236 = scmp.lt.s32.totalorder %s21, 0
      %s237 = scalar_select %p236, %s21, 0
      %s238 = sadd.s32 %s237, %s235
      %s239 = smul.addr %s238, 4
      %s240 = scalar_lea.vmem %s0, %s239
      %p241 = pneg %p57
      %p242 = pneg %p54
      %p243 = scmp.lt.s32.totalorder %s20, 1
      %s244 = scalar_select %p243, %s20, 1
      %p245 = scmp.lt.s32.totalorder %s22, 0
      %s246 = scalar_select %p245, %s22, 0
      %s247 = sadd.s32 %s246, %s244
      %s248 = smul.addr %s247, 4
      %s249 = scalar_lea.vmem %s1, %s248
      %p250 = pneg %p85
      %p251 = pneg %p82
      %p252 = scmp.lt.s32.totalorder %s20, 1
      %s253 = scalar_select %p252, %s20, 1
      %p254 = scmp.lt.s32.totalorder %s22, 0
      %s255 = scalar_select %p254, %s22, 0
      %s256 = sadd.s32 %s255, %s253
      %s257 = smul.addr %s256, 4
      %s258 = scalar_lea.vmem %s2, %s257
      %p259 = pneg %p113
      %p260 = pneg %p110
      %p261 = scmp.lt.s32.totalorder %s20, 1
      %s262 = scalar_select %p261, %s20, 1
      %p263 = scmp.lt.s32.totalorder %s22, 0
      %s264 = scalar_select %p263, %s22, 0
      %s265 = sadd.s32 %s264, %s262
      %s266 = scalar_lea.vmem %s3, %s265
      %p267 = pneg %p141
      %p268 = pneg %p138
      %p269 = pneg %p169
      %p270 = pneg %p166
      %p271 = scmp.lt.s32.totalorder %s20, 1
      %s272 = scalar_select %p271, %s20, 1
      %p273 = scmp.lt.s32.totalorder %s21, 0
      %s274 = scalar_select %p273, %s21, 0
      %s275 = sadd.s32 %s274, %s272
      %s276 = smul.addr %s275, 4
      %s277 = scalar_lea.vmem %s4, %s276
      %p278 = scmp.lt.s32.totalorder %s20, 1
      %s279 = scalar_select %p278, %s20, 1
      %p280 = scmp.lt.s32.totalorder %s21, 0
      %s281 = scalar_select %p280, %s21, 0
      %s282 = sadd.s32 %s281, %s279
      %s283 = smul.addr %s282, 4
      %s284 = scalar_lea.vmem %s0, %s283
      %p285 = scmp.lt.s32.totalorder %s20, 1
      %s286 = scalar_select %p285, %s20, 1
      %p287 = scmp.lt.s32.totalorder %s22, 0
      %s288 = scalar_select %p287, %s22, 0
      %s289 = sadd.s32 %s288, %s286
      %s290 = smul.addr %s289, 4
      %s291 = scalar_lea.vmem %s1, %s290
      %p292 = scmp.lt.s32.totalorder %s20, 1
      %s293 = scalar_select %p292, %s20, 1
      %p294 = scmp.lt.s32.totalorder %s22, 0
      %s295 = scalar_select %p294, %s22, 0
      %s296 = sadd.s32 %s295, %s293
      %s297 = smul.addr %s296, 4
      %s298 = scalar_lea.vmem %s2, %s297
      %p299 = scmp.lt.s32.totalorder %s20, 1
      %s300 = scalar_select %p299, %s20, 1
      %p301 = scmp.lt.s32.totalorder %s22, 0
      %s302 = scalar_select %p301, %s22, 0
      %s303 = sadd.s32 %s302, %s300
      %s304 = scalar_lea.vmem %s3, %s303
      %p305 = scmp.lt.s32.totalorder %s20, 1
      %s306 = scalar_select %p305, %s20, 1
      %p307 = scmp.lt.s32.totalorder %s21, 0
      %s308 = scalar_select %p307, %s21, 0
      %s309 = sadd.s32 %s308, %s306
      %s310 = smul.addr %s309, 4
      %s311 = scalar_lea.vmem %s4, %s310
      %p313 = scmp.eq.s32.totalorder %s22, 0
      // Predicated region
      $region37: #{blip_forward.37} parent=35 // pred_check
        %p314 = pneg %p313
      $region38: #{blip_forward.37} parent=35 // pred_check_branch
        %316 = sbr.rel (%p314) target = $region40
      $region39: #{blip_forward.37} parent=35 // pred_region
        %vm317 = vcmask 7168
        %318 = vst.msk [vmem:[#allocation2] sm:$0xff] %vm317, -1e+30
        %319 = vst.msk [vmem:[#allocation2 + $0x8] sm:$0xff] %vm317, -1e+30
        %320 = vst.msk [vmem:[#allocation2 + $0x10] sm:$0xff] %vm317, -1e+30
        %321 = vst.msk [vmem:[#allocation2 + $0x18] sm:$0xff] %vm317, -1e+30
        %322 = vst.msk [vmem:[#allocation3] sm:$0xff] %vm317, 0.0
        %323 = vst.msk [vmem:[#allocation3 + $0x8] sm:$0xff] %vm317, 0.0
        %324 = vst.msk [vmem:[#allocation3 + $0x10] sm:$0xff] %vm317, 0.0
        %325 = vst.msk [vmem:[#allocation3 + $0x18] sm:$0xff] %vm317, 0.0
        %vm326 = vcmask 261120
        %327 = vst.msk [vmem:[#allocation4] sm:$0xff] %vm326, 0.0
      $region40: #{blip_forward.37} parent=35 // pred_fallthru
        _
      %v328 = vld [vmem:[%s284] sm:$0xf]
      %v329 = vld [vmem:[%s291] sm:$0xf]
      %v330 = vld [vmem:[%s298] sm:$0xf]
      %v331 = vld [vmem:[%s304] sm:$0x1]
      %vm332 = vcmask 64512
      %v334 = vsel %vm332, %v328, 0
      %v337 = vsel %vm332, %v329, 0
      %339 = vmatprep.subr.bf16.mxu0 0
      %340 = vmatpush1.bf16.xpose.msra.mxu0 %v337
      %341 = vmatprep.subr.bf16.mxu0 0
      %342 = vmatpush1.bf16.xpose.msra.mxu0 0
      %343 = vmatprep.subr.bf16.mxu0 0
      %344 = vmatpush1.bf16.xpose.msra.mxu0 0
      %345 = vmatprep.subr.bf16.mxu0 0
      %346 = vmatpush1.bf16.xpose.msra.mxu0 0
      %347 = vmatprep.subr.bf16.mxu0 0
      %348 = vmatpush1.bf16.xpose.msra.mxu0 0
      %349 = vmatprep.subr.bf16.mxu0 0
      %350 = vmatpush1.bf16.xpose.msra.mxu0 0
      %351 = vmatprep.subr.bf16.mxu0 0
      %352 = vmatpush1.bf16.xpose.msra.mxu0 0
      %353 = vmatprep.subr.bf16.mxu0 0
      %354 = vmatpush1.bf16.xpose.msra.mxu0 0
      %355 = vmatprep.subr.bf16.mxu0 0
      %356 = vmatpush1.bf16.xpose.msra.mxu0 0
      %357 = vmatprep.subr.bf16.mxu0 0
      %358 = vmatpush1.bf16.xpose.msra.mxu0 0
      %359 = vmatprep.subr.bf16.mxu0 0
      %360 = vmatpush1.bf16.xpose.msra.mxu0 0
      %361 = vmatprep.subr.bf16.mxu0 0
      %362 = vmatpush1.bf16.xpose.msra.mxu0 0
      %363 = vmatprep.subr.bf16.mxu0 0
      %364 = vmatpush1.bf16.xpose.msra.mxu0 0
      %365 = vmatprep.subr.bf16.mxu0 0
      %366 = vmatpush1.bf16.xpose.msra.mxu0 0
      %367 = vmatprep.subr.bf16.mxu0 0
      %368 = vmatpush1.bf16.xpose.msra.mxu0 0
      %369 = vmatprep.subr.bf16.mxu0 0
      %370 = vmatpush1.bf16.xpose.msra.mxu0 0
      %371 = vmatprep.mubr.bf16.mxu0 0
      %372 = vmatmul.mubr.bf16.gmra.mrb[0].mxu0 %v334
      %v373 = vpop.f32.mrb[0].mxu0
      %v374 = vadd.f32 0.0, %v373
      %v375 = vpop.f32.mrb[0].mxu0
      %v376 = vpop.f32.mrb[0].mxu0
      %v377 = vpop.f32.mrb[0].mxu0
      %378 = vdwg.mxu0
      %v379 = vmul.f32 %v374, 0.35355338
      %v381 = vlaneseq
      %v382 = vshrl.u32 %v381, 7
      %v383 = vsub.s32 0, %v382
      %v384 = vrot.slane %v331, %v383
      %v386 = vadd.f32 %v379, %v384
      %v387 = vld [vmem:[#allocation2] sm:$0xff]
      %v388 = vsel %vm332, %v386, -inf
      %389 = vmax.xlane.f32.xlu0 %v388
      %v390 = vpop.xlane.xlu0 %389
      %v391 = vmax.f32 %v387, %v390
      %v392 = vsub.f32 %v387, %v391
      %v393 = vmul.f32 %v392, 1.442695
      %v394 = vpow.pop %v393
      %396 = vset.pattern.permute.xlu0 0
      %397 = vperm.xlu0 %396, %v391
      %v398 = vpop.permute.xlu0 %397
      %v400 = vsub.f32 %v386, %v398
      %v401 = vmul.f32 %v400, 1.442695
      %v402 = vpow.pop %v401
      %v403 = vld [vmem:[#allocation3] sm:$0xff]
      %v404 = vmul.f32 %v394, %v403
      %v405 = vsel %vm332, %v402, 0.0
      %406 = vadd.xlane.f32.xlu0 %v405
      %v407 = vpop.xlane.xlu0 %406
      %v408 = vadd.f32 %v404, %v407
      %vm409 = vcmask 7168
      %410 = vst.msk [vmem:[#allocation3] sm:$0xff] %vm409, %v408
      %v411 = vpack.c.bf16 %v402, %v402
      %v413 = vsel %vm332, %v411, 0
      %vm415 = vcmask 1043456
      %v417 = vsel %vm415, %v330, 0
      %419 = vmatprep.subr.bf16.mxu0 0
      %420 = vmatpush1.bf16.msra.mxu0 %v417
      %421 = vmatprep.subr.bf16.mxu0 0
      %422 = vmatpush1.bf16.msra.mxu0 0
      %423 = vmatprep.subr.bf16.mxu0 0
      %424 = vmatpush1.bf16.msra.mxu0 0
      %425 = vmatprep.subr.bf16.mxu0 0
      %426 = vmatpush1.bf16.msra.mxu0 0
      %427 = vmatprep.subr.bf16.mxu0 0
      %428 = vmatpush1.bf16.msra.mxu0 0
      %429 = vmatprep.subr.bf16.mxu0 0
      %430 = vmatpush1.bf16.msra.mxu0 0
      %431 = vmatprep.subr.bf16.mxu0 0
      %432 = vmatpush1.bf16.msra.mxu0 0
      %433 = vmatprep.subr.bf16.mxu0 0
      %434 = vmatpush1.bf16.msra.mxu0 0
      %435 = vmatprep.subr.bf16.mxu0 0
      %436 = vmatpush1.bf16.msra.mxu0 0
      %437 = vmatprep.subr.bf16.mxu0 0
      %438 = vmatpush1.bf16.msra.mxu0 0
      %439 = vmatprep.subr.bf16.mxu0 0
      %440 = vmatpush1.bf16.msra.mxu0 0
      %441 = vmatprep.subr.bf16.mxu0 0
      %442 = vmatpush1.bf16.msra.mxu0 0
      %443 = vmatprep.subr.bf16.mxu0 0
      %444 = vmatpush1.bf16.msra.mxu0 0
      %445 = vmatprep.subr.bf16.mxu0 0
      %446 = vmatpush1.bf16.msra.mxu0 0
      %447 = vmatprep.subr.bf16.mxu0 0
      %448 = vmatpush1.bf16.msra.mxu0 0
      %449 = vmatprep.subr.bf16.mxu0 0
      %450 = vmatpush1.bf16.msra.mxu0 0
      %451 = vmatprep.mubr.bf16.mxu0 0
      %452 = vmatmul.mubr.bf16.gmra.mrb[0].mxu0 %v413
      %v453 = vpop.f32.mrb[0].mxu0
      %v454 = vadd.f32 0.0, %v453
      %v455 = vpop.f32.mrb[0].mxu0
      %v456 = vpop.f32.mrb[0].mxu0
      %v457 = vpop.f32.mrb[0].mxu0
      %458 = vdwg.mxu0
      %v459 = vld [vmem:[#allocation4] sm:$0xff]
      %461 = vset.pattern.permute.xlu0 0
      %462 = vperm.xlu0 %461, %v394
      %v463 = vpop.permute.xlu0 %462
      %v465 = vmul.f32 %v463, %v459
      %v466 = vadd.f32 %v465, %v454
      %467 = vst.msk [vmem:[#allocation4] sm:$0xff] %vm332, %v466
      %468 = vst.msk [vmem:[#allocation2] sm:$0xff] %vm409, %v391
      %v470 = vunpack.c.l.b16 %v328
      %v471 = vpack.c.b16 %v470, %v470
      %472 = vrot.lane.b32.xlu0 %v471, 120
      %v473 = vpop.permute.xlu0 %472
      %v475 = vunpack.c.l.b16 %v329
      %v476 = vpack.c.b16 %v475, %v475
      %477 = vrot.lane.b32.xlu0 %v476, 120
      %v478 = vpop.permute.xlu0 %477
      %v480 = vsel %vm332, %v473, 0
      %v483 = vsel %vm332, %v478, 0
      %485 = vmatprep.subr.bf16.mxu0 0
      %486 = vmatpush1.bf16.xpose.msra.mxu0 %v483
      %487 = vmatprep.subr.bf16.mxu0 0
      %488 = vmatpush1.bf16.xpose.msra.mxu0 0
      %489 = vmatprep.subr.bf16.mxu0 0
      %490 = vmatpush1.bf16.xpose.msra.mxu0 0
      %491 = vmatprep.subr.bf16.mxu0 0
      %492 = vmatpush1.bf16.xpose.msra.mxu0 0
      %493 = vmatprep.subr.bf16.mxu0 0
      %494 = vmatpush1.bf16.xpose.msra.mxu0 0
      %495 = vmatprep.subr.bf16.mxu0 0
      %496 = vmatpush1.bf16.xpose.msra.mxu0 0
      %497 = vmatprep.subr.bf16.mxu0 0
      %498 = vmatpush1.bf16.xpose.msra.mxu0 0
      %499 = vmatprep.subr.bf16.mxu0 0
      %500 = vmatpush1.bf16.xpose.msra.mxu0 0
      %501 = vmatprep.subr.bf16.mxu0 0
      %502 = vmatpush1.bf16.xpose.msra.mxu0 0
      %503 = vmatprep.subr.bf16.mxu0 0
      %504 = vmatpush1.bf16.xpose.msra.mxu0 0
      %505 = vmatprep.subr.bf16.mxu0 0
      %506 = vmatpush1.bf16.xpose.msra.mxu0 0
      %507 = vmatprep.subr.bf16.mxu0 0
      %508 = vmatpush1.bf16.xpose.msra.mxu0 0
      %509 = vmatprep.subr.bf16.mxu0 0
      %510 = vmatpush1.bf16.xpose.msra.mxu0 0
      %511 = vmatprep.subr.bf16.mxu0 0
      %512 = vmatpush1.bf16.xpose.msra.mxu0 0
      %513 = vmatprep.subr.bf16.mxu0 0
      %514 = vmatpush1.bf16.xpose.msra.mxu0 0
      %515 = vmatprep.subr.bf16.mxu0 0
      %516 = vmatpush1.bf16.xpose.msra.mxu0 0
      %517 = vmatprep.mubr.bf16.mxu0 0
      %518 = vmatmul.mubr.bf16.gmra.mrb[0].mxu0 %v480
      %v519 = vpop.f32.mrb[0].mxu0
      %v520 = vadd.f32 0.0, %v519
      %v521 = vpop.f32.mrb[0].mxu0
      %v522 = vpop.f32.mrb[0].mxu0
      %v523 = vpop.f32.mrb[0].mxu0
      %524 = vdwg.mxu0
      %v525 = vmul.f32 %v520, 0.35355338
      %v526 = vadd.f32 %v525, %v384
      %s527 = scalar_lea.vmem [#allocation2], 8
      %v528 = vld [vmem:[%s527] sm:$0xff]
      %v529 = vsel %vm332, %v526, -inf
      %530 = vmax.xlane.f32.xlu0 %v529
      %v531 = vpop.xlane.xlu0 %530
      %v532 = vmax.f32 %v528, %v531
      %v533 = vsub.f32 %v528, %v532
      %v534 = vmul.f32 %v533, 1.442695
      %v535 = vpow.pop %v534
      %537 = vset.pattern.permute.xlu0 0
      %538 = vperm.xlu0 %537, %v532
      %v539 = vpop.permute.xlu0 %538
      %v541 = vsub.f32 %v526, %v539
      %v542 = vmul.f32 %v541, 1.442695
      %v543 = vpow.pop %v542
      %s544 = scalar_lea.vmem [#allocation3], 8
      %v545 = vld [vmem:[%s544] sm:$0xff]
      %v546 = vmul.f32 %v535, %v545
      %v547 = vsel %vm332, %v543, 0.0
      %548 = vadd.xlane.f32.xlu0 %v547
      %v549 = vpop.xlane.xlu0 %548
      %v550 = vadd.f32 %v546, %v549
      %551 = vst.msk [vmem:[%s544] sm:$0xff] %vm409, %v550
      %v552 = vpack.c.bf16 %v543, %v543
      %v554 = vunpack.c.l.b16 %v330
      %v555 = vpack.c.b16 %v554, %v554
      %556 = vrot.lane.b32.xlu0 %v555, 120
      %v557 = vpop.permute.xlu0 %556
      %v559 = vsel %vm332, %v552, 0
      %v562 = vsel %vm415, %v557, 0
      %564 = vmatprep.subr.bf16.mxu0 0
      %565 = vmatpush1.bf16.msra.mxu0 %v562
      %566 = vmatprep.subr.bf16.mxu0 0
      %567 = vmatpush1.bf16.msra.mxu0 0
      %568 = vmatprep.subr.bf16.mxu0 0
      %569 = vmatpush1.bf16.msra.mxu0 0
      %570 = vmatprep.subr.bf16.mxu0 0
      %571 = vmatpush1.bf16.msra.mxu0 0
      %572 = vmatprep.subr.bf16.mxu0 0
      %573 = vmatpush1.bf16.msra.mxu0 0
      %574 = vmatprep.subr.bf16.mxu0 0
      %575 = vmatpush1.bf16.msra.mxu0 0
      %576 = vmatprep.subr.bf16.mxu0 0
      %577 = vmatpush1.bf16.msra.mxu0 0
      %578 = vmatprep.subr.bf16.mxu0 0
      %579 = vmatpush1.bf16.msra.mxu0 0
      %580 = vmatprep.subr.bf16.mxu0 0
      %581 = vmatpush1.bf16.msra.mxu0 0
      %582 = vmatprep.subr.bf16.mxu0 0
      %583 = vmatpush1.bf16.msra.mxu0 0
      %584 = vmatprep.subr.bf16.mxu0 0
      %585 = vmatpush1.bf16.msra.mxu0 0
      %586 = vmatprep.subr.bf16.mxu0 0
      %587 = vmatpush1.bf16.msra.mxu0 0
      %588 = vmatprep.subr.bf16.mxu0 0
      %589 = vmatpush1.bf16.msra.mxu0 0
      %590 = vmatprep.subr.bf16.mxu0 0
      %591 = vmatpush1.bf16.msra.mxu0 0
      %592 = vmatprep.subr.bf16.mxu0 0
      %593 = vmatpush1.bf16.msra.mxu0 0
      %594 = vmatprep.subr.bf16.mxu0 0
      %595 = vmatpush1.bf16.msra.mxu0 0
      %596 = vmatprep.mubr.bf16.mxu0 0
      %597 = vmatmul.mubr.bf16.gmra.mrb[0].mxu0 %v559
      %v598 = vpop.f32.mrb[0].mxu0
      %v599 = vadd.f32 0.0, %v598
      %v600 = vpop.f32.mrb[0].mxu0
      %v601 = vpop.f32.mrb[0].mxu0
      %v602 = vpop.f32.mrb[0].mxu0
      %603 = vdwg.mxu0
      %v604 = vld [vmem:[#allocation4] sm:$0xff]
      %606 = vset.pattern.permute.xlu0 0
      %607 = vperm.xlu0 %606, %v535
      %v608 = vpop.permute.xlu0 %607
      %v610 = vmul.f32 %v608, %v604
      %612 = vrot.lane.b32.xlu0 %v599, 8
      %v613 = vpop.permute.xlu0 %612
      %v615 = vadd.f32 %v610, %v613
      %vm616 = vcmask 130112
      %617 = vst.msk [vmem:[#allocation4] sm:$0xff] %vm616, %v615
      %618 = vst.msk [vmem:[%s527] sm:$0xff] %vm409, %v532
      %619 = vrot.lane.b32.xlu0 %v471, 112
      %v620 = vpop.permute.xlu0 %619
      %621 = vrot.lane.b32.xlu0 %v476, 112
      %v622 = vpop.permute.xlu0 %621
      %v624 = vsel %vm332, %v620, 0
      %v627 = vsel %vm332, %v622, 0
      %629 = vmatprep.subr.bf16.mxu0 0
      %630 = vmatpush1.bf16.xpose.msra.mxu0 %v627
      %631 = vmatprep.subr.bf16.mxu0 0
      %632 = vmatpush1.bf16.xpose.msra.mxu0 0
      %633 = vmatprep.subr.bf16.mxu0 0
      %634 = vmatpush1.bf16.xpose.msra.mxu0 0
      %635 = vmatprep.subr.bf16.mxu0 0
      %636 = vmatpush1.bf16.xpose.msra.mxu0 0
      %637 = vmatprep.subr.bf16.mxu0 0
      %638 = vmatpush1.bf16.xpose.msra.mxu0 0
      %639 = vmatprep.subr.bf16.mxu0 0
      %640 = vmatpush1.bf16.xpose.msra.mxu0 0
      %641 = vmatprep.subr.bf16.mxu0 0
      %642 = vmatpush1.bf16.xpose.msra.mxu0 0
      %643 = vmatprep.subr.bf16.mxu0 0
      %644 = vmatpush1.bf16.xpose.msra.mxu0 0
      %645 = vmatprep.subr.bf16.mxu0 0
      %646 = vmatpush1.bf16.xpose.msra.mxu0 0
      %647 = vmatprep.subr.bf16.mxu0 0
      %648 = vmatpush1.bf16.xpose.msra.mxu0 0
      %649 = vmatprep.subr.bf16.mxu0 0
      %650 = vmatpush1.bf16.xpose.msra.mxu0 0
      %651 = vmatprep.subr.bf16.mxu0 0
      %652 = vmatpush1.bf16.xpose.msra.mxu0 0
      %653 = vmatprep.subr.bf16.mxu0 0
      %654 = vmatpush1.bf16.xpose.msra.mxu0 0
      %655 = vmatprep.subr.bf16.mxu0 0
      %656 = vmatpush1.bf16.xpose.msra.mxu0 0
      %657 = vmatprep.subr.bf16.mxu0 0
      %658 = vmatpush1.bf16.xpose.msra.mxu0 0
      %659 = vmatprep.subr.bf16.mxu0 0
      %660 = vmatpush1.bf16.xpose.msra.mxu0 0
      %661 = vmatprep.mubr.bf16.mxu0 0
      %662 = vmatmul.mubr.bf16.gmra.mrb[0].mxu0 %v624
      %v663 = vpop.f32.mrb[0].mxu0
      %v664 = vadd.f32 0.0, %v663
      %v665 = vpop.f32.mrb[0].mxu0
      %v666 = vpop.f32.mrb[0].mxu0
      %v667 = vpop.f32.mrb[0].mxu0
      %668 = vdwg.mxu0
      %v669 = vmul.f32 %v664, 0.35355338
      %v670 = vadd.f32 %v669, %v384
      %s671 = scalar_lea.vmem [#allocation2], 16
      %v672 = vld [vmem:[%s671] sm:$0xff]
      %v673 = vsel %vm332, %v670, -inf
      %674 = vmax.xlane.f32.xlu0 %v673
      %v675 = vpop.xlane.xlu0 %674
      %v676 = vmax.f32 %v672, %v675
      %v677 = vsub.f32 %v672, %v676
      %v678 = vmul.f32 %v677, 1.442695
      %v679 = vpow.pop %v678
      %681 = vset.pattern.permute.xlu0 0
      %682 = vperm.xlu0 %681, %v676
      %v683 = vpop.permute.xlu0 %682
      %v685 = vsub.f32 %v670, %v683
      %v686 = vmul.f32 %v685, 1.442695
      %v687 = vpow.pop %v686
      %s688 = scalar_lea.vmem [#allocation3], 16
      %v689 = vld [vmem:[%s688] sm:$0xff]
      %v690 = vmul.f32 %v679, %v689
      %v691 = vsel %vm332, %v687, 0.0
      %692 = vadd.xlane.f32.xlu0 %v691
      %v693 = vpop.xlane.xlu0 %692
      %v694 = vadd.f32 %v690, %v693
      %695 = vst.msk [vmem:[%s688] sm:$0xff] %vm409, %v694
      %v696 = vpack.c.bf16 %v687, %v687
      %697 = vrot.lane.b32.xlu0 %v555, 112
      %v698 = vpop.permute.xlu0 %697
      %v700 = vsel %vm332, %v696, 0
      %v703 = vsel %vm415, %v698, 0
      %705 = vmatprep.subr.bf16.mxu0 0
      %706 = vmatpush1.bf16.msra.mxu0 %v703
      %707 = vmatprep.subr.bf16.mxu0 0
      %708 = vmatpush1.bf16.msra.mxu0 0
      %709 = vmatprep.subr.bf16.mxu0 0
      %710 = vmatpush1.bf16.msra.mxu0 0
      %711 = vmatprep.subr.bf16.mxu0 0
      %712 = vmatpush1.bf16.msra.mxu0 0
      %713 = vmatprep.subr.bf16.mxu0 0
      %714 = vmatpush1.bf16.msra.mxu0 0
      %715 = vmatprep.subr.bf16.mxu0 0
      %716 = vmatpush1.bf16.msra.mxu0 0
      %717 = vmatprep.subr.bf16.mxu0 0
      %718 = vmatpush1.bf16.msra.mxu0 0
      %719 = vmatprep.subr.bf16.mxu0 0
      %720 = vmatpush1.bf16.msra.mxu0 0
      %721 = vmatprep.subr.bf16.mxu0 0
      %722 = vmatpush1.bf16.msra.mxu0 0
      %723 = vmatprep.subr.bf16.mxu0 0
      %724 = vmatpush1.bf16.msra.mxu0 0
      %725 = vmatprep.subr.bf16.mxu0 0
      %726 = vmatpush1.bf16.msra.mxu0 0
      %727 = vmatprep.subr.bf16.mxu0 0
      %728 = vmatpush1.bf16.msra.mxu0 0
      %729 = vmatprep.subr.bf16.mxu0 0
      %730 = vmatpush1.bf16.msra.mxu0 0
      %731 = vmatprep.subr.bf16.mxu0 0
      %732 = vmatpush1.bf16.msra.mxu0 0
      %733 = vmatprep.subr.bf16.mxu0 0
      %734 = vmatpush1.bf16.msra.mxu0 0
      %735 = vmatprep.subr.bf16.mxu0 0
      %736 = vmatpush1.bf16.msra.mxu0 0
      %737 = vmatprep.mubr.bf16.mxu0 0
      %738 = vmatmul.mubr.bf16.gmra.mrb[0].mxu0 %v700
      %v739 = vpop.f32.mrb[0].mxu0
      %v740 = vadd.f32 0.0, %v739
      %v741 = vpop.f32.mrb[0].mxu0
      %v742 = vpop.f32.mrb[0].mxu0
      %v743 = vpop.f32.mrb[0].mxu0
      %744 = vdwg.mxu0
      %v745 = vld [vmem:[#allocation4] sm:$0xff]
      %747 = vset.pattern.permute.xlu0 0
      %748 = vperm.xlu0 %747, %v679
      %v749 = vpop.permute.xlu0 %748
      %v751 = vmul.f32 %v749, %v745
      %753 = vrot.lane.b32.xlu0 %v740, 16
      %v754 = vpop.permute.xlu0 %753
      %v756 = vadd.f32 %v751, %v754
      %vm757 = vcmask 195712
      %758 = vst.msk [vmem:[#allocation4] sm:$0xff] %vm757, %v756
      %759 = vst.msk [vmem:[%s671] sm:$0xff] %vm409, %v676
      %760 = vrot.lane.b32.xlu0 %v471, 104
      %v761 = vpop.permute.xlu0 %760
      %762 = vrot.lane.b32.xlu0 %v476, 104
      %v763 = vpop.permute.xlu0 %762
      %v765 = vsel %vm332, %v761, 0
      %v768 = vsel %vm332, %v763, 0
      %770 = vmatprep.subr.bf16.mxu0 0
      %771 = vmatpush1.bf16.xpose.msra.mxu0 %v768
      %772 = vmatprep.subr.bf16.mxu0 0
      %773 = vmatpush1.bf16.xpose.msra.mxu0 0
      %774 = vmatprep.subr.bf16.mxu0 0
      %775 = vmatpush1.bf16.xpose.msra.mxu0 0
      %776 = vmatprep.subr.bf16.mxu0 0
      %777 = vmatpush1.bf16.xpose.msra.mxu0 0
      %778 = vmatprep.subr.bf16.mxu0 0
      %779 = vmatpush1.bf16.xpose.msra.mxu0 0
      %780 = vmatprep.subr.bf16.mxu0 0
      %781 = vmatpush1.bf16.xpose.msra.mxu0 0
      %782 = vmatprep.subr.bf16.mxu0 0
      %783 = vmatpush1.bf16.xpose.msra.mxu0 0
      %784 = vmatprep.subr.bf16.mxu0 0
      %785 = vmatpush1.bf16.xpose.msra.mxu0 0
      %786 = vmatprep.subr.bf16.mxu0 0
      %787 = vmatpush1.bf16.xpose.msra.mxu0 0
      %788 = vmatprep.subr.bf16.mxu0 0
      %789 = vmatpush1.bf16.xpose.msra.mxu0 0
      %790 = vmatprep.subr.bf16.mxu0 0
      %791 = vmatpush1.bf16.xpose.msra.mxu0 0
      %792 = vmatprep.subr.bf16.mxu0 0
      %793 = vmatpush1.bf16.xpose.msra.mxu0 0
      %794 = vmatprep.subr.bf16.mxu0 0
      %795 = vmatpush1.bf16.xpose.msra.mxu0 0
      %796 = vmatprep.subr.bf16.mxu0 0
      %797 = vmatpush1.bf16.xpose.msra.mxu0 0
      %798 = vmatprep.subr.bf16.mxu0 0
      %799 = vmatpush1.bf16.xpose.msra.mxu0 0
      %800 = vmatprep.subr.bf16.mxu0 0
      %801 = vmatpush1.bf16.xpose.msra.mxu0 0
      %802 = vmatprep.mubr.bf16.mxu0 0
      %803 = vmatmul.mubr.bf16.gmra.mrb[0].mxu0 %v765
      %v804 = vpop.f32.mrb[0].mxu0
      %v805 = vadd.f32 0.0, %v804
      %v806 = vpop.f32.mrb[0].mxu0
      %v807 = vpop.f32.mrb[0].mxu0
      %v808 = vpop.f32.mrb[0].mxu0
      %809 = vdwg.mxu0
      %v810 = vmul.f32 %v805, 0.35355338
      %v811 = vadd.f32 %v810, %v384
      %s812 = scalar_lea.vmem [#allocation2], 24
      %v813 = vld [vmem:[%s812] sm:$0xff]
      %v814 = vsel %vm332, %v811, -inf
      %815 = vmax.xlane.f32.xlu0 %v814
      %v816 = vpop.xlane.xlu0 %815
      %v817 = vmax.f32 %v813, %v816
      %v818 = vsub.f32 %v813, %v817
      %v819 = vmul.f32 %v818, 1.442695
      %v820 = vpow.pop %v819
      %822 = vset.pattern.permute.xlu0 0
      %823 = vperm.xlu0 %822, %v817
      %v824 = vpop.permute.xlu0 %823
      %v826 = vsub.f32 %v811, %v824
      %v827 = vmul.f32 %v826, 1.442695
      %v828 = vpow.pop %v827
      %s829 = scalar_lea.vmem [#allocation3], 24
      %v830 = vld [vmem:[%s829] sm:$0xff]
      %v831 = vmul.f32 %v820, %v830
      %v832 = vsel %vm332, %v828, 0.0
      %833 = vadd.xlane.f32.xlu0 %v832
      %v834 = vpop.xlane.xlu0 %833
      %v835 = vadd.f32 %v831, %v834
      %836 = vst.msk [vmem:[%s829] sm:$0xff] %vm409, %v835
      %v837 = vpack.c.bf16 %v828, %v828
      %838 = vrot.lane.b32.xlu0 %v555, 104
      %v839 = vpop.permute.xlu0 %838
      %v841 = vsel %vm332, %v837, 0
      %v844 = vsel %vm415, %v839, 0
      %846 = vmatprep.subr.bf16.mxu0 0
      %847 = vmatpush1.bf16.msra.mxu0 %v844
      %848 = vmatprep.subr.bf16.mxu0 0
      %849 = vmatpush1.bf16.msra.mxu0 0
      %850 = vmatprep.subr.bf16.mxu0 0
      %851 = vmatpush1.bf16.msra.mxu0 0
      %852 = vmatprep.subr.bf16.mxu0 0
      %853 = vmatpush1.bf16.msra.mxu0 0
      %854 = vmatprep.subr.bf16.mxu0 0
      %855 = vmatpush1.bf16.msra.mxu0 0
      %856 = vmatprep.subr.bf16.mxu0 0
      %857 = vmatpush1.bf16.msra.mxu0 0
      %858 = vmatprep.subr.bf16.mxu0 0
      %859 = vmatpush1.bf16.msra.mxu0 0
      %860 = vmatprep.subr.bf16.mxu0 0
      %861 = vmatpush1.bf16.msra.mxu0 0
      %862 = vmatprep.subr.bf16.mxu0 0
      %863 = vmatpush1.bf16.msra.mxu0 0
      %864 = vmatprep.subr.bf16.mxu0 0
      %865 = vmatpush1.bf16.msra.mxu0 0
      %866 = vmatprep.subr.bf16.mxu0 0
      %867 = vmatpush1.bf16.msra.mxu0 0
      %868 = vmatprep.subr.bf16.mxu0 0
      %869 = vmatpush1.bf16.msra.mxu0 0
      %870 = vmatprep.subr.bf16.mxu0 0
      %871 = vmatpush1.bf16.msra.mxu0 0
      %872 = vmatprep.subr.bf16.mxu0 0
      %873 = vmatpush1.bf16.msra.mxu0 0
      %874 = vmatprep.subr.bf16.mxu0 0
      %875 = vmatpush1.bf16.msra.mxu0 0
      %876 = vmatprep.subr.bf16.mxu0 0
      %877 = vmatpush1.bf16.msra.mxu0 0
      %878 = vmatprep.mubr.bf16.mxu0 0
      %879 = vmatmul.mubr.bf16.gmra.mrb[0].mxu0 %v841
      %v880 = vpop.f32.mrb[0].mxu0
      %v881 = vadd.f32 0.0, %v880
      %v882 = vpop.f32.mrb[0].mxu0
      %v883 = vpop.f32.mrb[0].mxu0
      %v884 = vpop.f32.mrb[0].mxu0
      %885 = vdwg.mxu0
      %v886 = vld [vmem:[#allocation4] sm:$0xff]
      %888 = vset.pattern.permute.xlu0 0
      %889 = vperm.xlu0 %888, %v820
      %v890 = vpop.permute.xlu0 %889
      %v892 = vmul.f32 %v890, %v886
      %894 = vrot.lane.b32.xlu0 %v881, 24
      %v895 = vpop.permute.xlu0 %894
      %v897 = vadd.f32 %v892, %v895
      %vm898 = vcmask 261312
      %899 = vst.msk [vmem:[#allocation4] sm:$0xff] %vm898, %v897
      %900 = vst.msk [vmem:[%s812] sm:$0xff] %vm409, %v817
      // Predicated region
      $region41: #{blip_forward.37} parent=35 // pred_check
        %p901 = pneg %p313
      $region42: #{blip_forward.37} parent=35 // pred_check_branch
        %903 = sbr.rel (%p901) target = $region44
      $region43: #{blip_forward.37} parent=35 // pred_region
        %v904 = vld [vmem:[#allocation3] sm:$0xff]
        %v905 = vrcp.pop %v904
        %v906 = vld [vmem:[#allocation4] sm:$0xff]
        %908 = vset.pattern.permute.xlu0 0
        %909 = vperm.xlu0 %908, %v905
        %v910 = vpop.permute.xlu0 %909
        %v912 = vmul.f32 %v906, %v910
        %v913 = vpack.c.bf16 %v912, %v912
        %vm914 = vcmask 60416
        %915 = vst.msk [vmem:[%s311] sm:$0xf] %vm914, %v913
        %v916 = vld [vmem:[%s544] sm:$0xff]
        %v917 = vrcp.pop %v916
        %v918 = vld [vmem:[#allocation4] sm:$0xff]
        %920 = vset.pattern.permute.xlu0 0
        %921 = vperm.xlu0 %920, %v917
        %v922 = vpop.permute.xlu0 %921
        %v924 = vmul.f32 %v918, %v922
        %v925 = vpack.c.bf16 %v924, %v924
        %vm926 = vcmask 126016
        %927 = vst.msk [vmem:[%s311] sm:$0xf] %vm926, %v925
        %v928 = vld [vmem:[%s688] sm:$0xff]
        %v929 = vrcp.pop %v928
        %v930 = vld [vmem:[#allocation4] sm:$0xff]
        %932 = vset.pattern.permute.xlu0 0
        %933 = vperm.xlu0 %932, %v929
        %v934 = vpop.permute.xlu0 %933
        %v936 = vmul.f32 %v930, %v934
        %v937 = vpack.c.bf16 %v936, %v936
        %vm938 = vcmask 191616
        %939 = vst.msk [vmem:[%s311] sm:$0xf] %vm938, %v937
        %v940 = vld [vmem:[%s829] sm:$0xff]
        %v941 = vrcp.pop %v940
        %v942 = vld [vmem:[#allocation4] sm:$0xff]
        %944 = vset.pattern.permute.xlu0 0
        %945 = vperm.xlu0 %944, %v941
        %v946 = vpop.permute.xlu0 %945
        %v948 = vmul.f32 %v942, %v946
        %v949 = vpack.c.bf16 %v948, %v948
        %vm950 = vcmask 257216
        %951 = vst.msk [vmem:[%s311] sm:$0xf] %vm950, %v949
      $region44: #{blip_forward.37} parent=35 // pred_fallthru
        _
      %p952 = scmp.lt.s32.totalorder %s20, 1
      %s953 = scalar_select %p952, %s20, 1
      %p954 = scmp.lt.s32.totalorder %s21, 0
      %s955 = scalar_select %p954, %s21, 0
      %s956 = sadd.s32 %s955, %s953
      %s957 = smul.addr %s956, 4
      %s958 = scalar_lea.vmem %s4, %s957
      // Predicated region
      $region45: #{blip_forward.37} parent=35 // pred_check
        %p959 = pneg %p166
      $region46: #{blip_forward.37} parent=35 // pred_check_branch
        %961 = sbr.rel (%p959) target = $region48
      $region47: #{blip_forward.37} parent=35 // pred_region
        _
      $region48: #{blip_forward.37} parent=35 // pred_fallthru
        _
    $region36: #{blip_forward.37} parent=5 // pred_fallthru
      _
    %p962 = scmp.le.s32.totalorder 2, %s10
    // Predicated region
    $region49: #{blip_forward.37} parent=5 // pred_check
      %p963 = pneg %p962
    $region50: #{blip_forward.37} parent=5 // pred_check_branch
      %965 = sbr.rel (%p963) target = $region52
    $region51: #{blip_forward.37} parent=5 // pred_region
      %s966 = ssub.s32 %s10, 2
      // Predicated region
      $region53: #{blip_forward.37} parent=51 // pred_check
        %p967 = pneg %p172
      $region54: #{blip_forward.37} parent=51 // pred_check_branch
        %969 = sbr.rel (%p967) target = $region56
      $region55: #{blip_forward.37} parent=51 // pred_region
        %p970 = scmp.lt.s32.totalorder %s23, 1
        %s971 = scalar_select %p970, %s23, 1
        %p972 = scmp.lt.s32.totalorder %s24, 0
        %s973 = scalar_select %p972, %s24, 0
        %s974 = sadd.s32 %s973, %s971
        %s975 = smul.addr %s974, 4
        %s976 = scalar_lea.vmem %s4, %s975
      $region56: #{blip_forward.37} parent=51 // pred_fallthru
        _
    $region52: #{blip_forward.37} parent=5 // pred_fallthru
      _
  $region6: #{blip_forward.37} parent=0 // loop_footer
    %s14 = sadd.s32 1, %s10
  $region7: #{blip_forward.37} parent=0 // loop_footer_branch
    %9 = sbr.rel target = $region3
  $region8: #{blip_forward.37} parent=0 // loop_exit
    _

// kernel: blip_forward.54
$region0: #{blip_forward.54}
  #allocation0 [shape = 'u32[]', space=smem, size = 0x4, offset = 0x4, fixed_abs, tag = 'smem constant byte address 0x4 - core index']
  #allocation1 [shape = 'u32[144,128]{1,0:T(1,128)}', space=vmem, size = 0x12000, scoped, tag = 'internal scratch']
  #allocation2 [shape = 'f32[16,64]{1,0:T(8,128)}', space=vmem, size = 0x2000, scoped, tag = 'scratch operand']
  %s0 = inlined_call_operand.vmem [shape: bf16[16,32], index: 0, kind: input, shape index: {}]
  %s1 = inlined_call_operand.vmem [shape: bf16[32,64], index: 1, kind: input, shape index: {}]
  %s2 = inlined_call_operand.vmem [shape: bf16[1,64], index: 2, kind: input, shape index: {}]
  %s3 = inlined_call_operand.vmem [shape: bf16[16,64], index: 3, kind: output, shape index: {}]
  %s4 = sld [smem:[#allocation0]]
  $region30: #{blip_forward.54} parent=0
    _
  %s6 = ssub.s32 1, %s4
  %s7 = scalar_select 0, %s6, %s4
  // Predicated region
  $region2: #{blip_forward.54} parent=0 // pred_check
    _
  $region3: #{blip_forward.54} parent=0 // pred_check_branch
    %9 = sbr.rel (0) target = $region5
  $region4: #{blip_forward.54} parent=0 // pred_region
    _
  $region5: #{blip_forward.54} parent=0 // pred_fallthru
    _
  // Predicated region
  $region6: #{blip_forward.54} parent=0 // pred_check
    _
  $region7: #{blip_forward.54} parent=0 // pred_check_branch
    %11 = sbr.rel (0) target = $region9
  $region8: #{blip_forward.54} parent=0 // pred_region
    _
  $region9: #{blip_forward.54} parent=0 // pred_fallthru
    _
  // Predicated region
  $region10: #{blip_forward.54} parent=0 // pred_check
    _
  $region11: #{blip_forward.54} parent=0 // pred_check_branch
    %13 = sbr.rel (0) target = $region13
  $region12: #{blip_forward.54} parent=0 // pred_region
    _
  $region13: #{blip_forward.54} parent=0 // pred_fallthru
    _
  %p15 = scmp.eq.s32.totalorder 0, 0
  // Predicated region
  $region14: #{blip_forward.54} parent=0 // pred_check
    %p16 = pneg %p15
  $region15: #{blip_forward.54} parent=0 // pred_check_branch
    %18 = sbr.rel (%p16) target = $region17
  $region16: #{blip_forward.54} parent=0 // pred_region
    %vm19 = vcmask 523264
    %20 = vst.msk [vmem:[#allocation2] sm:$0xff] %vm19, 0.0
    %21 = vst.msk [vmem:[#allocation2 + $0x8] sm:$0xff] %vm19, 0.0
  $region17: #{blip_forward.54} parent=0 // pred_fallthru
    _
  %v22 = vld [vmem:[#allocation2] sm:$0xff]
  %v23 = vld [vmem:[#allocation2 + $0x8] sm:$0xff]
  %v24 = vld [vmem:[%s0] sm:$0xf]
  %v25 = vld [vmem:[%s0 + $0x4] sm:$0xf]
  %v26 = vld [vmem:[%s1] sm:$0xf]
  %v27 = vld [vmem:[%s1 + $0x4] sm:$0xf]
  %v28 = vld [vmem:[%s1 + $0x8] sm:$0xf]
  %v29 = vld [vmem:[%s1 + $0xc] sm:$0xf]
  %v32 = vunpack.c.l.b16 %v24
  %v33 = vunpack.c.l.b16 %v25
  %v34 = vpack.c.b16 %v33, %v32
  %v39 = vunpack.c.l.b16 %v26
  %v40 = vunpack.c.l.b16 %v27
  %v41 = vunpack.c.l.b16 %v28
  %v42 = vunpack.c.l.b16 %v29
  %v43 = vpack.c.b16 %v40, %v39
  %v44 = vpack.c.b16 %v42, %v41
  %vm47 = vcmask 261120
  %v49 = vsel %vm47, %v34, 0
  %51 = vmatprep.subr.bf16.mxu0 0
  %52 = vmatpush1.bf16.msra.mxu0 %v43
  %53 = vmatprep.subr.bf16.mxu0 0
  %54 = vmatpush1.bf16.msra.mxu0 %v44
  %55 = vmatprep.subr.bf16.mxu0 0
  %56 = vmatpush1.bf16.msra.mxu0 0
  %57 = vmatprep.subr.bf16.mxu0 0
  %58 = vmatpush1.bf16.msra.mxu0 0
  %59 = vmatprep.subr.bf16.mxu0 0
  %60 = vmatpush1.bf16.msra.mxu0 0
  %61 = vmatprep.subr.bf16.mxu0 0
  %62 = vmatpush1.bf16.msra.mxu0 0
  %63 = vmatprep.subr.bf16.mxu0 0
  %64 = vmatpush1.bf16.msra.mxu0 0
  %65 = vmatprep.subr.bf16.mxu0 0
  %66 = vmatpush1.bf16.msra.mxu0 0
  %67 = vmatprep.subr.bf16.mxu0 0
  %68 = vmatpush1.bf16.msra.mxu0 0
  %69 = vmatprep.subr.bf16.mxu0 0
  %70 = vmatpush1.bf16.msra.mxu0 0
  %71 = vmatprep.subr.bf16.mxu0 0
  %72 = vmatpush1.bf16.msra.mxu0 0
  %73 = vmatprep.subr.bf16.mxu0 0
  %74 = vmatpush1.bf16.msra.mxu0 0
  %75 = vmatprep.subr.bf16.mxu0 0
  %76 = vmatpush1.bf16.msra.mxu0 0
  %77 = vmatprep.subr.bf16.mxu0 0
  %78 = vmatpush1.bf16.msra.mxu0 0
  %79 = vmatprep.subr.bf16.mxu0 0
  %80 = vmatpush1.bf16.msra.mxu0 0
  %81 = vmatprep.subr.bf16.mxu0 0
  %82 = vmatpush1.bf16.msra.mxu0 0
  %83 = vmatprep.mubr.bf16.mxu0 0
  %84 = vmatmul.mubr.bf16.gmra.mrb[0].mxu0 %v49
  %v85 = vpop.f32.mrb[0].mxu0
  %v86 = vadd.f32 0.0, %v85
  %v87 = vpop.f32.mrb[0].mxu0
  %v88 = vpop.f32.mrb[0].mxu0
  %v89 = vadd.f32 0.0, %v88
  %v90 = vpop.f32.mrb[0].mxu0
  %91 = vdwg.mxu0
  %v92 = vadd.f32 %v22, %v86
  %v93 = vadd.f32 %v23, %v89
  %vm94 = vcmask 523264
  %95 = vst.msk [vmem:[#allocation2] sm:$0xff] %vm94, %v92
  %96 = vst.msk [vmem:[#allocation2 + $0x8] sm:$0xff] %vm94, %v93
  // Predicated region
  $region18: #{blip_forward.54} parent=0 // pred_check
    %p97 = pneg %p15
  $region19: #{blip_forward.54} parent=0 // pred_check_branch
    %99 = sbr.rel (%p97) target = $region21
  $region20: #{blip_forward.54} parent=0 // pred_region
    %v100 = vld [vmem:[#allocation2] sm:$0xff]
    %v101 = vld [vmem:[#allocation2 + $0x8] sm:$0xff]
    %v102 = vld [vmem:[%s2] sm:$0x1]
    %v103 = vunpack.c.l.bf16 %v102
    %v104 = vlaneseq
    %v105 = vshrl.u32 %v104, 7
    %v106 = vsub.s32 0, %v105
    %v107 = vrot.slane %v103, %v106
    %v108 = vadd.f32 %v100, %v107
    %v109 = vadd.f32 %v101, %v107
    %v110 = vpack.c.bf16 %v109, %v108
    %v112 = vunpack.c.l.b16 %v110
    %v113 = vunpack.c.h.b16 %v110
    %v114 = vpack.c.b16 %v112, %v112
    %v115 = vpack.c.b16 %v113, %v113
    %vm118 = vcmask 519168
    %119 = vst.msk [vmem:[%s3] sm:$0xf] %vm118, %v114
    %120 = vst.msk [vmem:[%s3 + $0x4] sm:$0xf] %vm118, %v115
  $region21: #{blip_forward.54} parent=0 // pred_fallthru
    _
  // Predicated region
  $region22: #{blip_forward.54} parent=0 // pred_check
    _
  $region23: #{blip_forward.54} parent=0 // pred_check_branch
    %122 = sbr.rel (0) target = $region25
  $region24: #{blip_forward.54} parent=0 // pred_region
    _
  $region25: #{blip_forward.54} parent=0 // pred_fallthru
    _
  // Predicated region
  $region26: #{blip_forward.54} parent=0 // pred_check
    _
  $region27: #{blip_forward.54} parent=0 // pred_check_branch
    %124 = sbr.rel (0) target = $region29
  $region28: #{blip_forward.54} parent=0 // pred_region
    _
  $region29: #{blip_forward.54} parent=0 // pred_fallthru
    _

// kernel: blip_forward.48
$region0: #{blip_forward.48}
  #allocation0 [shape = 'u32[]', space=smem, size = 0x4, offset = 0x4, fixed_abs, tag = 'smem constant byte address 0x4 - core index']
  #allocation1 [shape = 'u32[144,128]{1,0:T(1,128)}', space=vmem, size = 0x12000, scoped, tag = 'internal scratch']
  #allocation2 [shape = 'f32[16,32]{1,0:T(8,128)}', space=vmem, size = 0x2000, scoped, tag = 'scratch operand']
  %s0 = inlined_call_operand.vmem [shape: bf16[16,64], index: 0, kind: input, shape index: {}]
  %s1 = inlined_call_operand.vmem [shape: bf16[64,32], index: 1, kind: input, shape index: {}]
  %s2 = inlined_call_operand.vmem [shape: bf16[1,32], index: 2, kind: input, shape index: {}]
  %s3 = inlined_call_operand.vmem [shape: bf16[16,32], index: 3, kind: input, shape index: {}]
  %s4 = inlined_call_operand.vmem [shape: f32[1,32], index: 4, kind: input, shape index: {}]
  %s5 = inlined_call_operand.vmem [shape: f32[1,32], index: 5, kind: input, shape index: {}]
  %s6 = inlined_call_operand.vmem [shape: bf16[16,32], index: 6, kind: output, shape index: {}]
  %s7 = sld [smem:[#allocation0]]
  $region42: #{blip_forward.48} parent=0
    _
  %s9 = ssub.s32 1, %s7
  %s10 = scalar_select 0, %s9, %s7
  // Predicated region
  $region2: #{blip_forward.48} parent=0 // pred_check
    _
  $region3: #{blip_forward.48} parent=0 // pred_check_branch
    %12 = sbr.rel (0) target = $region5
  $region4: #{blip_forward.48} parent=0 // pred_region
    _
  $region5: #{blip_forward.48} parent=0 // pred_fallthru
    _
  // Predicated region
  $region6: #{blip_forward.48} parent=0 // pred_check
    _
  $region7: #{blip_forward.48} parent=0 // pred_check_branch
    %14 = sbr.rel (0) target = $region9
  $region8: #{blip_forward.48} parent=0 // pred_region
    _
  $region9: #{blip_forward.48} parent=0 // pred_fallthru
    _
  // Predicated region
  $region10: #{blip_forward.48} parent=0 // pred_check
    _
  $region11: #{blip_forward.48} parent=0 // pred_check_branch
    %16 = sbr.rel (0) target = $region13
  $region12: #{blip_forward.48} parent=0 // pred_region
    _
  $region13: #{blip_forward.48} parent=0 // pred_fallthru
    _
  // Predicated region
  $region14: #{blip_forward.48} parent=0 // pred_check
    _
  $region15: #{blip_forward.48} parent=0 // pred_check_branch
    %18 = sbr.rel (0) target = $region17
  $region16: #{blip_forward.48} parent=0 // pred_region
    _
  $region17: #{blip_forward.48} parent=0 // pred_fallthru
    _
  // Predicated region
  $region18: #{blip_forward.48} parent=0 // pred_check
    _
  $region19: #{blip_forward.48} parent=0 // pred_check_branch
    %20 = sbr.rel (0) target = $region21
  $region20: #{blip_forward.48} parent=0 // pred_region
    _
  $region21: #{blip_forward.48} parent=0 // pred_fallthru
    _
  // Predicated region
  $region22: #{blip_forward.48} parent=0 // pred_check
    _
  $region23: #{blip_forward.48} parent=0 // pred_check_branch
    %22 = sbr.rel (0) target = $region25
  $region24: #{blip_forward.48} parent=0 // pred_region
    _
  $region25: #{blip_forward.48} parent=0 // pred_fallthru
    _
  %p24 = scmp.eq.s32.totalorder 0, 0
  // Predicated region
  $region26: #{blip_forward.48} parent=0 // pred_check
    %p25 = pneg %p24
  $region27: #{blip_forward.48} parent=0 // pred_check_branch
    %27 = sbr.rel (%p25) target = $region29
  $region28: #{blip_forward.48} parent=0 // pred_region
    %vm28 = vcmask 261120
    %29 = vst.msk [vmem:[#allocation2] sm:$0xff] %vm28, 0.0
    %30 = vst.msk [vmem:[#allocation2 + $0x8] sm:$0xff] %vm28, 0.0
  $region29: #{blip_forward.48} parent=0 // pred_fallthru
    _
  %v31 = vld [vmem:[#allocation2] sm:$0xff]
  %v32 = vld [vmem:[#allocation2 + $0x8] sm:$0xff]
  %v33 = vld [vmem:[%s0] sm:$0xf]
  %v34 = vld [vmem:[%s0 + $0x4] sm:$0xf]
  %v35 = vld [vmem:[%s1] sm:$0xf]
  %v36 = vld [vmem:[%s1 + $0x4] sm:$0xf]
  %v37 = vld [vmem:[%s1 + $0x8] sm:$0xf]
  %v38 = vld [vmem:[%s1 + $0xc] sm:$0xf]
  %v39 = vld [vmem:[%s1 + $0x10] sm:$0xf]
  %v40 = vld [vmem:[%s1 + $0x14] sm:$0xf]
  %v41 = vld [vmem:[%s1 + $0x18] sm:$0xf]
  %v42 = vld [vmem:[%s1 + $0x1c] sm:$0xf]
  %v45 = vunpack.c.l.b16 %v33
  %v46 = vunpack.c.l.b16 %v34
  %v47 = vpack.c.b16 %v46, %v45
  %v56 = vunpack.c.l.b16 %v35
  %v57 = vunpack.c.l.b16 %v36
  %v58 = vunpack.c.l.b16 %v37
  %v59 = vunpack.c.l.b16 %v38
  %v60 = vunpack.c.l.b16 %v39
  %v61 = vunpack.c.l.b16 %v40
  %v62 = vunpack.c.l.b16 %v41
  %v63 = vunpack.c.l.b16 %v42
  %v64 = vpack.c.b16 %v57, %v56
  %v65 = vpack.c.b16 %v59, %v58
  %v66 = vpack.c.b16 %v61, %v60
  %v67 = vpack.c.b16 %v63, %v62
  %vm72 = vcmask 523264
  %v74 = vsel %vm72, %v47, 0
  %76 = vmatprep.subr.bf16.mxu0 0
  %77 = vmatpush1.bf16.msra.mxu0 %v64
  %78 = vmatprep.subr.bf16.mxu0 0
  %79 = vmatpush1.bf16.msra.mxu0 %v65
  %80 = vmatprep.subr.bf16.mxu0 0
  %81 = vmatpush1.bf16.msra.mxu0 %v66
  %82 = vmatprep.subr.bf16.mxu0 0
  %83 = vmatpush1.bf16.msra.mxu0 %v67
  %84 = vmatprep.subr.bf16.mxu0 0
  %85 = vmatpush1.bf16.msra.mxu0 0
  %86 = vmatprep.subr.bf16.mxu0 0
  %87 = vmatpush1.bf16.msra.mxu0 0
  %88 = vmatprep.subr.bf16.mxu0 0
  %89 = vmatpush1.bf16.msra.mxu0 0
  %90 = vmatprep.subr.bf16.mxu0 0
  %91 = vmatpush1.bf16.msra.mxu0 0
  %92 = vmatprep.subr.bf16.mxu0 0
  %93 = vmatpush1.bf16.msra.mxu0 0
  %94 = vmatprep.subr.bf16.mxu0 0
  %95 = vmatpush1.bf16.msra.mxu0 0
  %96 = vmatprep.subr.bf16.mxu0 0
  %97 = vmatpush1.bf16.msra.mxu0 0
  %98 = vmatprep.subr.bf16.mxu0 0
  %99 = vmatpush1.bf16.msra.mxu0 0
  %100 = vmatprep.subr.bf16.mxu0 0
  %101 = vmatpush1.bf16.msra.mxu0 0
  %102 = vmatprep.subr.bf16.mxu0 0
  %103 = vmatpush1.bf16.msra.mxu0 0
  %104 = vmatprep.subr.bf16.mxu0 0
  %105 = vmatpush1.bf16.msra.mxu0 0
  %106 = vmatprep.subr.bf16.mxu0 0
  %107 = vmatpush1.bf16.msra.mxu0 0
  %108 = vmatprep.mubr.bf16.mxu0 0
  %109 = vmatmul.mubr.bf16.gmra.mrb[0].mxu0 %v74
  %v110 = vpop.f32.mrb[0].mxu0
  %v111 = vadd.f32 0.0, %v110
  %v112 = vpop.f32.mrb[0].mxu0
  %v113 = vpop.f32.mrb[0].mxu0
  %v114 = vadd.f32 0.0, %v113
  %v115 = vpop.f32.mrb[0].mxu0
  %116 = vdwg.mxu0
  %v117 = vadd.f32 %v31, %v111
  %v118 = vadd.f32 %v32, %v114
  %vm119 = vcmask 261120
  %120 = vst.msk [vmem:[#allocation2] sm:$0xff] %vm119, %v117
  %121 = vst.msk [vmem:[#allocation2 + $0x8] sm:$0xff] %vm119, %v118
  // Predicated region
  $region30: #{blip_forward.48} parent=0 // pred_check
    %p122 = pneg %p24
  $region31: #{blip_forward.48} parent=0 // pred_check_branch
    %124 = sbr.rel (%p122) target = $region33
  $region32: #{blip_forward.48} parent=0 // pred_region
    %v125 = vld [vmem:[#allocation2] sm:$0xff]
    %v126 = vld [vmem:[#allocation2 + $0x8] sm:$0xff]
    %v127 = vld [vmem:[%s2] sm:$0x1]
    %v128 = vunpack.c.l.bf16 %v127
    %v129 = vlaneseq
    %v130 = vshrl.u32 %v129, 7
    %v131 = vsub.s32 0, %v130
    %v132 = vrot.slane %v128, %v131
    %v133 = vadd.f32 %v125, %v132
    %v134 = vadd.f32 %v126, %v132
    %v135 = vld [vmem:[%s3] sm:$0xf]
    %v136 = vld [vmem:[%s3 + $0x4] sm:$0xf]
    %v137 = vunpack.c.l.bf16 %v135
    %v138 = vunpack.c.l.bf16 %v136
    %v139 = vadd.f32 %v133, %v137
    %v140 = vadd.f32 %v134, %v138
    %v141 = vsel %vm119, %v139, 0.0
    %142 = vadd.xlane.f32.xlu0 %v141
    %v143 = vpop.xlane.xlu0 %142
    %v144 = vsel %vm119, %v140, 0.0
    %145 = vadd.xlane.f32.xlu0 %v144
    %v146 = vpop.xlane.xlu0 %145
    %v147 = vrcp.pop 32.0
    %v148 = vmul.f32 %v143, %v147
    %v149 = vmul.f32 %v146, %v147
    %v150 = vsub.f32 %v139, %v148
    %v151 = vsub.f32 %v140, %v149
    %v152 = vmul.f32 %v150, %v150
    %v153 = vmul.f32 %v151, %v151
    %v154 = vsel %vm119, %v152, 0.0
    %155 = vadd.xlane.f32.xlu0 %v154
    %v156 = vpop.xlane.xlu0 %155
    %v157 = vsel %vm119, %v153, 0.0
    %158 = vadd.xlane.f32.xlu0 %v157
    %v159 = vpop.xlane.xlu0 %158
    %v160 = vmul.f32 %v156, %v147
    %v161 = vmul.f32 %v159, %v147
    %v162 = vadd.f32 %v160, 1e-06
    %v163 = vadd.f32 %v161, 1e-06
    %v164 = vrsqrt.pop %v162
    %v165 = vrsqrt.pop %v163
    %v166 = vmul.f32 %v150, %v164
    %v167 = vmul.f32 %v151, %v165
    %v168 = vld [vmem:[%s4] sm:$0x1]
    %v170 = vlaneseq
    %v171 = vshrl.u32 %v170, 7
    %v172 = vsub.s32 0, %v171
    %v173 = vrot.slane %v168, %v172
    %v175 = vmul.f32 %v166, %v173
    %v176 = vmul.f32 %v167, %v173
    %v177 = vld [vmem:[%s5] sm:$0x1]
    %v179 = vlaneseq
    %v180 = vshrl.u32 %v179, 7
    %v181 = vsub.s32 0, %v180
    %v182 = vrot.slane %v177, %v181
    %v184 = vadd.f32 %v175, %v182
    %v185 = vadd.f32 %v176, %v182
    %v186 = vpack.c.bf16 %v185, %v184
    %v188 = vunpack.c.l.b16 %v186
    %v189 = vunpack.c.h.b16 %v186
    %v190 = vpack.c.b16 %v188, %v188
    %v191 = vpack.c.b16 %v189, %v189
    %vm194 = vcmask 257024
    %195 = vst.msk [vmem:[%s6] sm:$0xf] %vm194, %v190
    %196 = vst.msk [vmem:[%s6 + $0x4] sm:$0xf] %vm194, %v191
  $region33: #{blip_forward.48} parent=0 // pred_fallthru
    _
  // Predicated region
  $region34: #{blip_forward.48} parent=0 // pred_check
    _
  $region35: #{blip_forward.48} parent=0 // pred_check_branch
    %198 = sbr.rel (0) target = $region37
  $region36: #{blip_forward.48} parent=0 // pred_region
    _
  $region37: #{blip_forward.48} parent=0 // pred_fallthru
    _
  // Predicated region
  $region38: #{blip_forward.48} parent=0 // pred_check
    _
  $region39: #{blip_forward.48} parent=0 // pred_check_branch
    %200 = sbr.rel (0) target = $region41
  $region40: #{blip_forward.48} parent=0 // pred_region
    _
  $region41: #{blip_forward.48} parent=0 // pred_fallthru
    _

// kernel: blip_forward.49
$region0: #{blip_forward.49}
  #allocation0 [shape = 'u32[]', space=smem, size = 0x4, offset = 0x4, fixed_abs, tag = 'smem constant byte address 0x4 - core index']
  #allocation1 [shape = 'u32[144,128]{1,0:T(1,128)}', space=vmem, size = 0x12000, scoped, tag = 'internal scratch']
  #allocation2 [shape = 's32[1]{0}', space=sflag, size = 0x4, scoped, tag = 'scoped memory for blip_forward.49']
  #allocation3 [shape = 'u8[512]{0}', space=smem, size = 0x200, scoped, tag = 'prefetched SMEM operand 0']
  %s0 = inlined_call_operand.vmem [shape: s32[16], index: 0, kind: input, shape index: {}]
  %s1 = inlined_call_operand.vmem [shape: bf16[64,1,32], index: 1, kind: input, shape index: {}]
  %s2 = inlined_call_operand.vmem [shape: bf16[8,1,32], index: 2, kind: input, shape index: {}]
  %s3 = inlined_call_operand.vmem [shape: f32[1,32], index: 3, kind: input, shape index: {}]
  %s4 = inlined_call_operand.vmem [shape: f32[1,32], index: 4, kind: input, shape index: {}]
  %s5 = inlined_call_operand.vmem [shape: bf16[16,1,32], index: 5, kind: output, shape index: {}]
  %s6 = sld [smem:[#allocation0]]
  $region49: #{blip_forward.49} parent=0
    _
  %s8 = ssub.s32 1, %s6
  %s9 = scalar_select 0, %s8, %s6
  %s10 = sshll.u32 %s0, 4
  %s11 = int_to_ptr.vmem [resolvable:$true] %s10
  %13 = dma.vmem_to_smem %s11, 16, [#allocation3], [#allocation2]
  %14 = dma.done [#allocation2], 16
  %15 = sfence
  loop: start=0, step=1, limit=18
  $region2: #{blip_forward.49} parent=0 // loop_pre_header
    _
  $region3: #{blip_forward.49} parent=0 // loop_header
    %s17 = sphi 0, %s21
    %p18 = scmp.ge.s32.totalorder %s17, 18
    %s29 = sphi 0, %s31
    %s32 = sphi 0, %s29
    %s33 = sphi 0, %s32
    %s49 = sphi 0, %s33
    %s79 = sphi 0, %s81
    %s82 = sphi 0, %s79
    %s83 = sphi 0, %s82
    %s99 = sphi 0, %s83
    %s103 = sphi 0, %s103
    %s105 = sphi 0, %s103
    %s106 = sphi 0, %s105
    %s120 = sphi 0, %s106
    %s124 = sphi 0, %s124
    %s126 = sphi 0, %s124
    %s127 = sphi 0, %s126
    %s141 = sphi 0, %s127
    %s147 = sphi 0, %s149
    %s150 = sphi 0, %s147
    %s151 = sphi 0, %s150
    %s167 = sphi 0, %s151
  $region4: #{blip_forward.49} parent=0 // loop_header_branch
    %20 = sbr.rel (%p18) target = $region8
  $region5: #{blip_forward.49} parent=0 // loop_body
    %s22 = ssub.s32 %s17, 1
    %s23 = ssub.s32 %s17, 2
    %s24 = sadd.s32 %s17, 1
    %s25 = sld [smem:[#allocation3 + %s17]]
    %s26 = sld [smem:[#allocation3 + %s24]]
    %s27 = ssub.s32 %s25, %s26
    %p28 = scmp.eq.s32.totalorder %s27, 0
    %s30 = sadd.s32 %s29, 1
    %s31 = scalar_select %p28, %s29, %s30
    %p34 = pneg %p28
    %p35 = scmp.eq.s32.totalorder %s17, 15
    %p36 = por %p34, %p35
    %p37 = scmp.ne.s32.totalorder %s29, %s32
    %p38 = scmp.eq.s32.totalorder %s17, 0
    %p39 = por %p37, %p38
    %p40 = scmp.ne.s32.totalorder %s29, %s32
    %p41 = scmp.eq.s32.totalorder %s22, 15
    %p42 = por %p40, %p41
    %p43 = scmp.ne.s32.totalorder %s32, %s33
    %p44 = scmp.eq.s32.totalorder %s22, 0
    %p45 = por %p43, %p44
    %p46 = scmp.ne.s32.totalorder %s32, %s33
    %p47 = scmp.eq.s32.totalorder %s23, 15
    %p48 = por %p46, %p47
    %p50 = scmp.ne.s32.totalorder %s33, %s49
    %p51 = scmp.eq.s32.totalorder %s23, 0
    %p52 = por %p50, %p51
    %p53 = scmp.lt.s32.totalorder %s17, 0
    %s54 = ssub.s32 0, %s17
    %s55 = scalar_select %p53, %s54, %s17
    %s56 = sand.u32 %s55, 7
    %s57 = ssub.s32 0, %s56
    %s58 = scalar_select %p53, %s57, %s56
    %p59 = scmp.ne.s32.totalorder %s58, 0
    %p60 = scmp.lt.s32.totalorder %s58, 0
    %p61 = pnand %p60, %p59
    %p62 = pneg %p61
    %s63 = sadd.s32 %s58, 8
    %s64 = scalar_select %p62, %s63, %s58
    %p65 = scmp.lt.s32.totalorder %s24, 0
    %s66 = ssub.s32 0, %s24
    %s67 = scalar_select %p65, %s66, %s24
    %s68 = sand.u32 %s67, 7
    %s69 = ssub.s32 0, %s68
    %s70 = scalar_select %p65, %s69, %s68
    %p71 = scmp.ne.s32.totalorder %s70, 0
    %p72 = scmp.lt.s32.totalorder %s70, 0
    %p73 = pnand %p72, %p71
    %p74 = pneg %p73
    %s75 = sadd.s32 %s70, 8
    %s76 = scalar_select %p74, %s75, %s70
    %s77 = ssub.s32 %s64, %s76
    %p78 = scmp.eq.s32.totalorder %s77, 0
    %s80 = sadd.s32 %s79, 1
    %s81 = scalar_select %p78, %s79, %s80
    %p84 = pneg %p78
    %p85 = scmp.eq.s32.totalorder %s17, 15
    %p86 = por %p84, %p85
    %p87 = scmp.ne.s32.totalorder %s79, %s82
    %p88 = scmp.eq.s32.totalorder %s17, 0
    %p89 = por %p87, %p88
    %p90 = scmp.ne.s32.totalorder %s79, %s82
    %p91 = scmp.eq.s32.totalorder %s22, 15
    %p92 = por %p90, %p91
    %p93 = scmp.ne.s32.totalorder %s82, %s83
    %p94 = scmp.eq.s32.totalorder %s22, 0
    %p95 = por %p93, %p94
    %p96 = scmp.ne.s32.totalorder %s82, %s83
    %p97 = scmp.eq.s32.totalorder %s23, 15
    %p98 = por %p96, %p97
    %p100 = scmp.ne.s32.totalorder %s83, %s99
    %p101 = scmp.eq.s32.totalorder %s23, 0
    %p102 = por %p100, %p101
    %s104 = sadd.s32 %s103, 1
    %p107 = scmp.eq.s32.totalorder %s17, 15
    %p108 = scmp.ne.s32.totalorder %s103, %s105
    %p109 = scmp.eq.s32.totalorder %s17, 0
    %p110 = por %p108, %p109
    %p111 = scmp.ne.s32.totalorder %s103, %s105
    %p112 = scmp.eq.s32.totalorder %s22, 15
    %p113 = por %p111, %p112
    %p114 = scmp.ne.s32.totalorder %s105, %s106
    %p115 = scmp.eq.s32.totalorder %s22, 0
    %p116 = por %p114, %p115
    %p117 = scmp.ne.s32.totalorder %s105, %s106
    %p118 = scmp.eq.s32.totalorder %s23, 15
    %p119 = por %p117, %p118
    %p121 = scmp.ne.s32.totalorder %s106, %s120
    %p122 = scmp.eq.s32.totalorder %s23, 0
    %p123 = por %p121, %p122
    %s125 = sadd.s32 %s124, 1
    %p128 = scmp.eq.s32.totalorder %s17, 15
    %p129 = scmp.ne.s32.totalorder %s124, %s126
    %p130 = scmp.eq.s32.totalorder %s17, 0
    %p131 = por %p129, %p130
    %p132 = scmp.ne.s32.totalorder %s124, %s126
    %p133 = scmp.eq.s32.totalorder %s22, 15
    %p134 = por %p132, %p133
    %p135 = scmp.ne.s32.totalorder %s126, %s127
    %p136 = scmp.eq.s32.totalorder %s22, 0
    %p137 = por %p135, %p136
    %p138 = scmp.ne.s32.totalorder %s126, %s127
    %p139 = scmp.eq.s32.totalorder %s23, 15
    %p140 = por %p138, %p139
    %p142 = scmp.ne.s32.totalorder %s127, %s141
    %p143 = scmp.eq.s32.totalorder %s23, 0
    %p144 = por %p142, %p143
    %s145 = ssub.s32 %s17, %s24
    %p146 = scmp.eq.s32.totalorder %s145, 0
    %s148 = sadd.s32 %s147, 1
    %s149 = scalar_select %p146, %s147, %s148
    %p152 = pneg %p146
    %p153 = scmp.eq.s32.totalorder %s17, 15
    %p154 = por %p152, %p153
    %p155 = scmp.ne.s32.totalorder %s147, %s150
    %p156 = scmp.eq.s32.totalorder %s17, 0
    %p157 = por %p155, %p156
    %p158 = scmp.ne.s32.totalorder %s147, %s150
    %p159 = scmp.eq.s32.totalorder %s22, 15
    %p160 = por %p158, %p159
    %p161 = scmp.ne.s32.totalorder %s150, %s151
    %p162 = scmp.eq.s32.totalorder %s22, 0
    %p163 = por %p161, %p162
    %p164 = scmp.ne.s32.totalorder %s150, %s151
    %p165 = scmp.eq.s32.totalorder %s23, 15
    %p166 = por %p164, %p165
    %p168 = scmp.ne.s32.totalorder %s151, %s167
    %p169 = scmp.eq.s32.totalorder %s23, 0
    %p170 = por %p168, %p169
    %p171 = scmp.le.s32.totalorder 1, %s17
    %p172 = scmp.lt.s32.totalorder %s17, 17
    %p173 = pnand %p171, %p172
    %p174 = pneg %p173
    // Predicated region
    $region9: #{blip_forward.49} parent=5 // pred_check
      _
    $region10: #{blip_forward.49} parent=5 // pred_check_branch
      %176 = sbr.rel (%p173) target = $region12
    $region11: #{blip_forward.49} parent=5 // pred_region
      %s177 = ssub.s32 %s17, 1
      // Predicated region
      $region13: #{blip_forward.49} parent=11 // pred_check
        %p178 = pneg %p116
      $region14: #{blip_forward.49} parent=11 // pred_check_branch
        %180 = sbr.rel (%p178) target = $region16
      $region15: #{blip_forward.49} parent=11 // pred_region
        _
      $region16: #{blip_forward.49} parent=11 // pred_fallthru
        _
      // Predicated region
      $region17: #{blip_forward.49} parent=11 // pred_check
        %p181 = pneg %p137
      $region18: #{blip_forward.49} parent=11 // pred_check_branch
        %183 = sbr.rel (%p181) target = $region20
      $region19: #{blip_forward.49} parent=11 // pred_region
        _
      $region20: #{blip_forward.49} parent=11 // pred_fallthru
        _
    $region12: #{blip_forward.49} parent=5 // pred_fallthru
      _
    %p184 = scmp.lt.s32.totalorder %s17, 16
    // Predicated region
    $region21: #{blip_forward.49} parent=5 // pred_check
      %p185 = pneg %p184
    $region22: #{blip_forward.49} parent=5 // pred_check_branch
      %187 = sbr.rel (%p185) target = $region24
    $region23: #{blip_forward.49} parent=5 // pred_region
      // Predicated region
      $region25: #{blip_forward.49} parent=23 // pred_check
        %p188 = pneg %p39
      $region26: #{blip_forward.49} parent=23 // pred_check_branch
        %190 = sbr.rel (%p188) target = $region28
      $region27: #{blip_forward.49} parent=23 // pred_region
        %s191 = sld [smem:[#allocation3 + %s17]]
        %p192 = scmp.lt.s32.totalorder %s191, 63
        %s193 = scalar_select %p192, %s191, 63
        %s194 = scalar_lea.vmem %s1, %s193
        %s195 = sld [smem:[#allocation3 + %s17]]
      $region28: #{blip_forward.49} parent=23 // pred_fallthru
        _
      // Predicated region
      $region29: #{blip_forward.49} parent=23 // pred_check
        %p196 = pneg %p89
      $region30: #{blip_forward.49} parent=23 // pred_check_branch
        %198 = sbr.rel (%p196) target = $region32
      $region31: #{blip_forward.49} parent=23 // pred_region
        %p199 = scmp.lt.s32.totalorder %s17, 0
        %s200 = ssub.s32 0, %s17
        %s201 = scalar_select %p199, %s200, %s17
        %s202 = sand.u32 %s201, 7
        %s203 = ssub.s32 0, %s202
        %s204 = scalar_select %p199, %s203, %s202
        %p205 = scmp.ne.s32.totalorder %s204, 0
        %p206 = scmp.lt.s32.totalorder %s204, 0
        %p207 = pnand %p206, %p205
        %p208 = pneg %p207
        %s209 = sadd.s32 %s204, 8
        %s210 = scalar_select %p208, %s209, %s204
        %p211 = scmp.lt.s32.totalorder %s210, 7
        %s212 = scalar_select %p211, %s210, 7
        %s213 = scalar_lea.vmem %s2, %s212
        %p214 = scmp.lt.s32.totalorder %s17, 0
        %s215 = ssub.s32 0, %s17
        %s216 = scalar_select %p214, %s215, %s17
        %s217 = sand.u32 %s216, 7
        %s218 = ssub.s32 0, %s217
        %s219 = scalar_select %p214, %s218, %s217
        %p220 = scmp.ne.s32.totalorder %s219, 0
        %p221 = scmp.lt.s32.totalorder %s219, 0
        %p222 = pnand %p221, %p220
        %p223 = pneg %p222
        %s224 = sadd.s32 %s219, 8
        %s225 = scalar_select %p223, %s224, %s219
      $region32: #{blip_forward.49} parent=23 // pred_fallthru
        _
    $region24: #{blip_forward.49} parent=5 // pred_fallthru
      _
    %p226 = scmp.le.s32.totalorder 1, %s17
    %p227 = scmp.lt.s32.totalorder %s17, 17
    %p228 = pnand %p226, %p227
    %p229 = pneg %p228
    // Predicated region
    $region33: #{blip_forward.49} parent=5 // pred_check
      _
    $region34: #{blip_forward.49} parent=5 // pred_check_branch
      %231 = sbr.rel (%p228) target = $region36
    $region35: #{blip_forward.49} parent=5 // pred_region
      %s232 = ssub.s32 %s17, 1
      %s233 = sld [smem:[#allocation3 + %s22]]
      %p234 = scmp.lt.s32.totalorder %s233, 63
      %s235 = scalar_select %p234, %s233, 63
      %s236 = scalar_lea.vmem %s1, %s235
      %p237 = pneg %p45
      %p238 = pneg %p42
      %p239 = scmp.lt.s32.totalorder %s22, 0
      %s240 = ssub.s32 0, %s22
      %s241 = scalar_select %p239, %s240, %s22
      %s242 = sand.u32 %s241, 7
      %s243 = ssub.s32 0, %s242
      %s244 = scalar_select %p239, %s243, %s242
      %p245 = scmp.ne.s32.totalorder %s244, 0
      %p246 = scmp.lt.s32.totalorder %s244, 0
      %p247 = pnand %p246, %p245
      %p248 = pneg %p247
      %s249 = sadd.s32 %s244, 8
      %s250 = scalar_select %p248, %s249, %s244
      %p251 = scmp.lt.s32.totalorder %s250, 7
      %s252 = scalar_select %p251, %s250, 7
      %s253 = scalar_lea.vmem %s2, %s252
      %p254 = pneg %p95
      %p255 = pneg %p92
      %p256 = pneg %p116
      %p257 = pneg %p113
      %p258 = pneg %p137
      %p259 = pneg %p134
      %p260 = pneg %p163
      %p261 = pneg %p160
      %p262 = scmp.lt.s32.totalorder %s22, 15
      %s263 = scalar_select %p262, %s22, 15
      %s264 = scalar_lea.vmem %s5, %s263
      %s265 = sld [smem:[#allocation3 + %s22]]
      %p266 = scmp.lt.s32.totalorder %s265, 63
      %s267 = scalar_select %p266, %s265, 63
      %s268 = scalar_lea.vmem %s1, %s267
      %s269 = sld [smem:[#allocation3 + %s22]]
      %p270 = scmp.lt.s32.totalorder %s22, 0
      %s271 = ssub.s32 0, %s22
      %s272 = scalar_select %p270, %s271, %s22
      %s273 = sand.u32 %s272, 7
      %s274 = ssub.s32 0, %s273
      %s275 = scalar_select %p270, %s274, %s273
      %p276 = scmp.ne.s32.totalorder %s275, 0
      %p277 = scmp.lt.s32.totalorder %s275, 0
      %p278 = pnand %p277, %p276
      %p279 = pneg %p278
      %s280 = sadd.s32 %s275, 8
      %s281 = scalar_select %p279, %s280, %s275
      %p282 = scmp.lt.s32.totalorder %s281, 7
      %s283 = scalar_select %p282, %s281, 7
      %s284 = scalar_lea.vmem %s2, %s283
      %p285 = scmp.lt.s32.totalorder %s22, 0
      %s286 = ssub.s32 0, %s22
      %s287 = scalar_select %p285, %s286, %s22
      %s288 = sand.u32 %s287, 7
      %s289 = ssub.s32 0, %s288
      %s290 = scalar_select %p285, %s289, %s288
      %p291 = scmp.ne.s32.totalorder %s290, 0
      %p292 = scmp.lt.s32.totalorder %s290, 0
      %p293 = pnand %p292, %p291
      %p294 = pneg %p293
      %s295 = sadd.s32 %s290, 8
      %s296 = scalar_select %p294, %s295, %s290
      %p297 = scmp.lt.s32.totalorder %s22, 15
      %s298 = scalar_select %p297, %s22, 15
      %s299 = scalar_lea.vmem %s5, %s298
      %v300 = vld [vmem:[%s268] sm:$0x1]
      %v301 = vunpack.c.l.bf16 %v300
      %v302 = vld [vmem:[%s284] sm:$0x1]
      %v303 = vunpack.c.l.bf16 %v302
      %v304 = vadd.f32 %v301, %v303
      %vm305 = vcmask 253952
      %v306 = vsel %vm305, %v304, 0.0
      %307 = vadd.xlane.f32.xlu0 %v306
      %v308 = vpop.xlane.xlu0 %307
      %v309 = vrcp.pop 32.0
      %v310 = vmul.f32 %v308, %v309
      %v311 = vsub.f32 %v304, %v310
      %v312 = vmul.f32 %v311, %v311
      %v313 = vsel %vm305, %v312, 0.0
      %314 = vadd.xlane.f32.xlu0 %v313
      %v315 = vpop.xlane.xlu0 %314
      %v316 = vmul.f32 %v315, %v309
      %v317 = vadd.f32 %v316, 1e-12
      %v318 = vrsqrt.pop %v317
      %v319 = vmul.f32 %v311, %v318
      %v320 = vld [vmem:[%s3] sm:$0x1]
      %v321 = vmul.f32 %v319, %v320
      %v322 = vld [vmem:[%s4] sm:$0x1]
      %v323 = vadd.f32 %v321, %v322
      %v324 = vpack.c.bf16 %v323, %v323
      %vm325 = vcmask 253952
      %vm326 = vsmask.f32 256
      %vm327 = vmand %vm325, %vm326
      %v328 = vld [vmem:[%s299] sm:$0x1]
      %v329 = vsel %vm327, %v324, %v328
      %330 = vst [vmem:[%s299] sm:$0x1] %v329
      %p331 = scmp.lt.s32.totalorder %s22, 15
      %s332 = scalar_select %p331, %s22, 15
      %s333 = scalar_lea.vmem %s5, %s332
      // Predicated region
      $region37: #{blip_forward.49} parent=35 // pred_check
        %p334 = pneg %p160
      $region38: #{blip_forward.49} parent=35 // pred_check_branch
        %336 = sbr.rel (%p334) target = $region40
      $region39: #{blip_forward.49} parent=35 // pred_region
        _
      $region40: #{blip_forward.49} parent=35 // pred_fallthru
        _
    $region36: #{blip_forward.49} parent=5 // pred_fallthru
      _
    %p337 = scmp.le.s32.totalorder 2, %s17
    // Predicated region
    $region41: #{blip_forward.49} parent=5 // pred_check
      %p338 = pneg %p337
    $region42: #{blip_forward.49} parent=5 // pred_check_branch
      %340 = sbr.rel (%p338) target = $region44
    $region43: #{blip_forward.49} parent=5 // pred_region
      %s341 = ssub.s32 %s17, 2
      // Predicated region
      $region45: #{blip_forward.49} parent=43 // pred_check
        %p342 = pneg %p166
      $region46: #{blip_forward.49} parent=43 // pred_check_branch
        %344 = sbr.rel (%p342) target = $region48
      $region47: #{blip_forward.49} parent=43 // pred_region
        %p345 = scmp.lt.s32.totalorder %s23, 15
        %s346 = scalar_select %p345, %s23, 15
        %s347 = scalar_lea.vmem %s5, %s346
      $region48: #{blip_forward.49} parent=43 // pred_fallthru
        _
    $region44: #{blip_forward.49} parent=5 // pred_fallthru
      _
  $region6: #{blip_forward.49} parent=0 // loop_footer
    %s21 = sadd.s32 1, %s17
  $region7: #{blip_forward.49} parent=0 // loop_footer_branch
    %16 = sbr.rel target = $region3
  $region8: #{blip_forward.49} parent=0 // loop_exit
    _

// kernel: blip_forward.52
$region0: #{blip_forward.52}
  #allocation0 [shape = 'u32[]', space=smem, size = 0x4, offset = 0x4, fixed_abs, tag = 'smem constant byte address 0x4 - core index']
  #allocation1 [shape = 'u32[144,128]{1,0:T(1,128)}', space=vmem, size = 0x12000, scoped, tag = 'internal scratch']
  #allocation2 [shape = 'f32[16,32]{1,0:T(8,128)}', space=vmem, size = 0x2000, scoped, tag = 'scratch operand']
  %s0 = inlined_call_operand.vmem [shape: bf16[16,32], index: 0, kind: input, shape index: {}]
  %s1 = inlined_call_operand.vmem [shape: bf16[32,32], index: 1, kind: input, shape index: {}]
  %s2 = inlined_call_operand.vmem [shape: bf16[1,32], index: 2, kind: input, shape index: {}]
  %s3 = inlined_call_operand.vmem [shape: bf16[16,32], index: 3, kind: input, shape index: {}]
  %s4 = inlined_call_operand.vmem [shape: f32[1,32], index: 4, kind: input, shape index: {}]
  %s5 = inlined_call_operand.vmem [shape: f32[1,32], index: 5, kind: input, shape index: {}]
  %s6 = inlined_call_operand.vmem [shape: bf16[16,32], index: 6, kind: output, shape index: {}]
  %s7 = sld [smem:[#allocation0]]
  $region42: #{blip_forward.52} parent=0
    _
  %s9 = ssub.s32 1, %s7
  %s10 = scalar_select 0, %s9, %s7
  // Predicated region
  $region2: #{blip_forward.52} parent=0 // pred_check
    _
  $region3: #{blip_forward.52} parent=0 // pred_check_branch
    %12 = sbr.rel (0) target = $region5
  $region4: #{blip_forward.52} parent=0 // pred_region
    _
  $region5: #{blip_forward.52} parent=0 // pred_fallthru
    _
  // Predicated region
  $region6: #{blip_forward.52} parent=0 // pred_check
    _
  $region7: #{blip_forward.52} parent=0 // pred_check_branch
    %14 = sbr.rel (0) target = $region9
  $region8: #{blip_forward.52} parent=0 // pred_region
    _
  $region9: #{blip_forward.52} parent=0 // pred_fallthru
    _
  // Predicated region
  $region10: #{blip_forward.52} parent=0 // pred_check
    _
  $region11: #{blip_forward.52} parent=0 // pred_check_branch
    %16 = sbr.rel (0) target = $region13
  $region12: #{blip_forward.52} parent=0 // pred_region
    _
  $region13: #{blip_forward.52} parent=0 // pred_fallthru
    _
  // Predicated region
  $region14: #{blip_forward.52} parent=0 // pred_check
    _
  $region15: #{blip_forward.52} parent=0 // pred_check_branch
    %18 = sbr.rel (0) target = $region17
  $region16: #{blip_forward.52} parent=0 // pred_region
    _
  $region17: #{blip_forward.52} parent=0 // pred_fallthru
    _
  // Predicated region
  $region18: #{blip_forward.52} parent=0 // pred_check
    _
  $region19: #{blip_forward.52} parent=0 // pred_check_branch
    %20 = sbr.rel (0) target = $region21
  $region20: #{blip_forward.52} parent=0 // pred_region
    _
  $region21: #{blip_forward.52} parent=0 // pred_fallthru
    _
  // Predicated region
  $region22: #{blip_forward.52} parent=0 // pred_check
    _
  $region23: #{blip_forward.52} parent=0 // pred_check_branch
    %22 = sbr.rel (0) target = $region25
  $region24: #{blip_forward.52} parent=0 // pred_region
    _
  $region25: #{blip_forward.52} parent=0 // pred_fallthru
    _
  %p24 = scmp.eq.s32.totalorder 0, 0
  // Predicated region
  $region26: #{blip_forward.52} parent=0 // pred_check
    %p25 = pneg %p24
  $region27: #{blip_forward.52} parent=0 // pred_check_branch
    %27 = sbr.rel (%p25) target = $region29
  $region28: #{blip_forward.52} parent=0 // pred_region
    %vm28 = vcmask 261120
    %29 = vst.msk [vmem:[#allocation2] sm:$0xff] %vm28, 0.0
    %30 = vst.msk [vmem:[#allocation2 + $0x8] sm:$0xff] %vm28, 0.0
  $region29: #{blip_forward.52} parent=0 // pred_fallthru
    _
  %v31 = vld [vmem:[#allocation2] sm:$0xff]
  %v32 = vld [vmem:[#allocation2 + $0x8] sm:$0xff]
  %v33 = vld [vmem:[%s0] sm:$0xf]
  %v34 = vld [vmem:[%s0 + $0x4] sm:$0xf]
  %v35 = vld [vmem:[%s1] sm:$0xf]
  %v36 = vld [vmem:[%s1 + $0x4] sm:$0xf]
  %v37 = vld [vmem:[%s1 + $0x8] sm:$0xf]
  %v38 = vld [vmem:[%s1 + $0xc] sm:$0xf]
  %v41 = vunpack.c.l.b16 %v33
  %v42 = vunpack.c.l.b16 %v34
  %v43 = vpack.c.b16 %v42, %v41
  %v48 = vunpack.c.l.b16 %v35
  %v49 = vunpack.c.l.b16 %v36
  %v50 = vunpack.c.l.b16 %v37
  %v51 = vunpack.c.l.b16 %v38
  %v52 = vpack.c.b16 %v49, %v48
  %v53 = vpack.c.b16 %v51, %v50
  %vm56 = vcmask 261120
  %v58 = vsel %vm56, %v43, 0
  %60 = vmatprep.subr.bf16.mxu0 0
  %61 = vmatpush1.bf16.msra.mxu0 %v52
  %62 = vmatprep.subr.bf16.mxu0 0
  %63 = vmatpush1.bf16.msra.mxu0 %v53
  %64 = vmatprep.subr.bf16.mxu0 0
  %65 = vmatpush1.bf16.msra.mxu0 0
  %66 = vmatprep.subr.bf16.mxu0 0
  %67 = vmatpush1.bf16.msra.mxu0 0
  %68 = vmatprep.subr.bf16.mxu0 0
  %69 = vmatpush1.bf16.msra.mxu0 0
  %70 = vmatprep.subr.bf16.mxu0 0
  %71 = vmatpush1.bf16.msra.mxu0 0
  %72 = vmatprep.subr.bf16.mxu0 0
  %73 = vmatpush1.bf16.msra.mxu0 0
  %74 = vmatprep.subr.bf16.mxu0 0
  %75 = vmatpush1.bf16.msra.mxu0 0
  %76 = vmatprep.subr.bf16.mxu0 0
  %77 = vmatpush1.bf16.msra.mxu0 0
  %78 = vmatprep.subr.bf16.mxu0 0
  %79 = vmatpush1.bf16.msra.mxu0 0
  %80 = vmatprep.subr.bf16.mxu0 0
  %81 = vmatpush1.bf16.msra.mxu0 0
  %82 = vmatprep.subr.bf16.mxu0 0
  %83 = vmatpush1.bf16.msra.mxu0 0
  %84 = vmatprep.subr.bf16.mxu0 0
  %85 = vmatpush1.bf16.msra.mxu0 0
  %86 = vmatprep.subr.bf16.mxu0 0
  %87 = vmatpush1.bf16.msra.mxu0 0
  %88 = vmatprep.subr.bf16.mxu0 0
  %89 = vmatpush1.bf16.msra.mxu0 0
  %90 = vmatprep.subr.bf16.mxu0 0
  %91 = vmatpush1.bf16.msra.mxu0 0
  %92 = vmatprep.mubr.bf16.mxu0 0
  %93 = vmatmul.mubr.bf16.gmra.mrb[0].mxu0 %v58
  %v94 = vpop.f32.mrb[0].mxu0
  %v95 = vadd.f32 0.0, %v94
  %v96 = vpop.f32.mrb[0].mxu0
  %v97 = vpop.f32.mrb[0].mxu0
  %v98 = vadd.f32 0.0, %v97
  %v99 = vpop.f32.mrb[0].mxu0
  %100 = vdwg.mxu0
  %v101 = vadd.f32 %v31, %v95
  %v102 = vadd.f32 %v32, %v98
  %103 = vst.msk [vmem:[#allocation2] sm:$0xff] %vm56, %v101
  %104 = vst.msk [vmem:[#allocation2 + $0x8] sm:$0xff] %vm56, %v102
  // Predicated region
  $region30: #{blip_forward.52} parent=0 // pred_check
    %p105 = pneg %p24
  $region31: #{blip_forward.52} parent=0 // pred_check_branch
    %107 = sbr.rel (%p105) target = $region33
  $region32: #{blip_forward.52} parent=0 // pred_region
    %v108 = vld [vmem:[#allocation2] sm:$0xff]
    %v109 = vld [vmem:[#allocation2 + $0x8] sm:$0xff]
    %v110 = vld [vmem:[%s2] sm:$0x1]
    %v111 = vunpack.c.l.bf16 %v110
    %v112 = vlaneseq
    %v113 = vshrl.u32 %v112, 7
    %v114 = vsub.s32 0, %v113
    %v115 = vrot.slane %v111, %v114
    %v116 = vadd.f32 %v108, %v115
    %v117 = vadd.f32 %v109, %v115
    %v118 = vld [vmem:[%s3] sm:$0xf]
    %v119 = vld [vmem:[%s3 + $0x4] sm:$0xf]
    %v120 = vunpack.c.l.bf16 %v118
    %v121 = vunpack.c.l.bf16 %v119
    %v122 = vadd.f32 %v116, %v120
    %v123 = vadd.f32 %v117, %v121
    %v124 = vsel %vm56, %v122, 0.0
    %125 = vadd.xlane.f32.xlu0 %v124
    %v126 = vpop.xlane.xlu0 %125
    %v127 = vsel %vm56, %v123, 0.0
    %128 = vadd.xlane.f32.xlu0 %v127
    %v129 = vpop.xlane.xlu0 %128
    %v130 = vrcp.pop 32.0
    %v131 = vmul.f32 %v126, %v130
    %v132 = vmul.f32 %v129, %v130
    %v133 = vsub.f32 %v122, %v131
    %v134 = vsub.f32 %v123, %v132
    %v135 = vmul.f32 %v133, %v133
    %v136 = vmul.f32 %v134, %v134
    %v137 = vsel %vm56, %v135, 0.0
    %138 = vadd.xlane.f32.xlu0 %v137
    %v139 = vpop.xlane.xlu0 %138
    %v140 = vsel %vm56, %v136, 0.0
    %141 = vadd.xlane.f32.xlu0 %v140
    %v142 = vpop.xlane.xlu0 %141
    %v143 = vmul.f32 %v139, %v130
    %v144 = vmul.f32 %v142, %v130
    %v145 = vadd.f32 %v143, 1e-12
    %v146 = vadd.f32 %v144, 1e-12
    %v147 = vrsqrt.pop %v145
    %v148 = vrsqrt.pop %v146
    %v149 = vmul.f32 %v133, %v147
    %v150 = vmul.f32 %v134, %v148
    %v151 = vld [vmem:[%s4] sm:$0x1]
    %v153 = vlaneseq
    %v154 = vshrl.u32 %v153, 7
    %v155 = vsub.s32 0, %v154
    %v156 = vrot.slane %v151, %v155
    %v158 = vmul.f32 %v149, %v156
    %v159 = vmul.f32 %v150, %v156
    %v160 = vld [vmem:[%s5] sm:$0x1]
    %v162 = vlaneseq
    %v163 = vshrl.u32 %v162, 7
    %v164 = vsub.s32 0, %v163
    %v165 = vrot.slane %v160, %v164
    %v167 = vadd.f32 %v158, %v165
    %v168 = vadd.f32 %v159, %v165
    %v169 = vpack.c.bf16 %v168, %v167
    %v171 = vunpack.c.l.b16 %v169
    %v172 = vunpack.c.h.b16 %v169
    %v173 = vpack.c.b16 %v171, %v171
    %v174 = vpack.c.b16 %v172, %v172
    %vm177 = vcmask 257024
    %178 = vst.msk [vmem:[%s6] sm:$0xf] %vm177, %v173
    %179 = vst.msk [vmem:[%s6 + $0x4] sm:$0xf] %vm177, %v174
  $region33: #{blip_forward.52} parent=0 // pred_fallthru
    _
  // Predicated region
  $region34: #{blip_forward.52} parent=0 // pred_check
    _
  $region35: #{blip_forward.52} parent=0 // pred_check_branch
    %181 = sbr.rel (0) target = $region37
  $region36: #{blip_forward.52} parent=0 // pred_region
    _
  $region37: #{blip_forward.52} parent=0 // pred_fallthru
    _
  // Predicated region
  $region38: #{blip_forward.52} parent=0 // pred_check
    _
  $region39: #{blip_forward.52} parent=0 // pred_check_branch
    %183 = sbr.rel (0) target = $region41
  $region40: #{blip_forward.52} parent=0 // pred_region
    _
  $region41: #{blip_forward.52} parent=0 // pred_fallthru
    _

// kernel: blip_forward.53
$region0: #{blip_forward.53}
  #allocation0 [shape = 'u32[]', space=smem, size = 0x4, offset = 0x4, fixed_abs, tag = 'smem constant byte address 0x4 - core index']
  #allocation1 [shape = 'u32[144,128]{1,0:T(1,128)}', space=vmem, size = 0x12000, scoped, tag = 'internal scratch']
  #allocation2 [shape = 'f32[16,32]{1,0:T(8,128)}', space=vmem, size = 0x2000, scoped, tag = 'scratch operand']
  %s0 = inlined_call_operand.vmem [shape: bf16[16,32], index: 0, kind: input, shape index: {}]
  %s1 = inlined_call_operand.vmem [shape: bf16[32,32], index: 1, kind: input, shape index: {}]
  %s2 = inlined_call_operand.vmem [shape: bf16[1,32], index: 2, kind: input, shape index: {}]
  %s3 = inlined_call_operand.vmem [shape: bf16[16,32], index: 3, kind: output, shape index: {}]
  %s4 = sld [smem:[#allocation0]]
  $region30: #{blip_forward.53} parent=0
    _
  %s6 = ssub.s32 1, %s4
  %s7 = scalar_select 0, %s6, %s4
  // Predicated region
  $region2: #{blip_forward.53} parent=0 // pred_check
    _
  $region3: #{blip_forward.53} parent=0 // pred_check_branch
    %9 = sbr.rel (0) target = $region5
  $region4: #{blip_forward.53} parent=0 // pred_region
    _
  $region5: #{blip_forward.53} parent=0 // pred_fallthru
    _
  // Predicated region
  $region6: #{blip_forward.53} parent=0 // pred_check
    _
  $region7: #{blip_forward.53} parent=0 // pred_check_branch
    %11 = sbr.rel (0) target = $region9
  $region8: #{blip_forward.53} parent=0 // pred_region
    _
  $region9: #{blip_forward.53} parent=0 // pred_fallthru
    _
  // Predicated region
  $region10: #{blip_forward.53} parent=0 // pred_check
    _
  $region11: #{blip_forward.53} parent=0 // pred_check_branch
    %13 = sbr.rel (0) target = $region13
  $region12: #{blip_forward.53} parent=0 // pred_region
    _
  $region13: #{blip_forward.53} parent=0 // pred_fallthru
    _
  %p15 = scmp.eq.s32.totalorder 0, 0
  // Predicated region
  $region14: #{blip_forward.53} parent=0 // pred_check
    %p16 = pneg %p15
  $region15: #{blip_forward.53} parent=0 // pred_check_branch
    %18 = sbr.rel (%p16) target = $region17
  $region16: #{blip_forward.53} parent=0 // pred_region
    %vm19 = vcmask 261120
    %20 = vst.msk [vmem:[#allocation2] sm:$0xff] %vm19, 0.0
    %21 = vst.msk [vmem:[#allocation2 + $0x8] sm:$0xff] %vm19, 0.0
  $region17: #{blip_forward.53} parent=0 // pred_fallthru
    _
  %v22 = vld [vmem:[#allocation2] sm:$0xff]
  %v23 = vld [vmem:[#allocation2 + $0x8] sm:$0xff]
  %v24 = vld [vmem:[%s0] sm:$0xf]
  %v25 = vld [vmem:[%s0 + $0x4] sm:$0xf]
  %v26 = vld [vmem:[%s1] sm:$0xf]
  %v27 = vld [vmem:[%s1 + $0x4] sm:$0xf]
  %v28 = vld [vmem:[%s1 + $0x8] sm:$0xf]
  %v29 = vld [vmem:[%s1 + $0xc] sm:$0xf]
  %v32 = vunpack.c.l.b16 %v24
  %v33 = vunpack.c.l.b16 %v25
  %v34 = vpack.c.b16 %v33, %v32
  %v39 = vunpack.c.l.b16 %v26
  %v40 = vunpack.c.l.b16 %v27
  %v41 = vunpack.c.l.b16 %v28
  %v42 = vunpack.c.l.b16 %v29
  %v43 = vpack.c.b16 %v40, %v39
  %v44 = vpack.c.b16 %v42, %v41
  %vm47 = vcmask 261120
  %v49 = vsel %vm47, %v34, 0
  %51 = vmatprep.subr.bf16.mxu0 0
  %52 = vmatpush1.bf16.msra.mxu0 %v43
  %53 = vmatprep.subr.bf16.mxu0 0
  %54 = vmatpush1.bf16.msra.mxu0 %v44
  %55 = vmatprep.subr.bf16.mxu0 0
  %56 = vmatpush1.bf16.msra.mxu0 0
  %57 = vmatprep.subr.bf16.mxu0 0
  %58 = vmatpush1.bf16.msra.mxu0 0
  %59 = vmatprep.subr.bf16.mxu0 0
  %60 = vmatpush1.bf16.msra.mxu0 0
  %61 = vmatprep.subr.bf16.mxu0 0
  %62 = vmatpush1.bf16.msra.mxu0 0
  %63 = vmatprep.subr.bf16.mxu0 0
  %64 = vmatpush1.bf16.msra.mxu0 0
  %65 = vmatprep.subr.bf16.mxu0 0
  %66 = vmatpush1.bf16.msra.mxu0 0
  %67 = vmatprep.subr.bf16.mxu0 0
  %68 = vmatpush1.bf16.msra.mxu0 0
  %69 = vmatprep.subr.bf16.mxu0 0
  %70 = vmatpush1.bf16.msra.mxu0 0
  %71 = vmatprep.subr.bf16.mxu0 0
  %72 = vmatpush1.bf16.msra.mxu0 0
  %73 = vmatprep.subr.bf16.mxu0 0
  %74 = vmatpush1.bf16.msra.mxu0 0
  %75 = vmatprep.subr.bf16.mxu0 0
  %76 = vmatpush1.bf16.msra.mxu0 0
  %77 = vmatprep.subr.bf16.mxu0 0
  %78 = vmatpush1.bf16.msra.mxu0 0
  %79 = vmatprep.subr.bf16.mxu0 0
  %80 = vmatpush1.bf16.msra.mxu0 0
  %81 = vmatprep.subr.bf16.mxu0 0
  %82 = vmatpush1.bf16.msra.mxu0 0
  %83 = vmatprep.mubr.bf16.mxu0 0
  %84 = vmatmul.mubr.bf16.gmra.mrb[0].mxu0 %v49
  %v85 = vpop.f32.mrb[0].mxu0
  %v86 = vadd.f32 0.0, %v85
  %v87 = vpop.f32.mrb[0].mxu0
  %v88 = vpop.f32.mrb[0].mxu0
  %v89 = vadd.f32 0.0, %v88
  %v90 = vpop.f32.mrb[0].mxu0
  %91 = vdwg.mxu0
  %v92 = vadd.f32 %v22, %v86
  %v93 = vadd.f32 %v23, %v89
  %94 = vst.msk [vmem:[#allocation2] sm:$0xff] %vm47, %v92
  %95 = vst.msk [vmem:[#allocation2 + $0x8] sm:$0xff] %vm47, %v93
  // Predicated region
  $region18: #{blip_forward.53} parent=0 // pred_check
    %p96 = pneg %p15
  $region19: #{blip_forward.53} parent=0 // pred_check_branch
    %98 = sbr.rel (%p96) target = $region21
  $region20: #{blip_forward.53} parent=0 // pred_region
    %v99 = vld [vmem:[#allocation2] sm:$0xff]
    %v100 = vld [vmem:[#allocation2 + $0x8] sm:$0xff]
    %v101 = vld [vmem:[%s2] sm:$0x1]
    %v102 = vunpack.c.l.bf16 %v101
    %v103 = vlaneseq
    %v104 = vshrl.u32 %v103, 7
    %v105 = vsub.s32 0, %v104
    %v106 = vrot.slane %v102, %v105
    %v107 = vadd.f32 %v99, %v106
    %v108 = vadd.f32 %v100, %v106
    %v109 = vpack.c.bf16 %v108, %v107
    %v111 = vunpack.c.l.b16 %v109
    %v112 = vunpack.c.h.b16 %v109
    %v113 = vpack.c.b16 %v111, %v111
    %v114 = vpack.c.b16 %v112, %v112
    %vm117 = vcmask 257024
    %118 = vst.msk [vmem:[%s3] sm:$0xf] %vm117, %v113
    %119 = vst.msk [vmem:[%s3 + $0x4] sm:$0xf] %vm117, %v114
  $region21: #{blip_forward.53} parent=0 // pred_fallthru
    _
  // Predicated region
  $region22: #{blip_forward.53} parent=0 // pred_check
    _
  $region23: #{blip_forward.53} parent=0 // pred_check_branch
    %121 = sbr.rel (0) target = $region25
  $region24: #{blip_forward.53} parent=0 // pred_region
    _
  $region25: #{blip_forward.53} parent=0 // pred_fallthru
    _
  // Predicated region
  $region26: #{blip_forward.53} parent=0 // pred_check
    _
  $region27: #{blip_forward.53} parent=0 // pred_check_branch
    %123 = sbr.rel (0) target = $region29
  $region28: #{blip_forward.53} parent=0 // pred_region
    _
  $region29: #{blip_forward.53} parent=0 // pred_fallthru
    _

// kernel: blip_forward.58
$region0: #{blip_forward.58}
  #allocation0 [shape = 'u32[]', space=smem, size = 0x4, offset = 0x4, fixed_abs, tag = 'smem constant byte address 0x4 - core index']
  #allocation1 [shape = 'u32[144,128]{1,0:T(1,128)}', space=vmem, size = 0x12000, scoped, tag = 'internal scratch']
  #allocation2 [shape = 'f32[16,32]{1,0:T(8,128)}', space=vmem, size = 0x2000, scoped, tag = 'scratch operand']
  %s0 = inlined_call_operand.vmem [shape: bf16[16,64], index: 0, kind: input, shape index: {}]
  %s1 = inlined_call_operand.vmem [shape: bf16[64,32], index: 1, kind: input, shape index: {}]
  %s2 = inlined_call_operand.vmem [shape: bf16[1,32], index: 2, kind: input, shape index: {}]
  %s3 = inlined_call_operand.vmem [shape: bf16[16,32], index: 3, kind: input, shape index: {}]
  %s4 = inlined_call_operand.vmem [shape: f32[1,32], index: 4, kind: input, shape index: {}]
  %s5 = inlined_call_operand.vmem [shape: f32[1,32], index: 5, kind: input, shape index: {}]
  %s6 = inlined_call_operand.vmem [shape: bf16[16,32], index: 6, kind: output, shape index: {}]
  %s7 = sld [smem:[#allocation0]]
  $region42: #{blip_forward.58} parent=0
    _
  %s9 = ssub.s32 1, %s7
  %s10 = scalar_select 0, %s9, %s7
  // Predicated region
  $region2: #{blip_forward.58} parent=0 // pred_check
    _
  $region3: #{blip_forward.58} parent=0 // pred_check_branch
    %12 = sbr.rel (0) target = $region5
  $region4: #{blip_forward.58} parent=0 // pred_region
    _
  $region5: #{blip_forward.58} parent=0 // pred_fallthru
    _
  // Predicated region
  $region6: #{blip_forward.58} parent=0 // pred_check
    _
  $region7: #{blip_forward.58} parent=0 // pred_check_branch
    %14 = sbr.rel (0) target = $region9
  $region8: #{blip_forward.58} parent=0 // pred_region
    _
  $region9: #{blip_forward.58} parent=0 // pred_fallthru
    _
  // Predicated region
  $region10: #{blip_forward.58} parent=0 // pred_check
    _
  $region11: #{blip_forward.58} parent=0 // pred_check_branch
    %16 = sbr.rel (0) target = $region13
  $region12: #{blip_forward.58} parent=0 // pred_region
    _
  $region13: #{blip_forward.58} parent=0 // pred_fallthru
    _
  // Predicated region
  $region14: #{blip_forward.58} parent=0 // pred_check
    _
  $region15: #{blip_forward.58} parent=0 // pred_check_branch
    %18 = sbr.rel (0) target = $region17
  $region16: #{blip_forward.58} parent=0 // pred_region
    _
  $region17: #{blip_forward.58} parent=0 // pred_fallthru
    _
  // Predicated region
  $region18: #{blip_forward.58} parent=0 // pred_check
    _
  $region19: #{blip_forward.58} parent=0 // pred_check_branch
    %20 = sbr.rel (0) target = $region21
  $region20: #{blip_forward.58} parent=0 // pred_region
    _
  $region21: #{blip_forward.58} parent=0 // pred_fallthru
    _
  // Predicated region
  $region22: #{blip_forward.58} parent=0 // pred_check
    _
  $region23: #{blip_forward.58} parent=0 // pred_check_branch
    %22 = sbr.rel (0) target = $region25
  $region24: #{blip_forward.58} parent=0 // pred_region
    _
  $region25: #{blip_forward.58} parent=0 // pred_fallthru
    _
  %p24 = scmp.eq.s32.totalorder 0, 0
  // Predicated region
  $region26: #{blip_forward.58} parent=0 // pred_check
    %p25 = pneg %p24
  $region27: #{blip_forward.58} parent=0 // pred_check_branch
    %27 = sbr.rel (%p25) target = $region29
  $region28: #{blip_forward.58} parent=0 // pred_region
    %vm28 = vcmask 261120
    %29 = vst.msk [vmem:[#allocation2] sm:$0xff] %vm28, 0.0
    %30 = vst.msk [vmem:[#allocation2 + $0x8] sm:$0xff] %vm28, 0.0
  $region29: #{blip_forward.58} parent=0 // pred_fallthru
    _
  %v31 = vld [vmem:[#allocation2] sm:$0xff]
  %v32 = vld [vmem:[#allocation2 + $0x8] sm:$0xff]
  %v33 = vld [vmem:[%s0] sm:$0xf]
  %v34 = vld [vmem:[%s0 + $0x4] sm:$0xf]
  %v35 = vld [vmem:[%s1] sm:$0xf]
  %v36 = vld [vmem:[%s1 + $0x4] sm:$0xf]
  %v37 = vld [vmem:[%s1 + $0x8] sm:$0xf]
  %v38 = vld [vmem:[%s1 + $0xc] sm:$0xf]
  %v39 = vld [vmem:[%s1 + $0x10] sm:$0xf]
  %v40 = vld [vmem:[%s1 + $0x14] sm:$0xf]
  %v41 = vld [vmem:[%s1 + $0x18] sm:$0xf]
  %v42 = vld [vmem:[%s1 + $0x1c] sm:$0xf]
  %v45 = vunpack.c.l.b16 %v33
  %v46 = vunpack.c.l.b16 %v34
  %v47 = vpack.c.b16 %v46, %v45
  %v56 = vunpack.c.l.b16 %v35
  %v57 = vunpack.c.l.b16 %v36
  %v58 = vunpack.c.l.b16 %v37
  %v59 = vunpack.c.l.b16 %v38
  %v60 = vunpack.c.l.b16 %v39
  %v61 = vunpack.c.l.b16 %v40
  %v62 = vunpack.c.l.b16 %v41
  %v63 = vunpack.c.l.b16 %v42
  %v64 = vpack.c.b16 %v57, %v56
  %v65 = vpack.c.b16 %v59, %v58
  %v66 = vpack.c.b16 %v61, %v60
  %v67 = vpack.c.b16 %v63, %v62
  %vm72 = vcmask 523264
  %v74 = vsel %vm72, %v47, 0
  %76 = vmatprep.subr.bf16.mxu0 0
  %77 = vmatpush1.bf16.msra.mxu0 %v64
  %78 = vmatprep.subr.bf16.mxu0 0
  %79 = vmatpush1.bf16.msra.mxu0 %v65
  %80 = vmatprep.subr.bf16.mxu0 0
  %81 = vmatpush1.bf16.msra.mxu0 %v66
  %82 = vmatprep.subr.bf16.mxu0 0
  %83 = vmatpush1.bf16.msra.mxu0 %v67
  %84 = vmatprep.subr.bf16.mxu0 0
  %85 = vmatpush1.bf16.msra.mxu0 0
  %86 = vmatprep.subr.bf16.mxu0 0
  %87 = vmatpush1.bf16.msra.mxu0 0
  %88 = vmatprep.subr.bf16.mxu0 0
  %89 = vmatpush1.bf16.msra.mxu0 0
  %90 = vmatprep.subr.bf16.mxu0 0
  %91 = vmatpush1.bf16.msra.mxu0 0
  %92 = vmatprep.subr.bf16.mxu0 0
  %93 = vmatpush1.bf16.msra.mxu0 0
  %94 = vmatprep.subr.bf16.mxu0 0
  %95 = vmatpush1.bf16.msra.mxu0 0
  %96 = vmatprep.subr.bf16.mxu0 0
  %97 = vmatpush1.bf16.msra.mxu0 0
  %98 = vmatprep.subr.bf16.mxu0 0
  %99 = vmatpush1.bf16.msra.mxu0 0
  %100 = vmatprep.subr.bf16.mxu0 0
  %101 = vmatpush1.bf16.msra.mxu0 0
  %102 = vmatprep.subr.bf16.mxu0 0
  %103 = vmatpush1.bf16.msra.mxu0 0
  %104 = vmatprep.subr.bf16.mxu0 0
  %105 = vmatpush1.bf16.msra.mxu0 0
  %106 = vmatprep.subr.bf16.mxu0 0
  %107 = vmatpush1.bf16.msra.mxu0 0
  %108 = vmatprep.mubr.bf16.mxu0 0
  %109 = vmatmul.mubr.bf16.gmra.mrb[0].mxu0 %v74
  %v110 = vpop.f32.mrb[0].mxu0
  %v111 = vadd.f32 0.0, %v110
  %v112 = vpop.f32.mrb[0].mxu0
  %v113 = vpop.f32.mrb[0].mxu0
  %v114 = vadd.f32 0.0, %v113
  %v115 = vpop.f32.mrb[0].mxu0
  %116 = vdwg.mxu0
  %v117 = vadd.f32 %v31, %v111
  %v118 = vadd.f32 %v32, %v114
  %vm119 = vcmask 261120
  %120 = vst.msk [vmem:[#allocation2] sm:$0xff] %vm119, %v117
  %121 = vst.msk [vmem:[#allocation2 + $0x8] sm:$0xff] %vm119, %v118
  // Predicated region
  $region30: #{blip_forward.58} parent=0 // pred_check
    %p122 = pneg %p24
  $region31: #{blip_forward.58} parent=0 // pred_check_branch
    %124 = sbr.rel (%p122) target = $region33
  $region32: #{blip_forward.58} parent=0 // pred_region
    %v125 = vld [vmem:[#allocation2] sm:$0xff]
    %v126 = vld [vmem:[#allocation2 + $0x8] sm:$0xff]
    %v127 = vld [vmem:[%s2] sm:$0x1]
    %v128 = vunpack.c.l.bf16 %v127
    %v129 = vlaneseq
    %v130 = vshrl.u32 %v129, 7
    %v131 = vsub.s32 0, %v130
    %v132 = vrot.slane %v128, %v131
    %v133 = vadd.f32 %v125, %v132
    %v134 = vadd.f32 %v126, %v132
    %v135 = vld [vmem:[%s3] sm:$0xf]
    %v136 = vld [vmem:[%s3 + $0x4] sm:$0xf]
    %v137 = vunpack.c.l.bf16 %v135
    %v138 = vunpack.c.l.bf16 %v136
    %v139 = vadd.f32 %v133, %v137
    %v140 = vadd.f32 %v134, %v138
    %v141 = vsel %vm119, %v139, 0.0
    %142 = vadd.xlane.f32.xlu0 %v141
    %v143 = vpop.xlane.xlu0 %142
    %v144 = vsel %vm119, %v140, 0.0
    %145 = vadd.xlane.f32.xlu0 %v144
    %v146 = vpop.xlane.xlu0 %145
    %v147 = vrcp.pop 32.0
    %v148 = vmul.f32 %v143, %v147
    %v149 = vmul.f32 %v146, %v147
    %v150 = vsub.f32 %v139, %v148
    %v151 = vsub.f32 %v140, %v149
    %v152 = vmul.f32 %v150, %v150
    %v153 = vmul.f32 %v151, %v151
    %v154 = vsel %vm119, %v152, 0.0
    %155 = vadd.xlane.f32.xlu0 %v154
    %v156 = vpop.xlane.xlu0 %155
    %v157 = vsel %vm119, %v153, 0.0
    %158 = vadd.xlane.f32.xlu0 %v157
    %v159 = vpop.xlane.xlu0 %158
    %v160 = vmul.f32 %v156, %v147
    %v161 = vmul.f32 %v159, %v147
    %v162 = vadd.f32 %v160, 1e-12
    %v163 = vadd.f32 %v161, 1e-12
    %v164 = vrsqrt.pop %v162
    %v165 = vrsqrt.pop %v163
    %v166 = vmul.f32 %v150, %v164
    %v167 = vmul.f32 %v151, %v165
    %v168 = vld [vmem:[%s4] sm:$0x1]
    %v170 = vlaneseq
    %v171 = vshrl.u32 %v170, 7
    %v172 = vsub.s32 0, %v171
    %v173 = vrot.slane %v168, %v172
    %v175 = vmul.f32 %v166, %v173
    %v176 = vmul.f32 %v167, %v173
    %v177 = vld [vmem:[%s5] sm:$0x1]
    %v179 = vlaneseq
    %v180 = vshrl.u32 %v179, 7
    %v181 = vsub.s32 0, %v180
    %v182 = vrot.slane %v177, %v181
    %v184 = vadd.f32 %v175, %v182
    %v185 = vadd.f32 %v176, %v182
    %v186 = vpack.c.bf16 %v185, %v184
    %v188 = vunpack.c.l.b16 %v186
    %v189 = vunpack.c.h.b16 %v186
    %v190 = vpack.c.b16 %v188, %v188
    %v191 = vpack.c.b16 %v189, %v189
    %vm194 = vcmask 257024
    %195 = vst.msk [vmem:[%s6] sm:$0xf] %vm194, %v190
    %196 = vst.msk [vmem:[%s6 + $0x4] sm:$0xf] %vm194, %v191
  $region33: #{blip_forward.58} parent=0 // pred_fallthru
    _
  // Predicated region
  $region34: #{blip_forward.58} parent=0 // pred_check
    _
  $region35: #{blip_forward.58} parent=0 // pred_check_branch
    %198 = sbr.rel (0) target = $region37
  $region36: #{blip_forward.58} parent=0 // pred_region
    _
  $region37: #{blip_forward.58} parent=0 // pred_fallthru
    _
  // Predicated region
  $region38: #{blip_forward.58} parent=0 // pred_check
    _
  $region39: #{blip_forward.58} parent=0 // pred_check_branch
    %200 = sbr.rel (0) target = $region41
  $region40: #{blip_forward.58} parent=0 // pred_region
    _
  $region41: #{blip_forward.58} parent=0 // pred_fallthru
    _

</llo_original>
